<compile_context>
chip_gen: v7x
topology: tpu7x:2x2x1
jax: 0.10.0
libtpu: 0.0.40
codegen_flags: <defaults>
</compile_context>

<pallas_src>
import functools

import jax
import jax.numpy as jnp
from jax.experimental import pallas as pl
from jax.experimental.pallas import tpu as pltpu


# ----------------------------- small helpers -----------------------------

def _round_up(n, m):
    return ((n + m - 1) // m) * m


def _pick_chunk(s):
    """Time-chunk size (multiple of 8). Pads S rather than degrading to tiny chunks."""
    if s <= 32:
        return _round_up(s, 8)
    best_pad, best_c = None, None
    for c in (32, 24, 16):            # prefer 32 (fills the 256-row MXU with 8 batch rows)
        pad = (-s) % c
        if pad == 0:
            return c
        if best_pad is None or pad < best_pad:
            best_pad, best_c = pad, c
    return best_c


def _pad_gates(w, nhid, p):
    """Pad the gate axis (..., 4*nhid) -> (..., 4*p), zero-padding each gate group."""
    rows = w.shape[0]
    w4 = w.reshape(rows, 4, nhid)
    w4 = jnp.pad(w4, ((0, 0), (0, 0), (0, p - nhid)))
    return w4.reshape(rows, 4 * p)


def _lstm_vmem_limit(L, P, bb, t_chunk):
    weights = 2 * (2 * L * P * 4 * P * 2)      # wih + whh (bf16), double-buffered
    bias = 2 * (L * 4 * P * 4)
    state = 2 * (4 * L * bb * P * 4)           # h0, c0, hN, cN (f32)
    act = 2 * (2 * t_chunk * bb * P * 2)       # x + y blocks (bf16), double-buffered
    gx = t_chunk * bb * 4 * P * 4              # gate pre-activation scratch (f32)
    need = weights + bias + state + act + gx + (2 << 20)
    return int(max(32 << 20, min(need, 96 << 20)))


def _dec_vmem_limit(tm, tn, tk):
    need = 2 * (tm * tk * 2 + tk * tn * 2 + tn * 4) + 3 * (tm * tn * 4) + (2 << 20)
    return int(max(32 << 20, min(need, 96 << 20)))


# --------------------- fused multi-layer LSTM kernel ----------------------
# grid = (batch_blocks, S_pad // t_chunk); time axis is inner + "arbitrary".
# h/c live in output refs with batch-only index maps (resident accumulators).
# The (t_chunk, bb, P) y block doubles as the inter-layer activation buffer.

def _lstm_stack_kernel(x_ref, wih_ref, whh_ref, b_ref, h0_ref, c0_ref,
                       y_ref, hN_ref, cN_ref, gx_ref,
                       *, nlayers, t_chunk, p, s_valid, mask_tail):
    ti = pl.program_id(1)

    @pl.when(ti == 0)
    def _():
        hN_ref[...] = h0_ref[...]
        cN_ref[...] = c0_ref[...]

    bp = x_ref.shape[1]
    t0 = ti * t_chunk                                 # first global step of this chunk

    for l in range(nlayers):
        # Input contribution for the whole chunk in ONE big bf16 MXU matmul (off the serial
        # path), bias folded in.  Staged in explicit VMEM scratch so it never spills vregs.
        x_chunk = x_ref[...] if l == 0 else y_ref[...]                     # (T, bp, P) bf16
        gx = jnp.dot(x_chunk.reshape(t_chunk * bp, p), wih_ref[l],
                     preferred_element_type=jnp.float32) + b_ref[l]        # (T*bp, 4P) f32
        gx_ref[...] = gx.reshape(t_chunk, bp, 4 * p)

        w_hh = whh_ref[l]                                                  # (P, 4P) bf16
        h = hN_ref[l]                                                      # (bp, P) f32
        c = cN_ref[l]

        def step(t, carry, *, _w_hh=w_hh):
            h, c = carry
            gates = gx_ref[t] + jnp.dot(h.astype(jnp.bfloat16), _w_hh,
                                        preferred_element_type=jnp.float32)
            i_g = jax.nn.sigmoid(gates[:, 0 * p:1 * p])                    # lane-aligned slices
            f_g = jax.nn.sigmoid(gates[:, 1 * p:2 * p])
            g_g = jnp.tanh(gates[:, 2 * p:3 * p])
            o_g = jax.nn.sigmoid(gates[:, 3 * p:4 * p])
            c_n = f_g * c + i_g * g_g
            h_n = o_g * jnp.tanh(c_n)
            if mask_tail:                                                  # freeze state on
                valid = (t0 + t) < s_valid                                 # padded tail steps
                c_n = jnp.where(valid, c_n, c)
                h_n = jnp.where(valid, h_n, h)
            y_ref[t] = h_n.astype(y_ref.dtype)                             # lane-dense store
            return h_n, c_n

        h, c = jax.lax.fori_loop(0, t_chunk, step, (h, c),
                                 unroll=min(8, t_chunk))
        hN_ref[l] = h
        cN_ref[l] = c


def lstm_stack(x_pad, w_ih, w_hh, b, h0, c0, *, t_chunk, s_valid, batch_block=None):
    """x_pad: (S_pad, BP, P) bf16; weights (L, P, 4P) bf16; bias (L, 1, 4P) f32;
    h0/c0 (L, BP, P) f32.  Returns (y bf16, hN f32, cN f32)."""
    S_pad, BP, P = x_pad.shape
    L = w_ih.shape[0]
    bb = BP if batch_block is None else batch_block   # batch_block=8 shards across v7x's 2 TCs
    nb = BP // bb
    nt = S_pad // t_chunk
    mask_tail = s_valid < S_pad
    kernel = functools.partial(_lstm_stack_kernel, nlayers=L, t_chunk=t_chunk,
                               p=P, s_valid=s_valid, mask_tail=mask_tail)
    return pl.pallas_call(
        kernel,
        out_shape=(jax.ShapeDtypeStruct((S_pad, BP, P), jnp.bfloat16),
                   jax.ShapeDtypeStruct((L, BP, P), jnp.float32),
                   jax.ShapeDtypeStruct((L, BP, P), jnp.float32)),
        grid=(nb, nt),
        in_specs=[pl.BlockSpec((t_chunk, bb, P), lambda bi, ti: (ti, bi, 0)),
                  pl.BlockSpec((L, P, 4 * P), lambda bi, ti: (0, 0, 0)),
                  pl.BlockSpec((L, P, 4 * P), lambda bi, ti: (0, 0, 0)),
                  pl.BlockSpec((L, 1, 4 * P), lambda bi, ti: (0, 0, 0)),
                  pl.BlockSpec((L, bb, P), lambda bi, ti: (0, bi, 0)),
                  pl.BlockSpec((L, bb, P), lambda bi, ti: (0, bi, 0))],
        out_specs=(pl.BlockSpec((t_chunk, bb, P), lambda bi, ti: (ti, bi, 0)),
                   pl.BlockSpec((L, bb, P), lambda bi, ti: (0, bi, 0)),
                   pl.BlockSpec((L, bb, P), lambda bi, ti: (0, bi, 0))),
        scratch_shapes=[pltpu.VMEM((t_chunk, bb, 4 * P), jnp.float32)],
        input_output_aliases={4: 1, 5: 2},            # h0 -> hN, c0 -> cN (same shape/dtype)
        compiler_params=pltpu.CompilerParams(
            dimension_semantics=("parallel", "arbitrary"),
            vmem_limit_bytes=_lstm_vmem_limit(L, P, bb, t_chunk)),
    )(x_pad, w_ih, w_hh, b, h0, c0)


# ------------------------ tiled decoder linear kernel ---------------------

def _linear_tiled_kernel(x_ref, w_ref, b_ref, o_ref, acc_ref):
    @pl.when(pl.program_id(2) == 0)
    def _():
        acc_ref[...] = jnp.zeros_like(acc_ref)

    acc_ref[...] += jnp.dot(x_ref[...], w_ref[...],
                            preferred_element_type=jnp.float32)

    @pl.when(pl.program_id(2) == pl.num_programs(2) - 1)
    def _():
        o_ref[...] = (acc_ref[...] + b_ref[...]).astype(o_ref.dtype)


def linear_tiled(x, w_t, b, *, tm=512, tn=1024, tk=512):
    """x: (M, K) bf16 [M % 8 == 0], w_t: (K, N) bf16 [K, N % 128 == 0], b: (N,) f32."""
    M, K = x.shape
    N = w_t.shape[1]
    tm = min(tm, M)
    while M % tm:
        tm -= 8
    tn = min(tn, N)
    while N % tn:
        tn -= 128
    tk = min(tk, K)
    while K % tk:
        tk -= 128
    b2 = b.reshape(1, N)
    return pl.pallas_call(
        _linear_tiled_kernel,
        out_shape=jax.ShapeDtypeStruct((M, N), jnp.float32),
        grid=(M // tm, N // tn, K // tk),
        in_specs=[pl.BlockSpec((tm, tk), lambda i, j, k: (i, k)),
                  pl.BlockSpec((tk, tn), lambda i, j, k: (k, j)),
                  pl.BlockSpec((1, tn), lambda i, j, k: (0, j))],
        out_specs=pl.BlockSpec((tm, tn), lambda i, j, k: (i, j)),
        scratch_shapes=[pltpu.VMEM((tm, tn), jnp.float32)],
        compiler_params=pltpu.CompilerParams(
            dimension_semantics=("parallel", "parallel", "arbitrary"),
            vmem_limit_bytes=_dec_vmem_limit(tm, tn, tk)),
    )(x, w_t, b2)


# ------------------------------- parameters -------------------------------

def init_params(key, ntoken, ninp, nutt, nseg, naux, nhid, nlayers):
    initrange = 0.1
    ks = jax.random.split(key, 3 + nlayers)
    params = {}
    params["encoder_w"] = jax.random.uniform(
        ks[0], (ntoken, ninp), jnp.float32, -initrange, initrange)
    params["compressor_w_t"] = jax.random.uniform(
        ks[1], (nutt * nseg, naux), jnp.float32, -initrange, initrange)
    params["compressor_b"] = jnp.zeros((naux,), jnp.float32)
    params["decoder_w_t"] = jax.random.uniform(
        ks[2], (nhid, ntoken), jnp.float32, -initrange, initrange)
    params["decoder_b"] = jnp.zeros((ntoken,), jnp.float32)
    stdv = 1.0 / float(jnp.sqrt(jnp.float32(nhid)))
    layers = []
    for l in range(nlayers):
        nin = (ninp + naux) if l == 0 else nhid
        k0, k1, k2, k3 = jax.random.split(ks[3 + l], 4)
        w_ih_t = jax.random.uniform(k0, (nin, 4 * nhid), jnp.float32, -stdv, stdv)
        w_hh_t = jax.random.uniform(k1, (nhid, 4 * nhid), jnp.float32, -stdv, stdv)
        b_ih = jax.random.uniform(k2, (4 * nhid,), jnp.float32, -stdv, stdv)
        b_hh = jax.random.uniform(k3, (4 * nhid,), jnp.float32, -stdv, stdv)
        layers.append((w_ih_t, w_hh_t, b_ih + b_hh))   # PyTorch adds both biases
    params["lstm"] = layers
    return params


def prepare_params(params):
    """Pad / fuse raw params into TPU-friendly tensors (done once, host-side).

    - Compressor (pure Linear in this forward path) is folded exactly into layer-0's W_ih
      (and bias), so layer 0 consumes [raw_aux, emb] directly.
    - Hidden / gate / feature widths padded to P (multiple of 128); weights stacked per layer
      and cast to bf16 (MXU operands); biases stay f32.
    """
    ninp = params["encoder_w"].shape[1]
    ntoken = params["decoder_w_t"].shape[1]
    naux = params["compressor_b"].shape[0]
    nuttseg = params["compressor_w_t"].shape[0]
    layers = params["lstm"]
    nlayers = len(layers)
    nhid = layers[0][1].shape[0]
    din0 = nuttseg + ninp
    # TODO(synk): if nutt*nseg + ninp >> nhid this uniform padding wastes MXU work;
    # a split layer-0 weight (aux/emb blocks) would avoid it.
    P = _round_up(max(din0, nhid), 128)
    NTP = _round_up(ntoken, 128)

    wih, whh, bb = [], [], []
    for l, (w_ih_t, w_hh_t, b) in enumerate(layers):
        if l == 0:
            # exact fold: [aux, emb] @ [[Wc_t @ Wih_aux], [Wih_emb]] == [comp(aux), emb] @ Wih
            w_aux = params["compressor_w_t"] @ w_ih_t[:naux, :]
            w_in = jnp.concatenate([w_aux, w_ih_t[naux:, :]], axis=0)   # (din0, 4H)
            b_l = b + params["compressor_b"] @ w_ih_t[:naux, :]
        else:
            w_in, b_l = w_ih_t, b
        w_in = jnp.pad(_pad_gates(w_in, nhid, P), ((0, P - w_in.shape[0]), (0, 0)))
        w_hh = jnp.pad(_pad_gates(w_hh_t, nhid, P), ((0, P - nhid), (0, 0)))
        wih.append(w_in)
        whh.append(w_hh)
        bb.append(_pad_gates(b_l.reshape(1, -1), nhid, P))

    return {
        "encoder_w": params["encoder_w"],
        "wih": jnp.stack(wih, 0).astype(jnp.bfloat16),     # (L, P, 4P) bf16
        "whh": jnp.stack(whh, 0).astype(jnp.bfloat16),     # (L, P, 4P) bf16
        "b": jnp.stack(bb, 0),                             # (L, 1, 4P) f32
        "dec_w": jnp.pad(params["decoder_w_t"],
                         ((0, P - nhid), (0, NTP - ntoken))).astype(jnp.bfloat16),
        "dec_b": jnp.pad(params["decoder_b"], (0, NTP - ntoken)),
        "dims": dict(ninp=ninp, ntoken=ntoken, nhid=nhid, nlayers=nlayers,
                     din0=din0, P=P, NTP=NTP),
    }


# ------------------------------- forward ----------------------------------

def l2rnn_forward(prep, tokens, auxiliary, hidden, batch_block=None):
    """Mirrors L2RNNModel.forward with atten=False, rnn_type='LSTM', reset=0 (eval dropout)."""
    dims = prep["dims"]
    S, B = tokens.shape
    P, NTP = dims["P"], dims["NTP"]
    nhid, ntoken = dims["nhid"], dims["ntoken"]
    BP = _round_up(max(B, 8), 8)
    t_chunk = _pick_chunk(S)
    S_pad = _round_up(S, t_chunk)

    # emb = drop(encoder(input)) (dropout identity); gather is JAX glue.
    emb = jnp.take(prep["encoder_w"], tokens, axis=0)                     # (S, B, ninp)
    # Compressor is folded into layer-0 weights -> feed raw aux + emb directly.
    x0 = jnp.concatenate([auxiliary.astype(jnp.float32), emb], axis=2)    # (S, B, din0)
    x0 = jnp.pad(x0, ((0, S_pad - S), (0, BP - B), (0, P - x0.shape[2])))
    x0 = x0.astype(jnp.bfloat16)

    h0, c0 = hidden                                                        # (L, B, nhid)
    h0p = jnp.pad(h0, ((0, 0), (0, BP - B), (0, P - nhid)))
    c0p = jnp.pad(c0, ((0, 0), (0, BP - B), (0, P - nhid)))

    y, hN, cN = lstm_stack(x0, prep["wih"], prep["whh"], prep["b"],
                           h0p, c0p, t_chunk=t_chunk, s_valid=S,
                           batch_block=batch_block)

    # output = drop(output) is identity; drop padded time steps / batch rows before decoding.
    y_dec = y[:S, :B].reshape(S * B, P)
    M0 = S * B
    Mp = _round_up(M0, 8)
    if Mp != M0:
        y_dec = jnp.pad(y_dec, ((0, Mp - M0), (0, 0)))
    dec = linear_tiled(y_dec, prep["dec_w"], prep["dec_b"])
    decoded = dec[:M0].reshape(S, B, NTP)[:, :, :ntoken]
    penalty = jnp.zeros((1,), jnp.float32)                                 # atten=False path
    return decoded, (hN[:, :B, :nhid], cN[:, :B, :nhid]), penalty


# ------------------------ pure-JAX reference (check) -----------------------

def _ref_forward(params, tokens, auxiliary, hidden):
    S, B = tokens.shape
    emb = params["encoder_w"][tokens]
    aux_in = (auxiliary.reshape(S * B, -1) @ params["compressor_w_t"]
              + params["compressor_b"])
    x = jnp.concatenate([aux_in.reshape(S, B, -1), emb], axis=2)
    h0, c0 = hidden
    hNs, cNs = [], []
    for l, (w_ih_t, w_hh_t, b) in enumerate(params["lstm"]):
        def step(carry, xt, w_ih_t=w_ih_t, w_hh_t=w_hh_t, b=b):
            h, c = carry
            g = xt @ w_ih_t + h @ w_hh_t + b
            H = h.shape[-1]
            i = jax.nn.sigmoid(g[:, :H])
            f = jax.nn.sigmoid(g[:, H:2 * H])
            gg = jnp.tanh(g[:, 2 * H:3 * H])
            o = jax.nn.sigmoid(g[:, 3 * H:])
            c = f * c + i * gg
            h = o * jnp.tanh(c)
            return (h, c), h
        (hN, cN), ys = jax.lax.scan(step, (h0[l], c0[l]), x)
        x = ys
        hNs.append(hN)
        cNs.append(cN)
    dec = x.reshape(S * B, -1) @ params["decoder_w_t"] + params["decoder_b"]
    return dec.reshape(S, B, -1), (jnp.stack(hNs), jnp.stack(cNs))


if __name__ == "__main__":
    ntoken, ninp, nutt, nseg, naux, nhid, nlayers = 32, 16, 8, 4, 16, 32, 2
    S, B = 8, 4

    key = jax.random.PRNGKey(0)
    kp, kt, ka = jax.random.split(key, 3)
    params = init_params(kp, ntoken, ninp, nutt, nseg, naux, nhid, nlayers)
    prep = prepare_params(params)

    tokens = jax.random.randint(kt, (S, B), 0, ntoken, dtype=jnp.int32)
    auxiliary = jax.random.normal(ka, (S, B, nutt * nseg), dtype=jnp.float32)
    h0 = jnp.zeros((nlayers, B, nhid), jnp.float32)
    c0 = jnp.zeros((nlayers, B, nhid), jnp.float32)

    decoded, (hN, cN), penalty = l2rnn_forward(prep, tokens, auxiliary, (h0, c0))
    jax.block_until_ready((decoded, hN, cN, penalty))

    ref_dec, (ref_h, ref_c) = _ref_forward(params, tokens, auxiliary, (h0, c0))
    assert decoded.shape == (S, B, ntoken)
    assert hN.shape == (nlayers, B, nhid) and cN.shape == (nlayers, B, nhid)
    # bf16 MXU operands (f32 accumulation) -> tolerance relaxed vs the pure-f32 reference.
    assert jnp.allclose(decoded, ref_dec, atol=2e-2, rtol=2e-2)
    assert jnp.allclose(hN, ref_h, atol=2e-2, rtol=2e-2)
    assert jnp.allclose(cN, ref_c, atol=2e-2, rtol=2e-2)
    print("KERNEL_OK")
</pallas_src>

<mosaic_0001>
module attributes {stable_mosaic.version = 11 : i64} {
  func.func @_lstm_stack_kernel(%arg0: i32, %arg1: i32, %arg2: memref<8x8x128xbf16, #tpu.memory_space<vmem>>, %arg3: memref<2x128x512xbf16, #tpu.memory_space<vmem>>, %arg4: memref<2x128x512xbf16, #tpu.memory_space<vmem>>, %arg5: memref<2x1x512xf32, #tpu.memory_space<vmem>>, %arg6: memref<2x8x128xf32, #tpu.memory_space<vmem>>, %arg7: memref<2x8x128xf32, #tpu.memory_space<vmem>>, %arg8: memref<8x8x128xbf16, #tpu.memory_space<vmem>>, %arg9: memref<2x8x128xf32, #tpu.memory_space<vmem>>, %arg10: memref<2x8x128xf32, #tpu.memory_space<vmem>>, %arg11: memref<8x8x512xf32, #tpu.memory_space<vmem>>) attributes {dimension_semantics = [#tpu.dimension_semantics<parallel>, #tpu.dimension_semantics<arbitrary>], iteration_bounds = array<i64: 1, 1>, scalar_prefetch = 0 : i64, scratch_operands = 1 : i64, tpu.core_type = #tpu.core_type<tc>, window_params = [{transform_indices = @transform_0, window_bounds = array<i64: 8, 8, 128>}, {pipeline_mode = #tpu.pipeline_mode<synchronous>, transform_indices = @transform_1, window_bounds = array<i64: 2, 128, 512>}, {pipeline_mode = #tpu.pipeline_mode<synchronous>, transform_indices = @transform_2, window_bounds = array<i64: 2, 128, 512>}, {pipeline_mode = #tpu.pipeline_mode<synchronous>, transform_indices = @transform_3, window_bounds = array<i64: 2, 1, 512>}, {transform_indices = @transform_4, window_bounds = array<i64: 2, 8, 128>}, {transform_indices = @transform_5, window_bounds = array<i64: 2, 8, 128>}, {transform_indices = @transform_6, window_bounds = array<i64: 8, 8, 128>}, {transform_indices = @transform_7, window_bounds = array<i64: 2, 8, 128>}, {transform_indices = @transform_8, window_bounds = array<i64: 2, 8, 128>}]} {
    %c0_i32 = arith.constant 0 : i32
    %0 = arith.cmpi eq, %arg1, %c0_i32 : i32
    %1 = arith.extui %0 : i1 to i32
    %c0_i32_0 = arith.constant 0 : i32
    %2 = arith.cmpi ne, %1, %c0_i32_0 : i32
    scf.if %2 {
      %c0_192 = arith.constant 0 : index
      %c0_193 = arith.constant 0 : index
      %c0_194 = arith.constant 0 : index
      %625 = vector.load %arg6[%c0_192, %c0_193, %c0_194] : memref<2x8x128xf32, #tpu.memory_space<vmem>>, vector<2x8x128xf32>
      %c0_195 = arith.constant 0 : index
      %c0_196 = arith.constant 0 : index
      %c0_197 = arith.constant 0 : index
      %626 = vector.load %arg9[%c0_195, %c0_196, %c0_197] : memref<2x8x128xf32, #tpu.memory_space<vmem>>, vector<2x8x128xf32>
      tpu.vector_store %arg9[%c0_195, %c0_196, %c0_197], %625 {strides = array<i32>} : memref<2x8x128xf32, #tpu.memory_space<vmem>>, vector<2x8x128xf32>,
      %c0_198 = arith.constant 0 : index
      %c0_199 = arith.constant 0 : index
      %c0_200 = arith.constant 0 : index
      %627 = vector.load %arg7[%c0_198, %c0_199, %c0_200] : memref<2x8x128xf32, #tpu.memory_space<vmem>>, vector<2x8x128xf32>
      %c0_201 = arith.constant 0 : index
      %c0_202 = arith.constant 0 : index
      %c0_203 = arith.constant 0 : index
      %628 = vector.load %arg10[%c0_201, %c0_202, %c0_203] : memref<2x8x128xf32, #tpu.memory_space<vmem>>, vector<2x8x128xf32>
      tpu.vector_store %arg10[%c0_201, %c0_202, %c0_203], %627 {strides = array<i32>} : memref<2x8x128xf32, #tpu.memory_space<vmem>>, vector<2x8x128xf32>,
    } else {
    }
    %c0 = arith.constant 0 : index
    %c0_1 = arith.constant 0 : index
    %c0_2 = arith.constant 0 : index
    %3 = vector.load %arg2[%c0, %c0_1, %c0_2] : memref<8x8x128xbf16, #tpu.memory_space<vmem>>, vector<8x8x128xbf16>
    %4 = vector.shape_cast %3 : vector<8x8x128xbf16> to vector<64x128xbf16>
    %c0_3 = arith.constant 0 : index
    %c0_4 = arith.constant 0 : index
    %c0_5 = arith.constant 0 : index
    %5 = vector.load %arg3[%c0_3, %c0_4, %c0_5] : memref<2x128x512xbf16, #tpu.memory_space<vmem>>, vector<1x128x512xbf16>
    %6 = vector.shape_cast %5 : vector<1x128x512xbf16> to vector<128x512xbf16>
    %cst = arith.constant dense<0.000000e+00> : vector<64x512xf32>
    %7 = tpu.matmul %4, %6, %cst {dimension_numbers = #tpu.dot_dimension_numbers<[1], [0], [0], [1], [0, 0, 1, 1], [], []>} : vector<64x128xbf16>, vector<128x512xbf16>, vector<64x512xf32> -> vector<64x512xf32>
    %c0_6 = arith.constant 0 : index
    %c0_7 = arith.constant 0 : index
    %c0_8 = arith.constant 0 : index
    %8 = vector.load %arg5[%c0_6, %c0_7, %c0_8] : memref<2x1x512xf32, #tpu.memory_space<vmem>>, vector<1x1x512xf32>
    %9 = vector.shape_cast %8 : vector<1x1x512xf32> to vector<1x512xf32>
    %10 = vector.broadcast %9 : vector<1x512xf32> to vector<64x512xf32>
    %11 = arith.addf %7, %10 : vector<64x512xf32>
    %12 = vector.shape_cast %11 : vector<64x512xf32> to vector<8x8x512xf32>
    %c0_9 = arith.constant 0 : index
    %c0_10 = arith.constant 0 : index
    %c0_11 = arith.constant 0 : index
    %13 = vector.load %arg11[%c0_9, %c0_10, %c0_11] : memref<8x8x512xf32, #tpu.memory_space<vmem>>, vector<8x8x512xf32>
    tpu.vector_store %arg11[%c0_9, %c0_10, %c0_11], %12 {strides = array<i32>} : memref<8x8x512xf32, #tpu.memory_space<vmem>>, vector<8x8x512xf32>,
    %c0_12 = arith.constant 0 : index
    %c0_13 = arith.constant 0 : index
    %c0_14 = arith.constant 0 : index
    %14 = vector.load %arg4[%c0_12, %c0_13, %c0_14] : memref<2x128x512xbf16, #tpu.memory_space<vmem>>, vector<1x128x512xbf16>
    %15 = vector.shape_cast %14 : vector<1x128x512xbf16> to vector<128x512xbf16>
    %c0_15 = arith.constant 0 : index
    %c0_16 = arith.constant 0 : index
    %c0_17 = arith.constant 0 : index
    %16 = vector.load %arg9[%c0_15, %c0_16, %c0_17] : memref<2x8x128xf32, #tpu.memory_space<vmem>>, vector<1x8x128xf32>
    %17 = vector.shape_cast %16 : vector<1x8x128xf32> to vector<8x128xf32>
    %c0_18 = arith.constant 0 : index
    %c0_19 = arith.constant 0 : index
    %c0_20 = arith.constant 0 : index
    %18 = vector.load %arg10[%c0_18, %c0_19, %c0_20] : memref<2x8x128xf32, #tpu.memory_space<vmem>>, vector<1x8x128xf32>
    %19 = vector.shape_cast %18 : vector<1x8x128xf32> to vector<8x128xf32>
    %c0_i32_21 = arith.constant 0 : i32
    %20 = arith.index_cast %c0_i32_21 : i32 to index
    %c0_22 = arith.constant 0 : index
    %c0_23 = arith.constant 0 : index
    %21 = vector.load %arg11[%20, %c0_22, %c0_23] : memref<8x8x512xf32, #tpu.memory_space<vmem>>, vector<1x8x512xf32>
    %22 = vector.shape_cast %21 : vector<1x8x512xf32> to vector<8x512xf32>
    %23 = arith.truncf %17 : vector<8x128xf32> to vector<8x128xbf16>
    %cst_24 = arith.constant dense<0.000000e+00> : vector<8x512xf32>
    %24 = tpu.matmul %23, %15, %cst_24 {dimension_numbers = #tpu.dot_dimension_numbers<[1], [0], [0], [1], [0, 0, 1, 1], [], []>} : vector<8x128xbf16>, vector<128x512xbf16>, vector<8x512xf32> -> vector<8x512xf32>
    %25 = arith.addf %22, %24 : vector<8x512xf32>
    %26 = vector.extract_strided_slice %25 {offsets = [0, 0], sizes = [8, 128], strides = [1, 1]} : vector<8x512xf32> to vector<8x128xf32>
    %27 = arith.negf %26 : vector<8x128xf32>
    %28 = math.exp %27 : vector<8x128xf32>
    %cst_25 = arith.constant 1.000000e+00 : f32
    %29 = vector.broadcast %cst_25 : f32 to vector<8x128xf32>
    %30 = arith.addf %29, %28 : vector<8x128xf32>
    %31 = arith.divf %29, %30 : vector<8x128xf32>
    %32 = vector.extract_strided_slice %25 {offsets = [0, 128], sizes = [8, 128], strides = [1, 1]} : vector<8x512xf32> to vector<8x128xf32>
    %33 = arith.negf %32 : vector<8x128xf32>
    %34 = math.exp %33 : vector<8x128xf32>
    %cst_26 = arith.constant 1.000000e+00 : f32
    %35 = vector.broadcast %cst_26 : f32 to vector<8x128xf32>
    %36 = arith.addf %35, %34 : vector<8x128xf32>
    %37 = arith.divf %35, %36 : vector<8x128xf32>
    %38 = vector.extract_strided_slice %25 {offsets = [0, 256], sizes = [8, 128], strides = [1, 1]} : vector<8x512xf32> to vector<8x128xf32>
    %39 = math.tanh %38 : vector<8x128xf32>
    %40 = vector.extract_strided_slice %25 {offsets = [0, 384], sizes = [8, 128], strides = [1, 1]} : vector<8x512xf32> to vector<8x128xf32>
    %41 = arith.negf %40 : vector<8x128xf32>
    %42 = math.exp %41 : vector<8x128xf32>
    %cst_27 = arith.constant 1.000000e+00 : f32
    %43 = vector.broadcast %cst_27 : f32 to vector<8x128xf32>
    %44 = arith.addf %43, %42 : vector<8x128xf32>
    %45 = arith.divf %43, %44 : vector<8x128xf32>
    %46 = arith.mulf %37, %19 : vector<8x128xf32>
    %47 = arith.mulf %31, %39 : vector<8x128xf32>
    %48 = arith.addf %46, %47 : vector<8x128xf32>
    %49 = math.tanh %48 : vector<8x128xf32>
    %50 = arith.mulf %45, %49 : vector<8x128xf32>
    %51 = arith.truncf %50 : vector<8x128xf32> to vector<8x128xbf16>
    %52 = arith.index_cast %c0_i32_21 : i32 to index
    %c0_28 = arith.constant 0 : index
    %c0_29 = arith.constant 0 : index
    %53 = vector.load %arg8[%52, %c0_28, %c0_29] : memref<8x8x128xbf16, #tpu.memory_space<vmem>>, vector<1x8x128xbf16>
    %54 = vector.shape_cast %53 : vector<1x8x128xbf16> to vector<8x128xbf16>
    %55 = vector.shape_cast %51 : vector<8x128xbf16> to vector<1x8x128xbf16>
    tpu.vector_store %arg8[%52, %c0_28, %c0_29], %55 {strides = array<i32>} : memref<8x8x128xbf16, #tpu.memory_space<vmem>>, vector<1x8x128xbf16>,
    %c1_i32 = arith.constant 1 : i32
    %56 = arith.index_cast %c1_i32 : i32 to index
    %c0_30 = arith.constant 0 : index
    %c0_31 = arith.constant 0 : index
    %57 = vector.load %arg11[%56, %c0_30, %c0_31] : memref<8x8x512xf32, #tpu.memory_space<vmem>>, vector<1x8x512xf32>
    %58 = vector.shape_cast %57 : vector<1x8x512xf32> to vector<8x512xf32>
    %59 = arith.truncf %50 : vector<8x128xf32> to vector<8x128xbf16>
    %cst_32 = arith.constant dense<0.000000e+00> : vector<8x512xf32>
    %60 = tpu.matmul %59, %15, %cst_32 {dimension_numbers = #tpu.dot_dimension_numbers<[1], [0], [0], [1], [0, 0, 1, 1], [], []>} : vector<8x128xbf16>, vector<128x512xbf16>, vector<8x512xf32> -> vector<8x512xf32>
    %61 = arith.addf %58, %60 : vector<8x512xf32>
    %62 = vector.extract_strided_slice %61 {offsets = [0, 0], sizes = [8, 128], strides = [1, 1]} : vector<8x512xf32> to vector<8x128xf32>
    %63 = arith.negf %62 : vector<8x128xf32>
    %64 = math.exp %63 : vector<8x128xf32>
    %cst_33 = arith.constant 1.000000e+00 : f32
    %65 = vector.broadcast %cst_33 : f32 to vector<8x128xf32>
    %66 = arith.addf %65, %64 : vector<8x128xf32>
    %67 = arith.divf %65, %66 : vector<8x128xf32>
    %68 = vector.extract_strided_slice %61 {offsets = [0, 128], sizes = [8, 128], strides = [1, 1]} : vector<8x512xf32> to vector<8x128xf32>
    %69 = arith.negf %68 : vector<8x128xf32>
    %70 = math.exp %69 : vector<8x128xf32>
    %cst_34 = arith.constant 1.000000e+00 : f32
    %71 = vector.broadcast %cst_34 : f32 to vector<8x128xf32>
    %72 = arith.addf %71, %70 : vector<8x128xf32>
    %73 = arith.divf %71, %72 : vector<8x128xf32>
    %74 = vector.extract_strided_slice %61 {offsets = [0, 256], sizes = [8, 128], strides = [1, 1]} : vector<8x512xf32> to vector<8x128xf32>
    %75 = math.tanh %74 : vector<8x128xf32>
    %76 = vector.extract_strided_slice %61 {offsets = [0, 384], sizes = [8, 128], strides = [1, 1]} : vector<8x512xf32> to vector<8x128xf32>
    %77 = arith.negf %76 : vector<8x128xf32>
    %78 = math.exp %77 : vector<8x128xf32>
    %cst_35 = arith.constant 1.000000e+00 : f32
    %79 = vector.broadcast %cst_35 : f32 to vector<8x128xf32>
    %80 = arith.addf %79, %78 : vector<8x128xf32>
    %81 = arith.divf %79, %80 : vector<8x128xf32>
    %82 = arith.mulf %73, %48 : vector<8x128xf32>
    %83 = arith.mulf %67, %75 : vector<8x128xf32>
    %84 = arith.addf %82, %83 : vector<8x128xf32>
    %85 = math.tanh %84 : vector<8x128xf32>
    %86 = arith.mulf %81, %85 : vector<8x128xf32>
    %87 = arith.truncf %86 : vector<8x128xf32> to vector<8x128xbf16>
    %88 = arith.index_cast %c1_i32 : i32 to index
    %c0_36 = arith.constant 0 : index
    %c0_37 = arith.constant 0 : index
    %89 = vector.load %arg8[%88, %c0_36, %c0_37] : memref<8x8x128xbf16, #tpu.memory_space<vmem>>, vector<1x8x128xbf16>
    %90 = vector.shape_cast %89 : vector<1x8x128xbf16> to vector<8x128xbf16>
    %91 = vector.shape_cast %87 : vector<8x128xbf16> to vector<1x8x128xbf16>
    tpu.vector_store %arg8[%88, %c0_36, %c0_37], %91 {strides = array<i32>} : memref<8x8x128xbf16, #tpu.memory_space<vmem>>, vector<1x8x128xbf16>,
    %c2_i32 = arith.constant 2 : i32
    %92 = arith.index_cast %c2_i32 : i32 to index
    %c0_38 = arith.constant 0 : index
    %c0_39 = arith.constant 0 : index
    %93 = vector.load %arg11[%92, %c0_38, %c0_39] : memref<8x8x512xf32, #tpu.memory_space<vmem>>, vector<1x8x512xf32>
    %94 = vector.shape_cast %93 : vector<1x8x512xf32> to vector<8x512xf32>
    %95 = arith.truncf %86 : vector<8x128xf32> to vector<8x128xbf16>
    %cst_40 = arith.constant dense<0.000000e+00> : vector<8x512xf32>
    %96 = tpu.matmul %95, %15, %cst_40 {dimension_numbers = #tpu.dot_dimension_numbers<[1], [0], [0], [1], [0, 0, 1, 1], [], []>} : vector<8x128xbf16>, vector<128x512xbf16>, vector<8x512xf32> -> vector<8x512xf32>
    %97 = arith.addf %94, %96 : vector<8x512xf32>
    %98 = vector.extract_strided_slice %97 {offsets = [0, 0], sizes = [8, 128], strides = [1, 1]} : vector<8x512xf32> to vector<8x128xf32>
    %99 = arith.negf %98 : vector<8x128xf32>
    %100 = math.exp %99 : vector<8x128xf32>
    %cst_41 = arith.constant 1.000000e+00 : f32
    %101 = vector.broadcast %cst_41 : f32 to vector<8x128xf32>
    %102 = arith.addf %101, %100 : vector<8x128xf32>
    %103 = arith.divf %101, %102 : vector<8x128xf32>
    %104 = vector.extract_strided_slice %97 {offsets = [0, 128], sizes = [8, 128], strides = [1, 1]} : vector<8x512xf32> to vector<8x128xf32>
    %105 = arith.negf %104 : vector<8x128xf32>
    %106 = math.exp %105 : vector<8x128xf32>
    %cst_42 = arith.constant 1.000000e+00 : f32
    %107 = vector.broadcast %cst_42 : f32 to vector<8x128xf32>
    %108 = arith.addf %107, %106 : vector<8x128xf32>
    %109 = arith.divf %107, %108 : vector<8x128xf32>
    %110 = vector.extract_strided_slice %97 {offsets = [0, 256], sizes = [8, 128], strides = [1, 1]} : vector<8x512xf32> to vector<8x128xf32>
    %111 = math.tanh %110 : vector<8x128xf32>
    %112 = vector.extract_strided_slice %97 {offsets = [0, 384], sizes = [8, 128], strides = [1, 1]} : vector<8x512xf32> to vector<8x128xf32>
    %113 = arith.negf %112 : vector<8x128xf32>
    %114 = math.exp %113 : vector<8x128xf32>
    %cst_43 = arith.constant 1.000000e+00 : f32
    %115 = vector.broadcast %cst_43 : f32 to vector<8x128xf32>
    %116 = arith.addf %115, %114 : vector<8x128xf32>
    %117 = arith.divf %115, %116 : vector<8x128xf32>
    %118 = arith.mulf %109, %84 : vector<8x128xf32>
    %119 = arith.mulf %103, %111 : vector<8x128xf32>
    %120 = arith.addf %118, %119 : vector<8x128xf32>
    %121 = math.tanh %120 : vector<8x128xf32>
    %122 = arith.mulf %117, %121 : vector<8x128xf32>
    %123 = arith.truncf %122 : vector<8x128xf32> to vector<8x128xbf16>
    %124 = arith.index_cast %c2_i32 : i32 to index
    %c0_44 = arith.constant 0 : index
    %c0_45 = arith.constant 0 : index
    %125 = vector.load %arg8[%124, %c0_44, %c0_45] : memref<8x8x128xbf16, #tpu.memory_space<vmem>>, vector<1x8x128xbf16>
    %126 = vector.shape_cast %125 : vector<1x8x128xbf16> to vector<8x128xbf16>
    %127 = vector.shape_cast %123 : vector<8x128xbf16> to vector<1x8x128xbf16>
    tpu.vector_store %arg8[%124, %c0_44, %c0_45], %127 {strides = array<i32>} : memref<8x8x128xbf16, #tpu.memory_space<vmem>>, vector<1x8x128xbf16>,
    %c3_i32 = arith.constant 3 : i32
    %128 = arith.index_cast %c3_i32 : i32 to index
    %c0_46 = arith.constant 0 : index
    %c0_47 = arith.constant 0 : index
    %129 = vector.load %arg11[%128, %c0_46, %c0_47] : memref<8x8x512xf32, #tpu.memory_space<vmem>>, vector<1x8x512xf32>
    %130 = vector.shape_cast %129 : vector<1x8x512xf32> to vector<8x512xf32>
    %131 = arith.truncf %122 : vector<8x128xf32> to vector<8x128xbf16>
    %cst_48 = arith.constant dense<0.000000e+00> : vector<8x512xf32>
    %132 = tpu.matmul %131, %15, %cst_48 {dimension_numbers = #tpu.dot_dimension_numbers<[1], [0], [0], [1], [0, 0, 1, 1], [], []>} : vector<8x128xbf16>, vector<128x512xbf16>, vector<8x512xf32> -> vector<8x512xf32>
    %133 = arith.addf %130, %132 : vector<8x512xf32>
    %134 = vector.extract_strided_slice %133 {offsets = [0, 0], sizes = [8, 128], strides = [1, 1]} : vector<8x512xf32> to vector<8x128xf32>
    %135 = arith.negf %134 : vector<8x128xf32>
    %136 = math.exp %135 : vector<8x128xf32>
    %cst_49 = arith.constant 1.000000e+00 : f32
    %137 = vector.broadcast %cst_49 : f32 to vector<8x128xf32>
    %138 = arith.addf %137, %136 : vector<8x128xf32>
    %139 = arith.divf %137, %138 : vector<8x128xf32>
    %140 = vector.extract_strided_slice %133 {offsets = [0, 128], sizes = [8, 128], strides = [1, 1]} : vector<8x512xf32> to vector<8x128xf32>
    %141 = arith.negf %140 : vector<8x128xf32>
    %142 = math.exp %141 : vector<8x128xf32>
    %cst_50 = arith.constant 1.000000e+00 : f32
    %143 = vector.broadcast %cst_50 : f32 to vector<8x128xf32>
    %144 = arith.addf %143, %142 : vector<8x128xf32>
    %145 = arith.divf %143, %144 : vector<8x128xf32>
    %146 = vector.extract_strided_slice %133 {offsets = [0, 256], sizes = [8, 128], strides = [1, 1]} : vector<8x512xf32> to vector<8x128xf32>
    %147 = math.tanh %146 : vector<8x128xf32>
    %148 = vector.extract_strided_slice %133 {offsets = [0, 384], sizes = [8, 128], strides = [1, 1]} : vector<8x512xf32> to vector<8x128xf32>
    %149 = arith.negf %148 : vector<8x128xf32>
    %150 = math.exp %149 : vector<8x128xf32>
    %cst_51 = arith.constant 1.000000e+00 : f32
    %151 = vector.broadcast %cst_51 : f32 to vector<8x128xf32>
    %152 = arith.addf %151, %150 : vector<8x128xf32>
    %153 = arith.divf %151, %152 : vector<8x128xf32>
    %154 = arith.mulf %145, %120 : vector<8x128xf32>
    %155 = arith.mulf %139, %147 : vector<8x128xf32>
    %156 = arith.addf %154, %155 : vector<8x128xf32>
    %157 = math.tanh %156 : vector<8x128xf32>
    %158 = arith.mulf %153, %157 : vector<8x128xf32>
    %159 = arith.truncf %158 : vector<8x128xf32> to vector<8x128xbf16>
    %160 = arith.index_cast %c3_i32 : i32 to index
    %c0_52 = arith.constant 0 : index
    %c0_53 = arith.constant 0 : index
    %161 = vector.load %arg8[%160, %c0_52, %c0_53] : memref<8x8x128xbf16, #tpu.memory_space<vmem>>, vector<1x8x128xbf16>
    %162 = vector.shape_cast %161 : vector<1x8x128xbf16> to vector<8x128xbf16>
    %163 = vector.shape_cast %159 : vector<8x128xbf16> to vector<1x8x128xbf16>
    tpu.vector_store %arg8[%160, %c0_52, %c0_53], %163 {strides = array<i32>} : memref<8x8x128xbf16, #tpu.memory_space<vmem>>, vector<1x8x128xbf16>,
    %c4_i32 = arith.constant 4 : i32
    %164 = arith.index_cast %c4_i32 : i32 to index
    %c0_54 = arith.constant 0 : index
    %c0_55 = arith.constant 0 : index
    %165 = vector.load %arg11[%164, %c0_54, %c0_55] : memref<8x8x512xf32, #tpu.memory_space<vmem>>, vector<1x8x512xf32>
    %166 = vector.shape_cast %165 : vector<1x8x512xf32> to vector<8x512xf32>
    %167 = arith.truncf %158 : vector<8x128xf32> to vector<8x128xbf16>
    %cst_56 = arith.constant dense<0.000000e+00> : vector<8x512xf32>
    %168 = tpu.matmul %167, %15, %cst_56 {dimension_numbers = #tpu.dot_dimension_numbers<[1], [0], [0], [1], [0, 0, 1, 1], [], []>} : vector<8x128xbf16>, vector<128x512xbf16>, vector<8x512xf32> -> vector<8x512xf32>
    %169 = arith.addf %166, %168 : vector<8x512xf32>
    %170 = vector.extract_strided_slice %169 {offsets = [0, 0], sizes = [8, 128], strides = [1, 1]} : vector<8x512xf32> to vector<8x128xf32>
    %171 = arith.negf %170 : vector<8x128xf32>
    %172 = math.exp %171 : vector<8x128xf32>
    %cst_57 = arith.constant 1.000000e+00 : f32
    %173 = vector.broadcast %cst_57 : f32 to vector<8x128xf32>
    %174 = arith.addf %173, %172 : vector<8x128xf32>
    %175 = arith.divf %173, %174 : vector<8x128xf32>
    %176 = vector.extract_strided_slice %169 {offsets = [0, 128], sizes = [8, 128], strides = [1, 1]} : vector<8x512xf32> to vector<8x128xf32>
    %177 = arith.negf %176 : vector<8x128xf32>
    %178 = math.exp %177 : vector<8x128xf32>
    %cst_58 = arith.constant 1.000000e+00 : f32
    %179 = vector.broadcast %cst_58 : f32 to vector<8x128xf32>
    %180 = arith.addf %179, %178 : vector<8x128xf32>
    %181 = arith.divf %179, %180 : vector<8x128xf32>
    %182 = vector.extract_strided_slice %169 {offsets = [0, 256], sizes = [8, 128], strides = [1, 1]} : vector<8x512xf32> to vector<8x128xf32>
    %183 = math.tanh %182 : vector<8x128xf32>
    %184 = vector.extract_strided_slice %169 {offsets = [0, 384], sizes = [8, 128], strides = [1, 1]} : vector<8x512xf32> to vector<8x128xf32>
    %185 = arith.negf %184 : vector<8x128xf32>
    %186 = math.exp %185 : vector<8x128xf32>
    %cst_59 = arith.constant 1.000000e+00 : f32
    %187 = vector.broadcast %cst_59 : f32 to vector<8x128xf32>
    %188 = arith.addf %187, %186 : vector<8x128xf32>
    %189 = arith.divf %187, %188 : vector<8x128xf32>
    %190 = arith.mulf %181, %156 : vector<8x128xf32>
    %191 = arith.mulf %175, %183 : vector<8x128xf32>
    %192 = arith.addf %190, %191 : vector<8x128xf32>
    %193 = math.tanh %192 : vector<8x128xf32>
    %194 = arith.mulf %189, %193 : vector<8x128xf32>
    %195 = arith.truncf %194 : vector<8x128xf32> to vector<8x128xbf16>
    %196 = arith.index_cast %c4_i32 : i32 to index
    %c0_60 = arith.constant 0 : index
    %c0_61 = arith.constant 0 : index
    %197 = vector.load %arg8[%196, %c0_60, %c0_61] : memref<8x8x128xbf16, #tpu.memory_space<vmem>>, vector<1x8x128xbf16>
    %198 = vector.shape_cast %197 : vector<1x8x128xbf16> to vector<8x128xbf16>
    %199 = vector.shape_cast %195 : vector<8x128xbf16> to vector<1x8x128xbf16>
    tpu.vector_store %arg8[%196, %c0_60, %c0_61], %199 {strides = array<i32>} : memref<8x8x128xbf16, #tpu.memory_space<vmem>>, vector<1x8x128xbf16>,
    %c5_i32 = arith.constant 5 : i32
    %200 = arith.index_cast %c5_i32 : i32 to index
    %c0_62 = arith.constant 0 : index
    %c0_63 = arith.constant 0 : index
    %201 = vector.load %arg11[%200, %c0_62, %c0_63] : memref<8x8x512xf32, #tpu.memory_space<vmem>>, vector<1x8x512xf32>
    %202 = vector.shape_cast %201 : vector<1x8x512xf32> to vector<8x512xf32>
    %203 = arith.truncf %194 : vector<8x128xf32> to vector<8x128xbf16>
    %cst_64 = arith.constant dense<0.000000e+00> : vector<8x512xf32>
    %204 = tpu.matmul %203, %15, %cst_64 {dimension_numbers = #tpu.dot_dimension_numbers<[1], [0], [0], [1], [0, 0, 1, 1], [], []>} : vector<8x128xbf16>, vector<128x512xbf16>, vector<8x512xf32> -> vector<8x512xf32>
    %205 = arith.addf %202, %204 : vector<8x512xf32>
    %206 = vector.extract_strided_slice %205 {offsets = [0, 0], sizes = [8, 128], strides = [1, 1]} : vector<8x512xf32> to vector<8x128xf32>
    %207 = arith.negf %206 : vector<8x128xf32>
    %208 = math.exp %207 : vector<8x128xf32>
    %cst_65 = arith.constant 1.000000e+00 : f32
    %209 = vector.broadcast %cst_65 : f32 to vector<8x128xf32>
    %210 = arith.addf %209, %208 : vector<8x128xf32>
    %211 = arith.divf %209, %210 : vector<8x128xf32>
    %212 = vector.extract_strided_slice %205 {offsets = [0, 128], sizes = [8, 128], strides = [1, 1]} : vector<8x512xf32> to vector<8x128xf32>
    %213 = arith.negf %212 : vector<8x128xf32>
    %214 = math.exp %213 : vector<8x128xf32>
    %cst_66 = arith.constant 1.000000e+00 : f32
    %215 = vector.broadcast %cst_66 : f32 to vector<8x128xf32>
    %216 = arith.addf %215, %214 : vector<8x128xf32>
    %217 = arith.divf %215, %216 : vector<8x128xf32>
    %218 = vector.extract_strided_slice %205 {offsets = [0, 256], sizes = [8, 128], strides = [1, 1]} : vector<8x512xf32> to vector<8x128xf32>
    %219 = math.tanh %218 : vector<8x128xf32>
    %220 = vector.extract_strided_slice %205 {offsets = [0, 384], sizes = [8, 128], strides = [1, 1]} : vector<8x512xf32> to vector<8x128xf32>
    %221 = arith.negf %220 : vector<8x128xf32>
    %222 = math.exp %221 : vector<8x128xf32>
    %cst_67 = arith.constant 1.000000e+00 : f32
    %223 = vector.broadcast %cst_67 : f32 to vector<8x128xf32>
    %224 = arith.addf %223, %222 : vector<8x128xf32>
    %225 = arith.divf %223, %224 : vector<8x128xf32>
    %226 = arith.mulf %217, %192 : vector<8x128xf32>
    %227 = arith.mulf %211, %219 : vector<8x128xf32>
    %228 = arith.addf %226, %227 : vector<8x128xf32>
    %229 = math.tanh %228 : vector<8x128xf32>
    %230 = arith.mulf %225, %229 : vector<8x128xf32>
    %231 = arith.truncf %230 : vector<8x128xf32> to vector<8x128xbf16>
    %232 = arith.index_cast %c5_i32 : i32 to index
    %c0_68 = arith.constant 0 : index
    %c0_69 = arith.constant 0 : index
    %233 = vector.load %arg8[%232, %c0_68, %c0_69] : memref<8x8x128xbf16, #tpu.memory_space<vmem>>, vector<1x8x128xbf16>
    %234 = vector.shape_cast %233 : vector<1x8x128xbf16> to vector<8x128xbf16>
    %235 = vector.shape_cast %231 : vector<8x128xbf16> to vector<1x8x128xbf16>
    tpu.vector_store %arg8[%232, %c0_68, %c0_69], %235 {strides = array<i32>} : memref<8x8x128xbf16, #tpu.memory_space<vmem>>, vector<1x8x128xbf16>,
    %c6_i32 = arith.constant 6 : i32
    %236 = arith.index_cast %c6_i32 : i32 to index
    %c0_70 = arith.constant 0 : index
    %c0_71 = arith.constant 0 : index
    %237 = vector.load %arg11[%236, %c0_70, %c0_71] : memref<8x8x512xf32, #tpu.memory_space<vmem>>, vector<1x8x512xf32>
    %238 = vector.shape_cast %237 : vector<1x8x512xf32> to vector<8x512xf32>
    %239 = arith.truncf %230 : vector<8x128xf32> to vector<8x128xbf16>
    %cst_72 = arith.constant dense<0.000000e+00> : vector<8x512xf32>
    %240 = tpu.matmul %239, %15, %cst_72 {dimension_numbers = #tpu.dot_dimension_numbers<[1], [0], [0], [1], [0, 0, 1, 1], [], []>} : vector<8x128xbf16>, vector<128x512xbf16>, vector<8x512xf32> -> vector<8x512xf32>
    %241 = arith.addf %238, %240 : vector<8x512xf32>
    %242 = vector.extract_strided_slice %241 {offsets = [0, 0], sizes = [8, 128], strides = [1, 1]} : vector<8x512xf32> to vector<8x128xf32>
    %243 = arith.negf %242 : vector<8x128xf32>
    %244 = math.exp %243 : vector<8x128xf32>
    %cst_73 = arith.constant 1.000000e+00 : f32
    %245 = vector.broadcast %cst_73 : f32 to vector<8x128xf32>
    %246 = arith.addf %245, %244 : vector<8x128xf32>
    %247 = arith.divf %245, %246 : vector<8x128xf32>
    %248 = vector.extract_strided_slice %241 {offsets = [0, 128], sizes = [8, 128], strides = [1, 1]} : vector<8x512xf32> to vector<8x128xf32>
    %249 = arith.negf %248 : vector<8x128xf32>
    %250 = math.exp %249 : vector<8x128xf32>
    %cst_74 = arith.constant 1.000000e+00 : f32
    %251 = vector.broadcast %cst_74 : f32 to vector<8x128xf32>
    %252 = arith.addf %251, %250 : vector<8x128xf32>
    %253 = arith.divf %251, %252 : vector<8x128xf32>
    %254 = vector.extract_strided_slice %241 {offsets = [0, 256], sizes = [8, 128], strides = [1, 1]} : vector<8x512xf32> to vector<8x128xf32>
    %255 = math.tanh %254 : vector<8x128xf32>
    %256 = vector.extract_strided_slice %241 {offsets = [0, 384], sizes = [8, 128], strides = [1, 1]} : vector<8x512xf32> to vector<8x128xf32>
    %257 = arith.negf %256 : vector<8x128xf32>
    %258 = math.exp %257 : vector<8x128xf32>
    %cst_75 = arith.constant 1.000000e+00 : f32
    %259 = vector.broadcast %cst_75 : f32 to vector<8x128xf32>
    %260 = arith.addf %259, %258 : vector<8x128xf32>
    %261 = arith.divf %259, %260 : vector<8x128xf32>
    %262 = arith.mulf %253, %228 : vector<8x128xf32>
    %263 = arith.mulf %247, %255 : vector<8x128xf32>
    %264 = arith.addf %262, %263 : vector<8x128xf32>
    %265 = math.tanh %264 : vector<8x128xf32>
    %266 = arith.mulf %261, %265 : vector<8x128xf32>
    %267 = arith.truncf %266 : vector<8x128xf32> to vector<8x128xbf16>
    %268 = arith.index_cast %c6_i32 : i32 to index
    %c0_76 = arith.constant 0 : index
    %c0_77 = arith.constant 0 : index
    %269 = vector.load %arg8[%268, %c0_76, %c0_77] : memref<8x8x128xbf16, #tpu.memory_space<vmem>>, vector<1x8x128xbf16>
    %270 = vector.shape_cast %269 : vector<1x8x128xbf16> to vector<8x128xbf16>
    %271 = vector.shape_cast %267 : vector<8x128xbf16> to vector<1x8x128xbf16>
    tpu.vector_store %arg8[%268, %c0_76, %c0_77], %271 {strides = array<i32>} : memref<8x8x128xbf16, #tpu.memory_space<vmem>>, vector<1x8x128xbf16>,
    %c7_i32 = arith.constant 7 : i32
    %272 = arith.index_cast %c7_i32 : i32 to index
    %c0_78 = arith.constant 0 : index
    %c0_79 = arith.constant 0 : index
    %273 = vector.load %arg11[%272, %c0_78, %c0_79] : memref<8x8x512xf32, #tpu.memory_space<vmem>>, vector<1x8x512xf32>
    %274 = vector.shape_cast %273 : vector<1x8x512xf32> to vector<8x512xf32>
    %275 = arith.truncf %266 : vector<8x128xf32> to vector<8x128xbf16>
    %cst_80 = arith.constant dense<0.000000e+00> : vector<8x512xf32>
    %276 = tpu.matmul %275, %15, %cst_80 {dimension_numbers = #tpu.dot_dimension_numbers<[1], [0], [0], [1], [0, 0, 1, 1], [], []>} : vector<8x128xbf16>, vector<128x512xbf16>, vector<8x512xf32> -> vector<8x512xf32>
    %277 = arith.addf %274, %276 : vector<8x512xf32>
    %278 = vector.extract_strided_slice %277 {offsets = [0, 0], sizes = [8, 128], strides = [1, 1]} : vector<8x512xf32> to vector<8x128xf32>
    %279 = arith.negf %278 : vector<8x128xf32>
    %280 = math.exp %279 : vector<8x128xf32>
    %cst_81 = arith.constant 1.000000e+00 : f32
    %281 = vector.broadcast %cst_81 : f32 to vector<8x128xf32>
    %282 = arith.addf %281, %280 : vector<8x128xf32>
    %283 = arith.divf %281, %282 : vector<8x128xf32>
    %284 = vector.extract_strided_slice %277 {offsets = [0, 128], sizes = [8, 128], strides = [1, 1]} : vector<8x512xf32> to vector<8x128xf32>
    %285 = arith.negf %284 : vector<8x128xf32>
    %286 = math.exp %285 : vector<8x128xf32>
    %cst_82 = arith.constant 1.000000e+00 : f32
    %287 = vector.broadcast %cst_82 : f32 to vector<8x128xf32>
    %288 = arith.addf %287, %286 : vector<8x128xf32>
    %289 = arith.divf %287, %288 : vector<8x128xf32>
    %290 = vector.extract_strided_slice %277 {offsets = [0, 256], sizes = [8, 128], strides = [1, 1]} : vector<8x512xf32> to vector<8x128xf32>
    %291 = math.tanh %290 : vector<8x128xf32>
    %292 = vector.extract_strided_slice %277 {offsets = [0, 384], sizes = [8, 128], strides = [1, 1]} : vector<8x512xf32> to vector<8x128xf32>
    %293 = arith.negf %292 : vector<8x128xf32>
    %294 = math.exp %293 : vector<8x128xf32>
    %cst_83 = arith.constant 1.000000e+00 : f32
    %295 = vector.broadcast %cst_83 : f32 to vector<8x128xf32>
    %296 = arith.addf %295, %294 : vector<8x128xf32>
    %297 = arith.divf %295, %296 : vector<8x128xf32>
    %298 = arith.mulf %289, %264 : vector<8x128xf32>
    %299 = arith.mulf %283, %291 : vector<8x128xf32>
    %300 = arith.addf %298, %299 : vector<8x128xf32>
    %301 = math.tanh %300 : vector<8x128xf32>
    %302 = arith.mulf %297, %301 : vector<8x128xf32>
    %303 = arith.truncf %302 : vector<8x128xf32> to vector<8x128xbf16>
    %304 = arith.index_cast %c7_i32 : i32 to index
    %c0_84 = arith.constant 0 : index
    %c0_85 = arith.constant 0 : index
    %305 = vector.load %arg8[%304, %c0_84, %c0_85] : memref<8x8x128xbf16, #tpu.memory_space<vmem>>, vector<1x8x128xbf16>
    %306 = vector.shape_cast %305 : vector<1x8x128xbf16> to vector<8x128xbf16>
    %307 = vector.shape_cast %303 : vector<8x128xbf16> to vector<1x8x128xbf16>
    tpu.vector_store %arg8[%304, %c0_84, %c0_85], %307 {strides = array<i32>} : memref<8x8x128xbf16, #tpu.memory_space<vmem>>, vector<1x8x128xbf16>,
    %c8_i32 = arith.constant 8 : i32
    %c0_86 = arith.constant 0 : index
    %c0_87 = arith.constant 0 : index
    %c0_88 = arith.constant 0 : index
    %308 = vector.load %arg9[%c0_86, %c0_87, %c0_88] : memref<2x8x128xf32, #tpu.memory_space<vmem>>, vector<1x8x128xf32>
    %309 = vector.shape_cast %308 : vector<1x8x128xf32> to vector<8x128xf32>
    %310 = vector.shape_cast %302 : vector<8x128xf32> to vector<1x8x128xf32>
    tpu.vector_store %arg9[%c0_86, %c0_87, %c0_88], %310 {strides = array<i32>} : memref<2x8x128xf32, #tpu.memory_space<vmem>>, vector<1x8x128xf32>,
    %c0_89 = arith.constant 0 : index
    %c0_90 = arith.constant 0 : index
    %c0_91 = arith.constant 0 : index
    %311 = vector.load %arg10[%c0_89, %c0_90, %c0_91] : memref<2x8x128xf32, #tpu.memory_space<vmem>>, vector<1x8x128xf32>
    %312 = vector.shape_cast %311 : vector<1x8x128xf32> to vector<8x128xf32>
    %313 = vector.shape_cast %300 : vector<8x128xf32> to vector<1x8x128xf32>
    tpu.vector_store %arg10[%c0_89, %c0_90, %c0_91], %313 {strides = array<i32>} : memref<2x8x128xf32, #tpu.memory_space<vmem>>, vector<1x8x128xf32>,
    %c0_92 = arith.constant 0 : index
    %c0_93 = arith.constant 0 : index
    %c0_94 = arith.constant 0 : index
    %314 = vector.load %arg8[%c0_92, %c0_93, %c0_94] : memref<8x8x128xbf16, #tpu.memory_space<vmem>>, vector<8x8x128xbf16>
    %315 = vector.shape_cast %314 : vector<8x8x128xbf16> to vector<64x128xbf16>
    %c1 = arith.constant 1 : index
    %c0_95 = arith.constant 0 : index
    %c0_96 = arith.constant 0 : index
    %316 = vector.load %arg3[%c1, %c0_95, %c0_96] : memref<2x128x512xbf16, #tpu.memory_space<vmem>>, vector<1x128x512xbf16>
    %317 = vector.shape_cast %316 : vector<1x128x512xbf16> to vector<128x512xbf16>
    %cst_97 = arith.constant dense<0.000000e+00> : vector<64x512xf32>
    %318 = tpu.matmul %315, %317, %cst_97 {dimension_numbers = #tpu.dot_dimension_numbers<[1], [0], [0], [1], [0, 0, 1, 1], [], []>} : vector<64x128xbf16>, vector<128x512xbf16>, vector<64x512xf32> -> vector<64x512xf32>
    %c1_98 = arith.constant 1 : index
    %c0_99 = arith.constant 0 : index
    %c0_100 = arith.constant 0 : index
    %319 = vector.load %arg5[%c1_98, %c0_99, %c0_100] : memref<2x1x512xf32, #tpu.memory_space<vmem>>, vector<1x1x512xf32>
    %320 = vector.shape_cast %319 : vector<1x1x512xf32> to vector<1x512xf32>
    %321 = vector.broadcast %320 : vector<1x512xf32> to vector<64x512xf32>
    %322 = arith.addf %318, %321 : vector<64x512xf32>
    %323 = vector.shape_cast %322 : vector<64x512xf32> to vector<8x8x512xf32>
    %c0_101 = arith.constant 0 : index
    %c0_102 = arith.constant 0 : index
    %c0_103 = arith.constant 0 : index
    %324 = vector.load %arg11[%c0_101, %c0_102, %c0_103] : memref<8x8x512xf32, #tpu.memory_space<vmem>>, vector<8x8x512xf32>
    tpu.vector_store %arg11[%c0_101, %c0_102, %c0_103], %323 {strides = array<i32>} : memref<8x8x512xf32, #tpu.memory_space<vmem>>, vector<8x8x512xf32>,
    %c1_104 = arith.constant 1 : index
    %c0_105 = arith.constant 0 : index
    %c0_106 = arith.constant 0 : index
    %325 = vector.load %arg4[%c1_104, %c0_105, %c0_106] : memref<2x128x512xbf16, #tpu.memory_space<vmem>>, vector<1x128x512xbf16>
    %326 = vector.shape_cast %325 : vector<1x128x512xbf16> to vector<128x512xbf16>
    %c1_107 = arith.constant 1 : index
    %c0_108 = arith.constant 0 : index
    %c0_109 = arith.constant 0 : index
    %327 = vector.load %arg9[%c1_107, %c0_108, %c0_109] : memref<2x8x128xf32, #tpu.memory_space<vmem>>, vector<1x8x128xf32>
    %328 = vector.shape_cast %327 : vector<1x8x128xf32> to vector<8x128xf32>
    %c1_110 = arith.constant 1 : index
    %c0_111 = arith.constant 0 : index
    %c0_112 = arith.constant 0 : index
    %329 = vector.load %arg10[%c1_110, %c0_111, %c0_112] : memref<2x8x128xf32, #tpu.memory_space<vmem>>, vector<1x8x128xf32>
    %330 = vector.shape_cast %329 : vector<1x8x128xf32> to vector<8x128xf32>
    %c0_i32_113 = arith.constant 0 : i32
    %331 = arith.index_cast %c0_i32_113 : i32 to index
    %c0_114 = arith.constant 0 : index
    %c0_115 = arith.constant 0 : index
    %332 = vector.load %arg11[%331, %c0_114, %c0_115] : memref<8x8x512xf32, #tpu.memory_space<vmem>>, vector<1x8x512xf32>
    %333 = vector.shape_cast %332 : vector<1x8x512xf32> to vector<8x512xf32>
    %334 = arith.truncf %328 : vector<8x128xf32> to vector<8x128xbf16>
    %cst_116 = arith.constant dense<0.000000e+00> : vector<8x512xf32>
    %335 = tpu.matmul %334, %326, %cst_116 {dimension_numbers = #tpu.dot_dimension_numbers<[1], [0], [0], [1], [0, 0, 1, 1], [], []>} : vector<8x128xbf16>, vector<128x512xbf16>, vector<8x512xf32> -> vector<8x512xf32>
    %336 = arith.addf %333, %335 : vector<8x512xf32>
    %337 = vector.extract_strided_slice %336 {offsets = [0, 0], sizes = [8, 128], strides = [1, 1]} : vector<8x512xf32> to vector<8x128xf32>
    %338 = arith.negf %337 : vector<8x128xf32>
    %339 = math.exp %338 : vector<8x128xf32>
    %cst_117 = arith.constant 1.000000e+00 : f32
    %340 = vector.broadcast %cst_117 : f32 to vector<8x128xf32>
    %341 = arith.addf %340, %339 : vector<8x128xf32>
    %342 = arith.divf %340, %341 : vector<8x128xf32>
    %343 = vector.extract_strided_slice %336 {offsets = [0, 128], sizes = [8, 128], strides = [1, 1]} : vector<8x512xf32> to vector<8x128xf32>
    %344 = arith.negf %343 : vector<8x128xf32>
    %345 = math.exp %344 : vector<8x128xf32>
    %cst_118 = arith.constant 1.000000e+00 : f32
    %346 = vector.broadcast %cst_118 : f32 to vector<8x128xf32>
    %347 = arith.addf %346, %345 : vector<8x128xf32>
    %348 = arith.divf %346, %347 : vector<8x128xf32>
    %349 = vector.extract_strided_slice %336 {offsets = [0, 256], sizes = [8, 128], strides = [1, 1]} : vector<8x512xf32> to vector<8x128xf32>
    %350 = math.tanh %349 : vector<8x128xf32>
    %351 = vector.extract_strided_slice %336 {offsets = [0, 384], sizes = [8, 128], strides = [1, 1]} : vector<8x512xf32> to vector<8x128xf32>
    %352 = arith.negf %351 : vector<8x128xf32>
    %353 = math.exp %352 : vector<8x128xf32>
    %cst_119 = arith.constant 1.000000e+00 : f32
    %354 = vector.broadcast %cst_119 : f32 to vector<8x128xf32>
    %355 = arith.addf %354, %353 : vector<8x128xf32>
    %356 = arith.divf %354, %355 : vector<8x128xf32>
    %357 = arith.mulf %348, %330 : vector<8x128xf32>
    %358 = arith.mulf %342, %350 : vector<8x128xf32>
    %359 = arith.addf %357, %358 : vector<8x128xf32>
    %360 = math.tanh %359 : vector<8x128xf32>
    %361 = arith.mulf %356, %360 : vector<8x128xf32>
    %362 = arith.truncf %361 : vector<8x128xf32> to vector<8x128xbf16>
    %363 = arith.index_cast %c0_i32_113 : i32 to index
    %c0_120 = arith.constant 0 : index
    %c0_121 = arith.constant 0 : index
    %364 = vector.load %arg8[%363, %c0_120, %c0_121] : memref<8x8x128xbf16, #tpu.memory_space<vmem>>, vector<1x8x128xbf16>
    %365 = vector.shape_cast %364 : vector<1x8x128xbf16> to vector<8x128xbf16>
    %366 = vector.shape_cast %362 : vector<8x128xbf16> to vector<1x8x128xbf16>
    tpu.vector_store %arg8[%363, %c0_120, %c0_121], %366 {strides = array<i32>} : memref<8x8x128xbf16, #tpu.memory_space<vmem>>, vector<1x8x128xbf16>,
    %c1_i32_122 = arith.constant 1 : i32
    %367 = arith.index_cast %c1_i32_122 : i32 to index
    %c0_123 = arith.constant 0 : index
    %c0_124 = arith.constant 0 : index
    %368 = vector.load %arg11[%367, %c0_123, %c0_124] : memref<8x8x512xf32, #tpu.memory_space<vmem>>, vector<1x8x512xf32>
    %369 = vector.shape_cast %368 : vector<1x8x512xf32> to vector<8x512xf32>
    %370 = arith.truncf %361 : vector<8x128xf32> to vector<8x128xbf16>
    %cst_125 = arith.constant dense<0.000000e+00> : vector<8x512xf32>
    %371 = tpu.matmul %370, %326, %cst_125 {dimension_numbers = #tpu.dot_dimension_numbers<[1], [0], [0], [1], [0, 0, 1, 1], [], []>} : vector<8x128xbf16>, vector<128x512xbf16>, vector<8x512xf32> -> vector<8x512xf32>
    %372 = arith.addf %369, %371 : vector<8x512xf32>
    %373 = vector.extract_strided_slice %372 {offsets = [0, 0], sizes = [8, 128], strides = [1, 1]} : vector<8x512xf32> to vector<8x128xf32>
    %374 = arith.negf %373 : vector<8x128xf32>
    %375 = math.exp %374 : vector<8x128xf32>
    %cst_126 = arith.constant 1.000000e+00 : f32
    %376 = vector.broadcast %cst_126 : f32 to vector<8x128xf32>
    %377 = arith.addf %376, %375 : vector<8x128xf32>
    %378 = arith.divf %376, %377 : vector<8x128xf32>
    %379 = vector.extract_strided_slice %372 {offsets = [0, 128], sizes = [8, 128], strides = [1, 1]} : vector<8x512xf32> to vector<8x128xf32>
    %380 = arith.negf %379 : vector<8x128xf32>
    %381 = math.exp %380 : vector<8x128xf32>
    %cst_127 = arith.constant 1.000000e+00 : f32
    %382 = vector.broadcast %cst_127 : f32 to vector<8x128xf32>
    %383 = arith.addf %382, %381 : vector<8x128xf32>
    %384 = arith.divf %382, %383 : vector<8x128xf32>
    %385 = vector.extract_strided_slice %372 {offsets = [0, 256], sizes = [8, 128], strides = [1, 1]} : vector<8x512xf32> to vector<8x128xf32>
    %386 = math.tanh %385 : vector<8x128xf32>
    %387 = vector.extract_strided_slice %372 {offsets = [0, 384], sizes = [8, 128], strides = [1, 1]} : vector<8x512xf32> to vector<8x128xf32>
    %388 = arith.negf %387 : vector<8x128xf32>
    %389 = math.exp %388 : vector<8x128xf32>
    %cst_128 = arith.constant 1.000000e+00 : f32
    %390 = vector.broadcast %cst_128 : f32 to vector<8x128xf32>
    %391 = arith.addf %390, %389 : vector<8x128xf32>
    %392 = arith.divf %390, %391 : vector<8x128xf32>
    %393 = arith.mulf %384, %359 : vector<8x128xf32>
    %394 = arith.mulf %378, %386 : vector<8x128xf32>
    %395 = arith.addf %393, %394 : vector<8x128xf32>
    %396 = math.tanh %395 : vector<8x128xf32>
    %397 = arith.mulf %392, %396 : vector<8x128xf32>
    %398 = arith.truncf %397 : vector<8x128xf32> to vector<8x128xbf16>
    %399 = arith.index_cast %c1_i32_122 : i32 to index
    %c0_129 = arith.constant 0 : index
    %c0_130 = arith.constant 0 : index
    %400 = vector.load %arg8[%399, %c0_129, %c0_130] : memref<8x8x128xbf16, #tpu.memory_space<vmem>>, vector<1x8x128xbf16>
    %401 = vector.shape_cast %400 : vector<1x8x128xbf16> to vector<8x128xbf16>
    %402 = vector.shape_cast %398 : vector<8x128xbf16> to vector<1x8x128xbf16>
    tpu.vector_store %arg8[%399, %c0_129, %c0_130], %402 {strides = array<i32>} : memref<8x8x128xbf16, #tpu.memory_space<vmem>>, vector<1x8x128xbf16>,
    %c2_i32_131 = arith.constant 2 : i32
    %403 = arith.index_cast %c2_i32_131 : i32 to index
    %c0_132 = arith.constant 0 : index
    %c0_133 = arith.constant 0 : index
    %404 = vector.load %arg11[%403, %c0_132, %c0_133] : memref<8x8x512xf32, #tpu.memory_space<vmem>>, vector<1x8x512xf32>
    %405 = vector.shape_cast %404 : vector<1x8x512xf32> to vector<8x512xf32>
    %406 = arith.truncf %397 : vector<8x128xf32> to vector<8x128xbf16>
    %cst_134 = arith.constant dense<0.000000e+00> : vector<8x512xf32>
    %407 = tpu.matmul %406, %326, %cst_134 {dimension_numbers = #tpu.dot_dimension_numbers<[1], [0], [0], [1], [0, 0, 1, 1], [], []>} : vector<8x128xbf16>, vector<128x512xbf16>, vector<8x512xf32> -> vector<8x512xf32>
    %408 = arith.addf %405, %407 : vector<8x512xf32>
    %409 = vector.extract_strided_slice %408 {offsets = [0, 0], sizes = [8, 128], strides = [1, 1]} : vector<8x512xf32> to vector<8x128xf32>
    %410 = arith.negf %409 : vector<8x128xf32>
    %411 = math.exp %410 : vector<8x128xf32>
    %cst_135 = arith.constant 1.000000e+00 : f32
    %412 = vector.broadcast %cst_135 : f32 to vector<8x128xf32>
    %413 = arith.addf %412, %411 : vector<8x128xf32>
    %414 = arith.divf %412, %413 : vector<8x128xf32>
    %415 = vector.extract_strided_slice %408 {offsets = [0, 128], sizes = [8, 128], strides = [1, 1]} : vector<8x512xf32> to vector<8x128xf32>
    %416 = arith.negf %415 : vector<8x128xf32>
    %417 = math.exp %416 : vector<8x128xf32>
    %cst_136 = arith.constant 1.000000e+00 : f32
    %418 = vector.broadcast %cst_136 : f32 to vector<8x128xf32>
    %419 = arith.addf %418, %417 : vector<8x128xf32>
    %420 = arith.divf %418, %419 : vector<8x128xf32>
    %421 = vector.extract_strided_slice %408 {offsets = [0, 256], sizes = [8, 128], strides = [1, 1]} : vector<8x512xf32> to vector<8x128xf32>
    %422 = math.tanh %421 : vector<8x128xf32>
    %423 = vector.extract_strided_slice %408 {offsets = [0, 384], sizes = [8, 128], strides = [1, 1]} : vector<8x512xf32> to vector<8x128xf32>
    %424 = arith.negf %423 : vector<8x128xf32>
    %425 = math.exp %424 : vector<8x128xf32>
    %cst_137 = arith.constant 1.000000e+00 : f32
    %426 = vector.broadcast %cst_137 : f32 to vector<8x128xf32>
    %427 = arith.addf %426, %425 : vector<8x128xf32>
    %428 = arith.divf %426, %427 : vector<8x128xf32>
    %429 = arith.mulf %420, %395 : vector<8x128xf32>
    %430 = arith.mulf %414, %422 : vector<8x128xf32>
    %431 = arith.addf %429, %430 : vector<8x128xf32>
    %432 = math.tanh %431 : vector<8x128xf32>
    %433 = arith.mulf %428, %432 : vector<8x128xf32>
    %434 = arith.truncf %433 : vector<8x128xf32> to vector<8x128xbf16>
    %435 = arith.index_cast %c2_i32_131 : i32 to index
    %c0_138 = arith.constant 0 : index
    %c0_139 = arith.constant 0 : index
    %436 = vector.load %arg8[%435, %c0_138, %c0_139] : memref<8x8x128xbf16, #tpu.memory_space<vmem>>, vector<1x8x128xbf16>
    %437 = vector.shape_cast %436 : vector<1x8x128xbf16> to vector<8x128xbf16>
    %438 = vector.shape_cast %434 : vector<8x128xbf16> to vector<1x8x128xbf16>
    tpu.vector_store %arg8[%435, %c0_138, %c0_139], %438 {strides = array<i32>} : memref<8x8x128xbf16, #tpu.memory_space<vmem>>, vector<1x8x128xbf16>,
    %c3_i32_140 = arith.constant 3 : i32
    %439 = arith.index_cast %c3_i32_140 : i32 to index
    %c0_141 = arith.constant 0 : index
    %c0_142 = arith.constant 0 : index
    %440 = vector.load %arg11[%439, %c0_141, %c0_142] : memref<8x8x512xf32, #tpu.memory_space<vmem>>, vector<1x8x512xf32>
    %441 = vector.shape_cast %440 : vector<1x8x512xf32> to vector<8x512xf32>
    %442 = arith.truncf %433 : vector<8x128xf32> to vector<8x128xbf16>
    %cst_143 = arith.constant dense<0.000000e+00> : vector<8x512xf32>
    %443 = tpu.matmul %442, %326, %cst_143 {dimension_numbers = #tpu.dot_dimension_numbers<[1], [0], [0], [1], [0, 0, 1, 1], [], []>} : vector<8x128xbf16>, vector<128x512xbf16>, vector<8x512xf32> -> vector<8x512xf32>
    %444 = arith.addf %441, %443 : vector<8x512xf32>
    %445 = vector.extract_strided_slice %444 {offsets = [0, 0], sizes = [8, 128], strides = [1, 1]} : vector<8x512xf32> to vector<8x128xf32>
    %446 = arith.negf %445 : vector<8x128xf32>
    %447 = math.exp %446 : vector<8x128xf32>
    %cst_144 = arith.constant 1.000000e+00 : f32
    %448 = vector.broadcast %cst_144 : f32 to vector<8x128xf32>
    %449 = arith.addf %448, %447 : vector<8x128xf32>
    %450 = arith.divf %448, %449 : vector<8x128xf32>
    %451 = vector.extract_strided_slice %444 {offsets = [0, 128], sizes = [8, 128], strides = [1, 1]} : vector<8x512xf32> to vector<8x128xf32>
    %452 = arith.negf %451 : vector<8x128xf32>
    %453 = math.exp %452 : vector<8x128xf32>
    %cst_145 = arith.constant 1.000000e+00 : f32
    %454 = vector.broadcast %cst_145 : f32 to vector<8x128xf32>
    %455 = arith.addf %454, %453 : vector<8x128xf32>
    %456 = arith.divf %454, %455 : vector<8x128xf32>
    %457 = vector.extract_strided_slice %444 {offsets = [0, 256], sizes = [8, 128], strides = [1, 1]} : vector<8x512xf32> to vector<8x128xf32>
    %458 = math.tanh %457 : vector<8x128xf32>
    %459 = vector.extract_strided_slice %444 {offsets = [0, 384], sizes = [8, 128], strides = [1, 1]} : vector<8x512xf32> to vector<8x128xf32>
    %460 = arith.negf %459 : vector<8x128xf32>
    %461 = math.exp %460 : vector<8x128xf32>
    %cst_146 = arith.constant 1.000000e+00 : f32
    %462 = vector.broadcast %cst_146 : f32 to vector<8x128xf32>
    %463 = arith.addf %462, %461 : vector<8x128xf32>
    %464 = arith.divf %462, %463 : vector<8x128xf32>
    %465 = arith.mulf %456, %431 : vector<8x128xf32>
    %466 = arith.mulf %450, %458 : vector<8x128xf32>
    %467 = arith.addf %465, %466 : vector<8x128xf32>
    %468 = math.tanh %467 : vector<8x128xf32>
    %469 = arith.mulf %464, %468 : vector<8x128xf32>
    %470 = arith.truncf %469 : vector<8x128xf32> to vector<8x128xbf16>
    %471 = arith.index_cast %c3_i32_140 : i32 to index
    %c0_147 = arith.constant 0 : index
    %c0_148 = arith.constant 0 : index
    %472 = vector.load %arg8[%471, %c0_147, %c0_148] : memref<8x8x128xbf16, #tpu.memory_space<vmem>>, vector<1x8x128xbf16>
    %473 = vector.shape_cast %472 : vector<1x8x128xbf16> to vector<8x128xbf16>
    %474 = vector.shape_cast %470 : vector<8x128xbf16> to vector<1x8x128xbf16>
    tpu.vector_store %arg8[%471, %c0_147, %c0_148], %474 {strides = array<i32>} : memref<8x8x128xbf16, #tpu.memory_space<vmem>>, vector<1x8x128xbf16>,
    %c4_i32_149 = arith.constant 4 : i32
    %475 = arith.index_cast %c4_i32_149 : i32 to index
    %c0_150 = arith.constant 0 : index
    %c0_151 = arith.constant 0 : index
    %476 = vector.load %arg11[%475, %c0_150, %c0_151] : memref<8x8x512xf32, #tpu.memory_space<vmem>>, vector<1x8x512xf32>
    %477 = vector.shape_cast %476 : vector<1x8x512xf32> to vector<8x512xf32>
    %478 = arith.truncf %469 : vector<8x128xf32> to vector<8x128xbf16>
    %cst_152 = arith.constant dense<0.000000e+00> : vector<8x512xf32>
    %479 = tpu.matmul %478, %326, %cst_152 {dimension_numbers = #tpu.dot_dimension_numbers<[1], [0], [0], [1], [0, 0, 1, 1], [], []>} : vector<8x128xbf16>, vector<128x512xbf16>, vector<8x512xf32> -> vector<8x512xf32>
    %480 = arith.addf %477, %479 : vector<8x512xf32>
    %481 = vector.extract_strided_slice %480 {offsets = [0, 0], sizes = [8, 128], strides = [1, 1]} : vector<8x512xf32> to vector<8x128xf32>
    %482 = arith.negf %481 : vector<8x128xf32>
    %483 = math.exp %482 : vector<8x128xf32>
    %cst_153 = arith.constant 1.000000e+00 : f32
    %484 = vector.broadcast %cst_153 : f32 to vector<8x128xf32>
    %485 = arith.addf %484, %483 : vector<8x128xf32>
    %486 = arith.divf %484, %485 : vector<8x128xf32>
    %487 = vector.extract_strided_slice %480 {offsets = [0, 128], sizes = [8, 128], strides = [1, 1]} : vector<8x512xf32> to vector<8x128xf32>
    %488 = arith.negf %487 : vector<8x128xf32>
    %489 = math.exp %488 : vector<8x128xf32>
    %cst_154 = arith.constant 1.000000e+00 : f32
    %490 = vector.broadcast %cst_154 : f32 to vector<8x128xf32>
    %491 = arith.addf %490, %489 : vector<8x128xf32>
    %492 = arith.divf %490, %491 : vector<8x128xf32>
    %493 = vector.extract_strided_slice %480 {offsets = [0, 256], sizes = [8, 128], strides = [1, 1]} : vector<8x512xf32> to vector<8x128xf32>
    %494 = math.tanh %493 : vector<8x128xf32>
    %495 = vector.extract_strided_slice %480 {offsets = [0, 384], sizes = [8, 128], strides = [1, 1]} : vector<8x512xf32> to vector<8x128xf32>
    %496 = arith.negf %495 : vector<8x128xf32>
    %497 = math.exp %496 : vector<8x128xf32>
    %cst_155 = arith.constant 1.000000e+00 : f32
    %498 = vector.broadcast %cst_155 : f32 to vector<8x128xf32>
    %499 = arith.addf %498, %497 : vector<8x128xf32>
    %500 = arith.divf %498, %499 : vector<8x128xf32>
    %501 = arith.mulf %492, %467 : vector<8x128xf32>
    %502 = arith.mulf %486, %494 : vector<8x128xf32>
    %503 = arith.addf %501, %502 : vector<8x128xf32>
    %504 = math.tanh %503 : vector<8x128xf32>
    %505 = arith.mulf %500, %504 : vector<8x128xf32>
    %506 = arith.truncf %505 : vector<8x128xf32> to vector<8x128xbf16>
    %507 = arith.index_cast %c4_i32_149 : i32 to index
    %c0_156 = arith.constant 0 : index
    %c0_157 = arith.constant 0 : index
    %508 = vector.load %arg8[%507, %c0_156, %c0_157] : memref<8x8x128xbf16, #tpu.memory_space<vmem>>, vector<1x8x128xbf16>
    %509 = vector.shape_cast %508 : vector<1x8x128xbf16> to vector<8x128xbf16>
    %510 = vector.shape_cast %506 : vector<8x128xbf16> to vector<1x8x128xbf16>
    tpu.vector_store %arg8[%507, %c0_156, %c0_157], %510 {strides = array<i32>} : memref<8x8x128xbf16, #tpu.memory_space<vmem>>, vector<1x8x128xbf16>,
    %c5_i32_158 = arith.constant 5 : i32
    %511 = arith.index_cast %c5_i32_158 : i32 to index
    %c0_159 = arith.constant 0 : index
    %c0_160 = arith.constant 0 : index
    %512 = vector.load %arg11[%511, %c0_159, %c0_160] : memref<8x8x512xf32, #tpu.memory_space<vmem>>, vector<1x8x512xf32>
    %513 = vector.shape_cast %512 : vector<1x8x512xf32> to vector<8x512xf32>
    %514 = arith.truncf %505 : vector<8x128xf32> to vector<8x128xbf16>
    %cst_161 = arith.constant dense<0.000000e+00> : vector<8x512xf32>
    %515 = tpu.matmul %514, %326, %cst_161 {dimension_numbers = #tpu.dot_dimension_numbers<[1], [0], [0], [1], [0, 0, 1, 1], [], []>} : vector<8x128xbf16>, vector<128x512xbf16>, vector<8x512xf32> -> vector<8x512xf32>
    %516 = arith.addf %513, %515 : vector<8x512xf32>
    %517 = vector.extract_strided_slice %516 {offsets = [0, 0], sizes = [8, 128], strides = [1, 1]} : vector<8x512xf32> to vector<8x128xf32>
    %518 = arith.negf %517 : vector<8x128xf32>
    %519 = math.exp %518 : vector<8x128xf32>
    %cst_162 = arith.constant 1.000000e+00 : f32
    %520 = vector.broadcast %cst_162 : f32 to vector<8x128xf32>
    %521 = arith.addf %520, %519 : vector<8x128xf32>
    %522 = arith.divf %520, %521 : vector<8x128xf32>
    %523 = vector.extract_strided_slice %516 {offsets = [0, 128], sizes = [8, 128], strides = [1, 1]} : vector<8x512xf32> to vector<8x128xf32>
    %524 = arith.negf %523 : vector<8x128xf32>
    %525 = math.exp %524 : vector<8x128xf32>
    %cst_163 = arith.constant 1.000000e+00 : f32
    %526 = vector.broadcast %cst_163 : f32 to vector<8x128xf32>
    %527 = arith.addf %526, %525 : vector<8x128xf32>
    %528 = arith.divf %526, %527 : vector<8x128xf32>
    %529 = vector.extract_strided_slice %516 {offsets = [0, 256], sizes = [8, 128], strides = [1, 1]} : vector<8x512xf32> to vector<8x128xf32>
    %530 = math.tanh %529 : vector<8x128xf32>
    %531 = vector.extract_strided_slice %516 {offsets = [0, 384], sizes = [8, 128], strides = [1, 1]} : vector<8x512xf32> to vector<8x128xf32>
    %532 = arith.negf %531 : vector<8x128xf32>
    %533 = math.exp %532 : vector<8x128xf32>
    %cst_164 = arith.constant 1.000000e+00 : f32
    %534 = vector.broadcast %cst_164 : f32 to vector<8x128xf32>
    %535 = arith.addf %534, %533 : vector<8x128xf32>
    %536 = arith.divf %534, %535 : vector<8x128xf32>
    %537 = arith.mulf %528, %503 : vector<8x128xf32>
    %538 = arith.mulf %522, %530 : vector<8x128xf32>
    %539 = arith.addf %537, %538 : vector<8x128xf32>
    %540 = math.tanh %539 : vector<8x128xf32>
    %541 = arith.mulf %536, %540 : vector<8x128xf32>
    %542 = arith.truncf %541 : vector<8x128xf32> to vector<8x128xbf16>
    %543 = arith.index_cast %c5_i32_158 : i32 to index
    %c0_165 = arith.constant 0 : index
    %c0_166 = arith.constant 0 : index
    %544 = vector.load %arg8[%543, %c0_165, %c0_166] : memref<8x8x128xbf16, #tpu.memory_space<vmem>>, vector<1x8x128xbf16>
    %545 = vector.shape_cast %544 : vector<1x8x128xbf16> to vector<8x128xbf16>
    %546 = vector.shape_cast %542 : vector<8x128xbf16> to vector<1x8x128xbf16>
    tpu.vector_store %arg8[%543, %c0_165, %c0_166], %546 {strides = array<i32>} : memref<8x8x128xbf16, #tpu.memory_space<vmem>>, vector<1x8x128xbf16>,
    %c6_i32_167 = arith.constant 6 : i32
    %547 = arith.index_cast %c6_i32_167 : i32 to index
    %c0_168 = arith.constant 0 : index
    %c0_169 = arith.constant 0 : index
    %548 = vector.load %arg11[%547, %c0_168, %c0_169] : memref<8x8x512xf32, #tpu.memory_space<vmem>>, vector<1x8x512xf32>
    %549 = vector.shape_cast %548 : vector<1x8x512xf32> to vector<8x512xf32>
    %550 = arith.truncf %541 : vector<8x128xf32> to vector<8x128xbf16>
    %cst_170 = arith.constant dense<0.000000e+00> : vector<8x512xf32>
    %551 = tpu.matmul %550, %326, %cst_170 {dimension_numbers = #tpu.dot_dimension_numbers<[1], [0], [0], [1], [0, 0, 1, 1], [], []>} : vector<8x128xbf16>, vector<128x512xbf16>, vector<8x512xf32> -> vector<8x512xf32>
    %552 = arith.addf %549, %551 : vector<8x512xf32>
    %553 = vector.extract_strided_slice %552 {offsets = [0, 0], sizes = [8, 128], strides = [1, 1]} : vector<8x512xf32> to vector<8x128xf32>
    %554 = arith.negf %553 : vector<8x128xf32>
    %555 = math.exp %554 : vector<8x128xf32>
    %cst_171 = arith.constant 1.000000e+00 : f32
    %556 = vector.broadcast %cst_171 : f32 to vector<8x128xf32>
    %557 = arith.addf %556, %555 : vector<8x128xf32>
    %558 = arith.divf %556, %557 : vector<8x128xf32>
    %559 = vector.extract_strided_slice %552 {offsets = [0, 128], sizes = [8, 128], strides = [1, 1]} : vector<8x512xf32> to vector<8x128xf32>
    %560 = arith.negf %559 : vector<8x128xf32>
    %561 = math.exp %560 : vector<8x128xf32>
    %cst_172 = arith.constant 1.000000e+00 : f32
    %562 = vector.broadcast %cst_172 : f32 to vector<8x128xf32>
    %563 = arith.addf %562, %561 : vector<8x128xf32>
    %564 = arith.divf %562, %563 : vector<8x128xf32>
    %565 = vector.extract_strided_slice %552 {offsets = [0, 256], sizes = [8, 128], strides = [1, 1]} : vector<8x512xf32> to vector<8x128xf32>
    %566 = math.tanh %565 : vector<8x128xf32>
    %567 = vector.extract_strided_slice %552 {offsets = [0, 384], sizes = [8, 128], strides = [1, 1]} : vector<8x512xf32> to vector<8x128xf32>
    %568 = arith.negf %567 : vector<8x128xf32>
    %569 = math.exp %568 : vector<8x128xf32>
    %cst_173 = arith.constant 1.000000e+00 : f32
    %570 = vector.broadcast %cst_173 : f32 to vector<8x128xf32>
    %571 = arith.addf %570, %569 : vector<8x128xf32>
    %572 = arith.divf %570, %571 : vector<8x128xf32>
    %573 = arith.mulf %564, %539 : vector<8x128xf32>
    %574 = arith.mulf %558, %566 : vector<8x128xf32>
    %575 = arith.addf %573, %574 : vector<8x128xf32>
    %576 = math.tanh %575 : vector<8x128xf32>
    %577 = arith.mulf %572, %576 : vector<8x128xf32>
    %578 = arith.truncf %577 : vector<8x128xf32> to vector<8x128xbf16>
    %579 = arith.index_cast %c6_i32_167 : i32 to index
    %c0_174 = arith.constant 0 : index
    %c0_175 = arith.constant 0 : index
    %580 = vector.load %arg8[%579, %c0_174, %c0_175] : memref<8x8x128xbf16, #tpu.memory_space<vmem>>, vector<1x8x128xbf16>
    %581 = vector.shape_cast %580 : vector<1x8x128xbf16> to vector<8x128xbf16>
    %582 = vector.shape_cast %578 : vector<8x128xbf16> to vector<1x8x128xbf16>
    tpu.vector_store %arg8[%579, %c0_174, %c0_175], %582 {strides = array<i32>} : memref<8x8x128xbf16, #tpu.memory_space<vmem>>, vector<1x8x128xbf16>,
    %c7_i32_176 = arith.constant 7 : i32
    %583 = arith.index_cast %c7_i32_176 : i32 to index
    %c0_177 = arith.constant 0 : index
    %c0_178 = arith.constant 0 : index
    %584 = vector.load %arg11[%583, %c0_177, %c0_178] : memref<8x8x512xf32, #tpu.memory_space<vmem>>, vector<1x8x512xf32>
    %585 = vector.shape_cast %584 : vector<1x8x512xf32> to vector<8x512xf32>
    %586 = arith.truncf %577 : vector<8x128xf32> to vector<8x128xbf16>
    %cst_179 = arith.constant dense<0.000000e+00> : vector<8x512xf32>
    %587 = tpu.matmul %586, %326, %cst_179 {dimension_numbers = #tpu.dot_dimension_numbers<[1], [0], [0], [1], [0, 0, 1, 1], [], []>} : vector<8x128xbf16>, vector<128x512xbf16>, vector<8x512xf32> -> vector<8x512xf32>
    %588 = arith.addf %585, %587 : vector<8x512xf32>
    %589 = vector.extract_strided_slice %588 {offsets = [0, 0], sizes = [8, 128], strides = [1, 1]} : vector<8x512xf32> to vector<8x128xf32>
    %590 = arith.negf %589 : vector<8x128xf32>
    %591 = math.exp %590 : vector<8x128xf32>
    %cst_180 = arith.constant 1.000000e+00 : f32
    %592 = vector.broadcast %cst_180 : f32 to vector<8x128xf32>
    %593 = arith.addf %592, %591 : vector<8x128xf32>
    %594 = arith.divf %592, %593 : vector<8x128xf32>
    %595 = vector.extract_strided_slice %588 {offsets = [0, 128], sizes = [8, 128], strides = [1, 1]} : vector<8x512xf32> to vector<8x128xf32>
    %596 = arith.negf %595 : vector<8x128xf32>
    %597 = math.exp %596 : vector<8x128xf32>
    %cst_181 = arith.constant 1.000000e+00 : f32
    %598 = vector.broadcast %cst_181 : f32 to vector<8x128xf32>
    %599 = arith.addf %598, %597 : vector<8x128xf32>
    %600 = arith.divf %598, %599 : vector<8x128xf32>
    %601 = vector.extract_strided_slice %588 {offsets = [0, 256], sizes = [8, 128], strides = [1, 1]} : vector<8x512xf32> to vector<8x128xf32>
    %602 = math.tanh %601 : vector<8x128xf32>
    %603 = vector.extract_strided_slice %588 {offsets = [0, 384], sizes = [8, 128], strides = [1, 1]} : vector<8x512xf32> to vector<8x128xf32>
    %604 = arith.negf %603 : vector<8x128xf32>
    %605 = math.exp %604 : vector<8x128xf32>
    %cst_182 = arith.constant 1.000000e+00 : f32
    %606 = vector.broadcast %cst_182 : f32 to vector<8x128xf32>
    %607 = arith.addf %606, %605 : vector<8x128xf32>
    %608 = arith.divf %606, %607 : vector<8x128xf32>
    %609 = arith.mulf %600, %575 : vector<8x128xf32>
    %610 = arith.mulf %594, %602 : vector<8x128xf32>
    %611 = arith.addf %609, %610 : vector<8x128xf32>
    %612 = math.tanh %611 : vector<8x128xf32>
    %613 = arith.mulf %608, %612 : vector<8x128xf32>
    %614 = arith.truncf %613 : vector<8x128xf32> to vector<8x128xbf16>
    %615 = arith.index_cast %c7_i32_176 : i32 to index
    %c0_183 = arith.constant 0 : index
    %c0_184 = arith.constant 0 : index
    %616 = vector.load %arg8[%615, %c0_183, %c0_184] : memref<8x8x128xbf16, #tpu.memory_space<vmem>>, vector<1x8x128xbf16>
    %617 = vector.shape_cast %616 : vector<1x8x128xbf16> to vector<8x128xbf16>
    %618 = vector.shape_cast %614 : vector<8x128xbf16> to vector<1x8x128xbf16>
    tpu.vector_store %arg8[%615, %c0_183, %c0_184], %618 {strides = array<i32>} : memref<8x8x128xbf16, #tpu.memory_space<vmem>>, vector<1x8x128xbf16>,
    %c8_i32_185 = arith.constant 8 : i32
    %c1_186 = arith.constant 1 : index
    %c0_187 = arith.constant 0 : index
    %c0_188 = arith.constant 0 : index
    %619 = vector.load %arg9[%c1_186, %c0_187, %c0_188] : memref<2x8x128xf32, #tpu.memory_space<vmem>>, vector<1x8x128xf32>
    %620 = vector.shape_cast %619 : vector<1x8x128xf32> to vector<8x128xf32>
    %621 = vector.shape_cast %613 : vector<8x128xf32> to vector<1x8x128xf32>
    tpu.vector_store %arg9[%c1_186, %c0_187, %c0_188], %621 {strides = array<i32>} : memref<2x8x128xf32, #tpu.memory_space<vmem>>, vector<1x8x128xf32>,
    %c1_189 = arith.constant 1 : index
    %c0_190 = arith.constant 0 : index
    %c0_191 = arith.constant 0 : index
    %622 = vector.load %arg10[%c1_189, %c0_190, %c0_191] : memref<2x8x128xf32, #tpu.memory_space<vmem>>, vector<1x8x128xf32>
    %623 = vector.shape_cast %622 : vector<1x8x128xf32> to vector<8x128xf32>
    %624 = vector.shape_cast %611 : vector<8x128xf32> to vector<1x8x128xf32>
    tpu.vector_store %arg10[%c1_189, %c0_190, %c0_191], %624 {strides = array<i32>} : memref<2x8x128xf32, #tpu.memory_space<vmem>>, vector<1x8x128xf32>,
    return
  }
  func.func @transform_0(%arg0: i32, %arg1: i32) -> (i32, i32, i32) {
    %c0_i32 = arith.constant 0 : i32
    %c0_i32_0 = arith.constant 0 : i32
    return %arg1, %arg0, %c0_i32 : i32, i32, i32
  }
  func.func @transform_1(%arg0: i32, %arg1: i32) -> (i32, i32, i32) {
    %c0_i32 = arith.constant 0 : i32
    %c0_i32_0 = arith.constant 0 : i32
    %c0_i32_1 = arith.constant 0 : i32
    %c0_i32_2 = arith.constant 0 : i32
    return %c0_i32, %c0_i32_0, %c0_i32_1 : i32, i32, i32
  }
  func.func @transform_2(%arg0: i32, %arg1: i32) -> (i32, i32, i32) {
    %c0_i32 = arith.constant 0 : i32
    %c0_i32_0 = arith.constant 0 : i32
    %c0_i32_1 = arith.constant 0 : i32
    %c0_i32_2 = arith.constant 0 : i32
    return %c0_i32, %c0_i32_0, %c0_i32_1 : i32, i32, i32
  }
  func.func @transform_3(%arg0: i32, %arg1: i32) -> (i32, i32, i32) {
    %c0_i32 = arith.constant 0 : i32
    %c0_i32_0 = arith.constant 0 : i32
    %c0_i32_1 = arith.constant 0 : i32
    %c0_i32_2 = arith.constant 0 : i32
    return %c0_i32, %c0_i32_0, %c0_i32_1 : i32, i32, i32
  }
  func.func @transform_4(%arg0: i32, %arg1: i32) -> (i32, i32, i32) {
    %c0_i32 = arith.constant 0 : i32
    %c0_i32_0 = arith.constant 0 : i32
    %c0_i32_1 = arith.constant 0 : i32
    return %c0_i32, %arg0, %c0_i32_0 : i32, i32, i32
  }
  func.func @transform_5(%arg0: i32, %arg1: i32) -> (i32, i32, i32) {
    %c0_i32 = arith.constant 0 : i32
    %c0_i32_0 = arith.constant 0 : i32
    %c0_i32_1 = arith.constant 0 : i32
    return %c0_i32, %arg0, %c0_i32_0 : i32, i32, i32
  }
  func.func @transform_6(%arg0: i32, %arg1: i32) -> (i32, i32, i32) {
    %c0_i32 = arith.constant 0 : i32
    %c0_i32_0 = arith.constant 0 : i32
    return %arg1, %arg0, %c0_i32 : i32, i32, i32
  }
  func.func @transform_7(%arg0: i32, %arg1: i32) -> (i32, i32, i32) {
    %c0_i32 = arith.constant 0 : i32
    %c0_i32_0 = arith.constant 0 : i32
    %c0_i32_1 = arith.constant 0 : i32
    return %c0_i32, %arg0, %c0_i32_0 : i32, i32, i32
  }
  func.func @transform_8(%arg0: i32, %arg1: i32) -> (i32, i32, i32) {
    %c0_i32 = arith.constant 0 : i32
    %c0_i32_0 = arith.constant 0 : i32
    %c0_i32_1 = arith.constant 0 : i32
    return %c0_i32, %arg0, %c0_i32_0 : i32, i32, i32
  }
}

</mosaic_0001>

<llo_original>
// kernel: tpu_custom_call.1
$region0: #{tpu_custom_call.1}
  #allocation0 [shape = 'u32[]', space=smem, size = 0x4, offset = 0x4, fixed_abs, tag = 'smem constant byte address 0x4 - core index']
  #allocation1 [shape = 'u32[144,128]{1,0:T(1,128)}', space=vmem, size = 0x12000, scoped, tag = 'internal scratch']
  #allocation2 [shape = 'f32[8,8,512]{2,1,0:T(8,128)}', space=vmem, size = 0x20000, scoped, tag = 'scratch operand']
  %s0 = inlined_call_operand.vmem [shape: bf16[8,8,128], index: 0, kind: input, shape index: {}]
  %s1 = inlined_call_operand.hbm [shape: bf16[2,128,512], index: 1, kind: input, shape index: {}]
  %s2 = inlined_call_operand.hbm [shape: bf16[2,128,512], index: 2, kind: input, shape index: {}]
  %s3 = inlined_call_operand.vmem [shape: f32[2,1,512], index: 3, kind: input, shape index: {}]
  %s4 = inlined_call_operand.hbm [shape: f32[2,8,128], index: 4, kind: input, shape index: {}, may-alias: {4,7}]
  %s5 = inlined_call_operand.hbm [shape: f32[2,8,128], index: 5, kind: input, shape index: {}, may-alias: {5,8}]
  %s6 = inlined_call_operand.hbm [shape: bf16[8,8,128], index: 6, kind: output, shape index: {0}]
  %s7 = inlined_call_operand.hbm [shape: f32[2,8,128], index: 7, kind: output, shape index: {1}, may-alias: {4,7}]
  %s8 = inlined_call_operand.hbm [shape: f32[2,8,128], index: 8, kind: output, shape index: {2}, may-alias: {5,8}]
  %9 = xla_tuple %s6, %s7, %s8
  %s10 = sld [smem:[#allocation0]]
  $region70: #{tpu_custom_call.1} parent=0
    _
  %s12 = ssub.s32 1, %s10
  %s13 = scalar_select 0, %s12, %s10
  $region1: #{tpu_custom_call.1} parent=0
    #allocation3 [shape = 'u8[262144]{0}', space=vmem, size = 0x40000, scoped, tag = 'input window, operand 1, single buffered']
    #allocation4 [shape = 's32[1]{0}', space=sflag, size = 0x4, scoped, tag = 'scoped memory for tpu_custom_call.1']
    #allocation5 [shape = 's32[1]{0}', space=sflag, size = 0x4, scoped, tag = 'scoped memory for tpu_custom_call.1']
    #allocation6 [shape = 'u8[262144]{0}', space=vmem, size = 0x40000, scoped, tag = 'input window, operand 2, single buffered']
    #allocation7 [shape = 's32[1]{0}', space=sflag, size = 0x4, scoped, tag = 'scoped memory for tpu_custom_call.1']
    #allocation8 [shape = 'u8[8192]{0}', space=vmem, size = 0x2000, scoped, tag = 'input window, operand 4, single buffered']
    #allocation9 [shape = 'u8[8192]{0}', space=vmem, size = 0x2000, scoped, tag = 'input window, operand 5, single buffered']
    #allocation10 [shape = 's32[1]{0}', space=sflag, size = 0x4, scoped, tag = 'scoped memory for tpu_custom_call.1']
    #allocation11 [shape = 'u8[16384]{0}', space=vmem, size = 0x4000, scoped, tag = 'output window, operand 0, single buffered']
    #allocation12 [shape = 'u8[8192]{0}', space=vmem, size = 0x2000, scoped, tag = 'output window, operand 1, single buffered']
    #allocation13 [shape = 's32[1]{0}', space=sflag, size = 0x4, scoped, tag = 'scoped memory for tpu_custom_call.1']
    #allocation14 [shape = 'u8[8192]{0}', space=vmem, size = 0x2000, scoped, tag = 'output window, operand 2, single buffered']
    %14 = vsyncpa [#allocation4], 0
    %15 = vsyncpa [#allocation7], 0
    %16 = vsyncpa [#allocation10], 0
    %17 = vsyncpa [#allocation5], 0
    %18 = vsyncpa [#allocation13], 0
    // Predicated region
    $region2: #{tpu_custom_call.1} parent=1 // pred_check
      _
    $region3: #{tpu_custom_call.1} parent=1 // pred_check_branch
      %20 = sbr.rel (0) target = $region5
    $region4: #{tpu_custom_call.1} parent=1 // pred_region
      _
    $region5: #{tpu_custom_call.1} parent=1 // pred_fallthru
      _
    // Predicated region
    $region6: #{tpu_custom_call.1} parent=1 // pred_check
      _
    $region7: #{tpu_custom_call.1} parent=1 // pred_check_branch
      %22 = sbr.rel (0) target = $region9
    $region8: #{tpu_custom_call.1} parent=1 // pred_region
      %s24 = ssub.s32 8192, 8192
      %25 = vsyncadd [#allocation4], %s24
      %s26 = sshll.u32 [#allocation3], 4
      %s27 = int_to_ptr.vmem [resolvable:$true] %s26
      %32 = dma.hbm_to_vmem [thread:$0]  %s1, 8192, %s27, [#allocation4], 256, 256, 16
    $region9: #{tpu_custom_call.1} parent=1 // pred_fallthru
      _
    // Predicated region
    $region10: #{tpu_custom_call.1} parent=1 // pred_check
      _
    $region11: #{tpu_custom_call.1} parent=1 // pred_check_branch
      %34 = sbr.rel (0) target = $region13
    $region12: #{tpu_custom_call.1} parent=1 // pred_region
      %s36 = ssub.s32 8192, 8192
      %37 = vsyncadd [#allocation7], %s36
      %s38 = sshll.u32 [#allocation6], 4
      %s39 = int_to_ptr.vmem [resolvable:$true] %s38
      %44 = dma.hbm_to_vmem [thread:$0]  %s2, 8192, %s39, [#allocation7], 256, 256, 16
    $region13: #{tpu_custom_call.1} parent=1 // pred_fallthru
      _
    // Predicated region
    $region14: #{tpu_custom_call.1} parent=1 // pred_check
      _
    $region15: #{tpu_custom_call.1} parent=1 // pred_check_branch
      %46 = sbr.rel (0) target = $region17
    $region16: #{tpu_custom_call.1} parent=1 // pred_region
      _
    $region17: #{tpu_custom_call.1} parent=1 // pred_fallthru
      _
    // Predicated region
    $region18: #{tpu_custom_call.1} parent=1 // pred_check
      _
    $region19: #{tpu_custom_call.1} parent=1 // pred_check_branch
      %48 = sbr.rel (0) target = $region21
    $region20: #{tpu_custom_call.1} parent=1 // pred_region
      %s50 = ssub.s32 256, 256
      %51 = vsyncadd [#allocation7], %s50
      %s52 = sshll.u32 [#allocation8], 4
      %s53 = int_to_ptr.vmem [resolvable:$true] %s52
      %58 = dma.hbm_to_vmem [thread:$0]  %s4, 256, %s53, [#allocation7], 128, 128, 8
    $region21: #{tpu_custom_call.1} parent=1 // pred_fallthru
      _
    // Predicated region
    $region22: #{tpu_custom_call.1} parent=1 // pred_check
      _
    $region23: #{tpu_custom_call.1} parent=1 // pred_check_branch
      %60 = sbr.rel (0) target = $region25
    $region24: #{tpu_custom_call.1} parent=1 // pred_region
      %s62 = ssub.s32 256, 256
      %63 = vsyncadd [#allocation10], %s62
      %s64 = sshll.u32 [#allocation9], 4
      %s65 = int_to_ptr.vmem [resolvable:$true] %s64
      %70 = dma.hbm_to_vmem [thread:$0]  %s5, 256, %s65, [#allocation10], 128, 128, 8
    $region25: #{tpu_custom_call.1} parent=1 // pred_fallthru
      _
    // Predicated region
    $region26: #{tpu_custom_call.1} parent=1 // pred_check
      _
    $region27: #{tpu_custom_call.1} parent=1 // pred_check_branch
      %72 = sbr.rel (0) target = $region29
    $region28: #{tpu_custom_call.1} parent=1 // pred_region
      %73 = dma.done [#allocation4], 8192
    $region29: #{tpu_custom_call.1} parent=1 // pred_fallthru
      _
    // Predicated region
    $region30: #{tpu_custom_call.1} parent=1 // pred_check
      _
    $region31: #{tpu_custom_call.1} parent=1 // pred_check_branch
      %75 = sbr.rel (0) target = $region33
    $region32: #{tpu_custom_call.1} parent=1 // pred_region
      %76 = dma.done [#allocation7], 8192
    $region33: #{tpu_custom_call.1} parent=1 // pred_fallthru
      _
    // Predicated region
    $region34: #{tpu_custom_call.1} parent=1 // pred_check
      _
    $region35: #{tpu_custom_call.1} parent=1 // pred_check_branch
      %78 = sbr.rel (0) target = $region37
    $region36: #{tpu_custom_call.1} parent=1 // pred_region
      %79 = dma.done [#allocation7], 256
    $region37: #{tpu_custom_call.1} parent=1 // pred_fallthru
      _
    // Predicated region
    $region38: #{tpu_custom_call.1} parent=1 // pred_check
      _
    $region39: #{tpu_custom_call.1} parent=1 // pred_check_branch
      %81 = sbr.rel (0) target = $region41
    $region40: #{tpu_custom_call.1} parent=1 // pred_region
      %82 = dma.done [#allocation10], 256
    $region41: #{tpu_custom_call.1} parent=1 // pred_fallthru
      _
    %p84 = scmp.eq.s32.totalorder 0, 0
    // Predicated region
    $region42: #{tpu_custom_call.1} parent=1 // pred_check
      %p85 = pneg %p84
    $region43: #{tpu_custom_call.1} parent=1 // pred_check_branch
      %87 = sbr.rel (%p85) target = $region45
    $region44: #{tpu_custom_call.1} parent=1 // pred_region
      %v88 = vld [vmem:[#allocation8] sm:$0xff]
      %v89 = vld [vmem:[#allocation8 + $0x8] sm:$0xff]
      %90 = vst [vmem:[#allocation12] sm:$0xff] %v88
      %91 = vst [vmem:[#allocation12 + $0x8] sm:$0xff] %v89
      %v92 = vld [vmem:[#allocation9] sm:$0xff]
      %v93 = vld [vmem:[#allocation9 + $0x8] sm:$0xff]
      %94 = vst [vmem:[#allocation14] sm:$0xff] %v92
      %95 = vst [vmem:[#allocation14 + $0x8] sm:$0xff] %v93
    $region45: #{tpu_custom_call.1} parent=1 // pred_fallthru
      _
    %v96 = vld [vmem:[%s0] sm:$0xf]
    %v97 = vld [vmem:[%s0 + $0x4] sm:$0xf]
    %v98 = vld [vmem:[%s0 + $0x8] sm:$0xf]
    %v99 = vld [vmem:[%s0 + $0xc] sm:$0xf]
    %v100 = vld [vmem:[%s0 + $0x10] sm:$0xf]
    %v101 = vld [vmem:[%s0 + $0x14] sm:$0xf]
    %v102 = vld [vmem:[%s0 + $0x18] sm:$0xf]
    %v103 = vld [vmem:[%s0 + $0x1c] sm:$0xf]
    %v104 = vld [vmem:[#allocation3] sm:$0xff]
    %v105 = vld [vmem:[#allocation3 + $0x8] sm:$0xff]
    %v106 = vld [vmem:[#allocation3 + $0x10] sm:$0xff]
    %v107 = vld [vmem:[#allocation3 + $0x18] sm:$0xff]
    %v108 = vld [vmem:[#allocation3 + $0x20] sm:$0xff]
    %v109 = vld [vmem:[#allocation3 + $0x28] sm:$0xff]
    %v110 = vld [vmem:[#allocation3 + $0x30] sm:$0xff]
    %v111 = vld [vmem:[#allocation3 + $0x38] sm:$0xff]
    %v112 = vld [vmem:[#allocation3 + $0x40] sm:$0xff]
    %v113 = vld [vmem:[#allocation3 + $0x48] sm:$0xff]
    %v114 = vld [vmem:[#allocation3 + $0x50] sm:$0xff]
    %v115 = vld [vmem:[#allocation3 + $0x58] sm:$0xff]
    %v116 = vld [vmem:[#allocation3 + $0x60] sm:$0xff]
    %v117 = vld [vmem:[#allocation3 + $0x68] sm:$0xff]
    %v118 = vld [vmem:[#allocation3 + $0x70] sm:$0xff]
    %v119 = vld [vmem:[#allocation3 + $0x78] sm:$0xff]
    %v120 = vld [vmem:[#allocation3 + $0x80] sm:$0xff]
    %v121 = vld [vmem:[#allocation3 + $0x88] sm:$0xff]
    %v122 = vld [vmem:[#allocation3 + $0x90] sm:$0xff]
    %v123 = vld [vmem:[#allocation3 + $0x98] sm:$0xff]
    %v124 = vld [vmem:[#allocation3 + $0xa0] sm:$0xff]
    %v125 = vld [vmem:[#allocation3 + $0xa8] sm:$0xff]
    %v126 = vld [vmem:[#allocation3 + $0xb0] sm:$0xff]
    %v127 = vld [vmem:[#allocation3 + $0xb8] sm:$0xff]
    %v128 = vld [vmem:[#allocation3 + $0xc0] sm:$0xff]
    %v129 = vld [vmem:[#allocation3 + $0xc8] sm:$0xff]
    %v130 = vld [vmem:[#allocation3 + $0xd0] sm:$0xff]
    %v131 = vld [vmem:[#allocation3 + $0xd8] sm:$0xff]
    %v132 = vld [vmem:[#allocation3 + $0xe0] sm:$0xff]
    %v133 = vld [vmem:[#allocation3 + $0xe8] sm:$0xff]
    %v134 = vld [vmem:[#allocation3 + $0xf0] sm:$0xff]
    %v135 = vld [vmem:[#allocation3 + $0xf8] sm:$0xff]
    %v136 = vld [vmem:[%s3] sm:$0xf]
    %v138 = vlaneseq
    %v139 = vshrl.u32 %v138, 7
    %v140 = vsub.s32 0, %v139
    %v141 = vrot.slane %v136, %v140
    %v142 = vlaneseq
    %v143 = vshrl.u32 %v142, 7
    %v144 = vsub.s32 1, %v143
    %v145 = vrot.slane %v136, %v144
    %v146 = vlaneseq
    %v147 = vshrl.u32 %v146, 7
    %v148 = vsub.s32 2, %v147
    %v149 = vrot.slane %v136, %v148
    %v150 = vlaneseq
    %v151 = vshrl.u32 %v150, 7
    %v152 = vsub.s32 3, %v151
    %v153 = vrot.slane %v136, %v152
    %v166 = vunpack.c.l.b16 %v96
    %v167 = vunpack.c.l.b16 %v97
    %v168 = vunpack.c.l.b16 %v98
    %v169 = vunpack.c.l.b16 %v99
    %v170 = vunpack.c.l.b16 %v100
    %v171 = vunpack.c.l.b16 %v101
    %v172 = vunpack.c.l.b16 %v102
    %v173 = vunpack.c.l.b16 %v103
    %v174 = vpack.c.b16 %v167, %v166
    %v175 = vpack.c.b16 %v169, %v168
    %v176 = vpack.c.b16 %v171, %v170
    %v177 = vpack.c.b16 %v173, %v172
    %v214 = vunpack.c.l.b16 %v104
    %v215 = vunpack.c.h.b16 %v104
    %v216 = vunpack.c.l.b16 %v105
    %v217 = vunpack.c.h.b16 %v105
    %v218 = vunpack.c.l.b16 %v106
    %v219 = vunpack.c.h.b16 %v106
    %v220 = vunpack.c.l.b16 %v107
    %v221 = vunpack.c.h.b16 %v107
    %v222 = vunpack.c.l.b16 %v108
    %v223 = vunpack.c.h.b16 %v108
    %v224 = vunpack.c.l.b16 %v109
    %v225 = vunpack.c.h.b16 %v109
    %v226 = vunpack.c.l.b16 %v110
    %v227 = vunpack.c.h.b16 %v110
    %v228 = vunpack.c.l.b16 %v111
    %v229 = vunpack.c.h.b16 %v111
    %v230 = vunpack.c.l.b16 %v112
    %v231 = vunpack.c.h.b16 %v112
    %v232 = vunpack.c.l.b16 %v113
    %v233 = vunpack.c.h.b16 %v113
    %v234 = vunpack.c.l.b16 %v114
    %v235 = vunpack.c.h.b16 %v114
    %v236 = vunpack.c.l.b16 %v115
    %v237 = vunpack.c.h.b16 %v115
    %v238 = vunpack.c.l.b16 %v116
    %v239 = vunpack.c.h.b16 %v116
    %v240 = vunpack.c.l.b16 %v117
    %v241 = vunpack.c.h.b16 %v117
    %v242 = vunpack.c.l.b16 %v118
    %v243 = vunpack.c.h.b16 %v118
    %v244 = vunpack.c.l.b16 %v119
    %v245 = vunpack.c.h.b16 %v119
    %v246 = vunpack.c.l.b16 %v120
    %v247 = vunpack.c.h.b16 %v120
    %v248 = vunpack.c.l.b16 %v121
    %v249 = vunpack.c.h.b16 %v121
    %v250 = vunpack.c.l.b16 %v122
    %v251 = vunpack.c.h.b16 %v122
    %v252 = vunpack.c.l.b16 %v123
    %v253 = vunpack.c.h.b16 %v123
    %v254 = vunpack.c.l.b16 %v124
    %v255 = vunpack.c.h.b16 %v124
    %v256 = vunpack.c.l.b16 %v125
    %v257 = vunpack.c.h.b16 %v125
    %v258 = vunpack.c.l.b16 %v126
    %v259 = vunpack.c.h.b16 %v126
    %v260 = vunpack.c.l.b16 %v127
    %v261 = vunpack.c.h.b16 %v127
    %v262 = vunpack.c.l.b16 %v128
    %v263 = vunpack.c.h.b16 %v128
    %v264 = vunpack.c.l.b16 %v129
    %v265 = vunpack.c.h.b16 %v129
    %v266 = vunpack.c.l.b16 %v130
    %v267 = vunpack.c.h.b16 %v130
    %v268 = vunpack.c.l.b16 %v131
    %v269 = vunpack.c.h.b16 %v131
    %v270 = vunpack.c.l.b16 %v132
    %v271 = vunpack.c.h.b16 %v132
    %v272 = vunpack.c.l.b16 %v133
    %v273 = vunpack.c.h.b16 %v133
    %v274 = vunpack.c.l.b16 %v134
    %v275 = vunpack.c.h.b16 %v134
    %v276 = vunpack.c.l.b16 %v135
    %v277 = vunpack.c.h.b16 %v135
    %v278 = vpack.c.b16 %v218, %v214
    %v279 = vpack.c.b16 %v219, %v215
    %v280 = vpack.c.b16 %v220, %v216
    %v281 = vpack.c.b16 %v221, %v217
    %v282 = vpack.c.b16 %v226, %v222
    %v283 = vpack.c.b16 %v227, %v223
    %v284 = vpack.c.b16 %v228, %v224
    %v285 = vpack.c.b16 %v229, %v225
    %v286 = vpack.c.b16 %v234, %v230
    %v287 = vpack.c.b16 %v235, %v231
    %v288 = vpack.c.b16 %v236, %v232
    %v289 = vpack.c.b16 %v237, %v233
    %v290 = vpack.c.b16 %v242, %v238
    %v291 = vpack.c.b16 %v243, %v239
    %v292 = vpack.c.b16 %v244, %v240
    %v293 = vpack.c.b16 %v245, %v241
    %v294 = vpack.c.b16 %v250, %v246
    %v295 = vpack.c.b16 %v251, %v247
    %v296 = vpack.c.b16 %v252, %v248
    %v297 = vpack.c.b16 %v253, %v249
    %v298 = vpack.c.b16 %v258, %v254
    %v299 = vpack.c.b16 %v259, %v255
    %v300 = vpack.c.b16 %v260, %v256
    %v301 = vpack.c.b16 %v261, %v257
    %v302 = vpack.c.b16 %v266, %v262
    %v303 = vpack.c.b16 %v267, %v263
    %v304 = vpack.c.b16 %v268, %v264
    %v305 = vpack.c.b16 %v269, %v265
    %v306 = vpack.c.b16 %v274, %v270
    %v307 = vpack.c.b16 %v275, %v271
    %v308 = vpack.c.b16 %v276, %v272
    %v309 = vpack.c.b16 %v277, %v273
    %342 = vmatprep.subr.bf16.mxu0 %v279
    %343 = vmatpush1.bf16.msra.mxu0 %v278
    %344 = vmatprep.subr.bf16.mxu0 %v283
    %345 = vmatpush1.bf16.msra.mxu0 %v282
    %346 = vmatprep.subr.bf16.mxu0 %v287
    %347 = vmatpush1.bf16.msra.mxu0 %v286
    %348 = vmatprep.subr.bf16.mxu0 %v291
    %349 = vmatpush1.bf16.msra.mxu0 %v290
    %350 = vmatprep.subr.bf16.mxu0 %v295
    %351 = vmatpush1.bf16.msra.mxu0 %v294
    %352 = vmatprep.subr.bf16.mxu0 %v299
    %353 = vmatpush1.bf16.msra.mxu0 %v298
    %354 = vmatprep.subr.bf16.mxu0 %v303
    %355 = vmatpush1.bf16.msra.mxu0 %v302
    %356 = vmatprep.subr.bf16.mxu0 %v307
    %357 = vmatpush1.bf16.msra.mxu0 %v306
    %358 = vmatprep.subr.bf16.mxu0 0
    %359 = vmatpush1.bf16.msra.mxu0 0
    %360 = vmatprep.subr.bf16.mxu0 0
    %361 = vmatpush1.bf16.msra.mxu0 0
    %362 = vmatprep.subr.bf16.mxu0 0
    %363 = vmatpush1.bf16.msra.mxu0 0
    %364 = vmatprep.subr.bf16.mxu0 0
    %365 = vmatpush1.bf16.msra.mxu0 0
    %366 = vmatprep.subr.bf16.mxu0 0
    %367 = vmatpush1.bf16.msra.mxu0 0
    %368 = vmatprep.subr.bf16.mxu0 0
    %369 = vmatpush1.bf16.msra.mxu0 0
    %370 = vmatprep.subr.bf16.mxu0 0
    %371 = vmatpush1.bf16.msra.mxu0 0
    %372 = vmatprep.subr.bf16.mxu0 0
    %373 = vmatpush1.bf16.msra.mxu0 0
    %374 = vmatprep.mubr.bf16.mxu0 0
    %375 = vmatmul.mubr.bf16.gmra.mrb[0].mxu0 %v174
    %v376 = vpop.f32.mrb[0].mxu0
    %v377 = vadd.f32 %v141, %v376
    %v378 = vpop.f32.mrb[0].mxu0
    %v379 = vadd.f32 %v145, %v378
    %v380 = vpop.f32.mrb[0].mxu0
    %v381 = vadd.f32 %v141, %v380
    %v382 = vpop.f32.mrb[0].mxu0
    %v383 = vadd.f32 %v145, %v382
    %384 = vmatprep.mubr.bf16.mxu0 0
    %385 = vmatmul.mubr.bf16.gmra.mrb[0].mxu0 %v175
    %v386 = vpop.f32.mrb[0].mxu0
    %v387 = vadd.f32 %v141, %v386
    %v388 = vpop.f32.mrb[0].mxu0
    %v389 = vadd.f32 %v145, %v388
    %v390 = vpop.f32.mrb[0].mxu0
    %v391 = vadd.f32 %v141, %v390
    %v392 = vpop.f32.mrb[0].mxu0
    %v393 = vadd.f32 %v145, %v392
    %394 = vmatprep.mubr.bf16.mxu0 0
    %395 = vmatmul.mubr.bf16.gmra.mrb[0].mxu0 %v176
    %v396 = vpop.f32.mrb[0].mxu0
    %v397 = vadd.f32 %v141, %v396
    %v398 = vpop.f32.mrb[0].mxu0
    %v399 = vadd.f32 %v145, %v398
    %v400 = vpop.f32.mrb[0].mxu0
    %v401 = vadd.f32 %v141, %v400
    %v402 = vpop.f32.mrb[0].mxu0
    %v403 = vadd.f32 %v145, %v402
    %404 = vmatprep.mubr.bf16.mxu0 0
    %405 = vmatmul.mubr.bf16.gmra.mrb[0].mxu0 %v177
    %v406 = vpop.f32.mrb[0].mxu0
    %v407 = vadd.f32 %v141, %v406
    %v408 = vpop.f32.mrb[0].mxu0
    %v409 = vadd.f32 %v145, %v408
    %v410 = vpop.f32.mrb[0].mxu0
    %v411 = vadd.f32 %v141, %v410
    %v412 = vpop.f32.mrb[0].mxu0
    %v413 = vadd.f32 %v145, %v412
    %414 = vdwg.mxu0
    %415 = vmatprep.subr.bf16.mxu0 %v281
    %416 = vmatpush1.bf16.msra.mxu0 %v280
    %417 = vmatprep.subr.bf16.mxu0 %v285
    %418 = vmatpush1.bf16.msra.mxu0 %v284
    %419 = vmatprep.subr.bf16.mxu0 %v289
    %420 = vmatpush1.bf16.msra.mxu0 %v288
    %421 = vmatprep.subr.bf16.mxu0 %v293
    %422 = vmatpush1.bf16.msra.mxu0 %v292
    %423 = vmatprep.subr.bf16.mxu0 %v297
    %424 = vmatpush1.bf16.msra.mxu0 %v296
    %425 = vmatprep.subr.bf16.mxu0 %v301
    %426 = vmatpush1.bf16.msra.mxu0 %v300
    %427 = vmatprep.subr.bf16.mxu0 %v305
    %428 = vmatpush1.bf16.msra.mxu0 %v304
    %429 = vmatprep.subr.bf16.mxu0 %v309
    %430 = vmatpush1.bf16.msra.mxu0 %v308
    %431 = vmatprep.subr.bf16.mxu0 0
    %432 = vmatpush1.bf16.msra.mxu0 0
    %433 = vmatprep.subr.bf16.mxu0 0
    %434 = vmatpush1.bf16.msra.mxu0 0
    %435 = vmatprep.subr.bf16.mxu0 0
    %436 = vmatpush1.bf16.msra.mxu0 0
    %437 = vmatprep.subr.bf16.mxu0 0
    %438 = vmatpush1.bf16.msra.mxu0 0
    %439 = vmatprep.subr.bf16.mxu0 0
    %440 = vmatpush1.bf16.msra.mxu0 0
    %441 = vmatprep.subr.bf16.mxu0 0
    %442 = vmatpush1.bf16.msra.mxu0 0
    %443 = vmatprep.subr.bf16.mxu0 0
    %444 = vmatpush1.bf16.msra.mxu0 0
    %445 = vmatprep.subr.bf16.mxu0 0
    %446 = vmatpush1.bf16.msra.mxu0 0
    %447 = vmatprep.mubr.bf16.mxu0 0
    %448 = vmatmul.mubr.bf16.gmra.mrb[0].mxu0 %v174
    %v449 = vpop.f32.mrb[0].mxu0
    %v450 = vadd.f32 %v149, %v449
    %v451 = vpop.f32.mrb[0].mxu0
    %v452 = vadd.f32 %v153, %v451
    %v453 = vpop.f32.mrb[0].mxu0
    %v454 = vadd.f32 %v149, %v453
    %v455 = vpop.f32.mrb[0].mxu0
    %v456 = vadd.f32 %v153, %v455
    %457 = vmatprep.mubr.bf16.mxu0 0
    %458 = vmatmul.mubr.bf16.gmra.mrb[0].mxu0 %v175
    %v459 = vpop.f32.mrb[0].mxu0
    %v460 = vadd.f32 %v149, %v459
    %v461 = vpop.f32.mrb[0].mxu0
    %v462 = vadd.f32 %v153, %v461
    %v463 = vpop.f32.mrb[0].mxu0
    %v464 = vadd.f32 %v149, %v463
    %v465 = vpop.f32.mrb[0].mxu0
    %v466 = vadd.f32 %v153, %v465
    %467 = vmatprep.mubr.bf16.mxu0 0
    %468 = vmatmul.mubr.bf16.gmra.mrb[0].mxu0 %v176
    %v469 = vpop.f32.mrb[0].mxu0
    %v470 = vadd.f32 %v149, %v469
    %v471 = vpop.f32.mrb[0].mxu0
    %v472 = vadd.f32 %v153, %v471
    %v473 = vpop.f32.mrb[0].mxu0
    %v474 = vadd.f32 %v149, %v473
    %v475 = vpop.f32.mrb[0].mxu0
    %v476 = vadd.f32 %v153, %v475
    %477 = vmatprep.mubr.bf16.mxu0 0
    %478 = vmatmul.mubr.bf16.gmra.mrb[0].mxu0 %v177
    %v479 = vpop.f32.mrb[0].mxu0
    %v480 = vadd.f32 %v149, %v479
    %v481 = vpop.f32.mrb[0].mxu0
    %v482 = vadd.f32 %v153, %v481
    %v483 = vpop.f32.mrb[0].mxu0
    %v484 = vadd.f32 %v149, %v483
    %v485 = vpop.f32.mrb[0].mxu0
    %v486 = vadd.f32 %v153, %v485
    %487 = vdwg.mxu0
    %488 = vst [vmem:[#allocation2] sm:$0xff] %v377
    %489 = vst [vmem:[#allocation2 + $0x8] sm:$0xff] %v379
    %490 = vst [vmem:[#allocation2 + $0x10] sm:$0xff] %v450
    %491 = vst [vmem:[#allocation2 + $0x18] sm:$0xff] %v452
    %492 = vst [vmem:[#allocation2 + $0x20] sm:$0xff] %v381
    %493 = vst [vmem:[#allocation2 + $0x28] sm:$0xff] %v383
    %494 = vst [vmem:[#allocation2 + $0x30] sm:$0xff] %v454
    %495 = vst [vmem:[#allocation2 + $0x38] sm:$0xff] %v456
    %496 = vst [vmem:[#allocation2 + $0x40] sm:$0xff] %v387
    %497 = vst [vmem:[#allocation2 + $0x48] sm:$0xff] %v389
    %498 = vst [vmem:[#allocation2 + $0x50] sm:$0xff] %v460
    %499 = vst [vmem:[#allocation2 + $0x58] sm:$0xff] %v462
    %500 = vst [vmem:[#allocation2 + $0x60] sm:$0xff] %v391
    %501 = vst [vmem:[#allocation2 + $0x68] sm:$0xff] %v393
    %502 = vst [vmem:[#allocation2 + $0x70] sm:$0xff] %v464
    %503 = vst [vmem:[#allocation2 + $0x78] sm:$0xff] %v466
    %504 = vst [vmem:[#allocation2 + $0x80] sm:$0xff] %v397
    %505 = vst [vmem:[#allocation2 + $0x88] sm:$0xff] %v399
    %506 = vst [vmem:[#allocation2 + $0x90] sm:$0xff] %v470
    %507 = vst [vmem:[#allocation2 + $0x98] sm:$0xff] %v472
    %508 = vst [vmem:[#allocation2 + $0xa0] sm:$0xff] %v401
    %509 = vst [vmem:[#allocation2 + $0xa8] sm:$0xff] %v403
    %510 = vst [vmem:[#allocation2 + $0xb0] sm:$0xff] %v474
    %511 = vst [vmem:[#allocation2 + $0xb8] sm:$0xff] %v476
    %512 = vst [vmem:[#allocation2 + $0xc0] sm:$0xff] %v407
    %513 = vst [vmem:[#allocation2 + $0xc8] sm:$0xff] %v409
    %514 = vst [vmem:[#allocation2 + $0xd0] sm:$0xff] %v480
    %515 = vst [vmem:[#allocation2 + $0xd8] sm:$0xff] %v482
    %516 = vst [vmem:[#allocation2 + $0xe0] sm:$0xff] %v411
    %517 = vst [vmem:[#allocation2 + $0xe8] sm:$0xff] %v413
    %518 = vst [vmem:[#allocation2 + $0xf0] sm:$0xff] %v484
    %519 = vst [vmem:[#allocation2 + $0xf8] sm:$0xff] %v486
    %v520 = vld [vmem:[#allocation6] sm:$0xff]
    %v521 = vld [vmem:[#allocation6 + $0x8] sm:$0xff]
    %v522 = vld [vmem:[#allocation6 + $0x10] sm:$0xff]
    %v523 = vld [vmem:[#allocation6 + $0x18] sm:$0xff]
    %v524 = vld [vmem:[#allocation6 + $0x20] sm:$0xff]
    %v525 = vld [vmem:[#allocation6 + $0x28] sm:$0xff]
    %v526 = vld [vmem:[#allocation6 + $0x30] sm:$0xff]
    %v527 = vld [vmem:[#allocation6 + $0x38] sm:$0xff]
    %v528 = vld [vmem:[#allocation6 + $0x40] sm:$0xff]
    %v529 = vld [vmem:[#allocation6 + $0x48] sm:$0xff]
    %v530 = vld [vmem:[#allocation6 + $0x50] sm:$0xff]
    %v531 = vld [vmem:[#allocation6 + $0x58] sm:$0xff]
    %v532 = vld [vmem:[#allocation6 + $0x60] sm:$0xff]
    %v533 = vld [vmem:[#allocation6 + $0x68] sm:$0xff]
    %v534 = vld [vmem:[#allocation6 + $0x70] sm:$0xff]
    %v535 = vld [vmem:[#allocation6 + $0x78] sm:$0xff]
    %v536 = vld [vmem:[#allocation6 + $0x80] sm:$0xff]
    %v537 = vld [vmem:[#allocation6 + $0x88] sm:$0xff]
    %v538 = vld [vmem:[#allocation6 + $0x90] sm:$0xff]
    %v539 = vld [vmem:[#allocation6 + $0x98] sm:$0xff]
    %v540 = vld [vmem:[#allocation6 + $0xa0] sm:$0xff]
    %v541 = vld [vmem:[#allocation6 + $0xa8] sm:$0xff]
    %v542 = vld [vmem:[#allocation6 + $0xb0] sm:$0xff]
    %v543 = vld [vmem:[#allocation6 + $0xb8] sm:$0xff]
    %v544 = vld [vmem:[#allocation6 + $0xc0] sm:$0xff]
    %v545 = vld [vmem:[#allocation6 + $0xc8] sm:$0xff]
    %v546 = vld [vmem:[#allocation6 + $0xd0] sm:$0xff]
    %v547 = vld [vmem:[#allocation6 + $0xd8] sm:$0xff]
    %v548 = vld [vmem:[#allocation6 + $0xe0] sm:$0xff]
    %v549 = vld [vmem:[#allocation6 + $0xe8] sm:$0xff]
    %v550 = vld [vmem:[#allocation6 + $0xf0] sm:$0xff]
    %v551 = vld [vmem:[#allocation6 + $0xf8] sm:$0xff]
    %v552 = vld [vmem:[#allocation12] sm:$0xff]
    %v553 = vld [vmem:[#allocation14] sm:$0xff]
    %v554 = vld [vmem:[#allocation2] sm:$0xff]
    %v555 = vld [vmem:[#allocation2 + $0x8] sm:$0xff]
    %v556 = vld [vmem:[#allocation2 + $0x10] sm:$0xff]
    %v557 = vld [vmem:[#allocation2 + $0x18] sm:$0xff]
    %v558 = vpack.c.bf16 %v552, %v552
    %v591 = vunpack.c.l.b16 %v520
    %v592 = vunpack.c.h.b16 %v520
    %v593 = vunpack.c.l.b16 %v521
    %v594 = vunpack.c.h.b16 %v521
    %v595 = vunpack.c.l.b16 %v522
    %v596 = vunpack.c.h.b16 %v522
    %v597 = vunpack.c.l.b16 %v523
    %v598 = vunpack.c.h.b16 %v523
    %v599 = vunpack.c.l.b16 %v524
    %v600 = vunpack.c.h.b16 %v524
    %v601 = vunpack.c.l.b16 %v525
    %v602 = vunpack.c.h.b16 %v525
    %v603 = vunpack.c.l.b16 %v526
    %v604 = vunpack.c.h.b16 %v526
    %v605 = vunpack.c.l.b16 %v527
    %v606 = vunpack.c.h.b16 %v527
    %v607 = vunpack.c.l.b16 %v528
    %v608 = vunpack.c.h.b16 %v528
    %v609 = vunpack.c.l.b16 %v529
    %v610 = vunpack.c.h.b16 %v529
    %v611 = vunpack.c.l.b16 %v530
    %v612 = vunpack.c.h.b16 %v530
    %v613 = vunpack.c.l.b16 %v531
    %v614 = vunpack.c.h.b16 %v531
    %v615 = vunpack.c.l.b16 %v532
    %v616 = vunpack.c.h.b16 %v532
    %v617 = vunpack.c.l.b16 %v533
    %v618 = vunpack.c.h.b16 %v533
    %v619 = vunpack.c.l.b16 %v534
    %v620 = vunpack.c.h.b16 %v534
    %v621 = vunpack.c.l.b16 %v535
    %v622 = vunpack.c.h.b16 %v535
    %v623 = vunpack.c.l.b16 %v536
    %v624 = vunpack.c.h.b16 %v536
    %v625 = vunpack.c.l.b16 %v537
    %v626 = vunpack.c.h.b16 %v537
    %v627 = vunpack.c.l.b16 %v538
    %v628 = vunpack.c.h.b16 %v538
    %v629 = vunpack.c.l.b16 %v539
    %v630 = vunpack.c.h.b16 %v539
    %v631 = vunpack.c.l.b16 %v540
    %v632 = vunpack.c.h.b16 %v540
    %v633 = vunpack.c.l.b16 %v541
    %v634 = vunpack.c.h.b16 %v541
    %v635 = vunpack.c.l.b16 %v542
    %v636 = vunpack.c.h.b16 %v542
    %v637 = vunpack.c.l.b16 %v543
    %v638 = vunpack.c.h.b16 %v543
    %v639 = vunpack.c.l.b16 %v544
    %v640 = vunpack.c.h.b16 %v544
    %v641 = vunpack.c.l.b16 %v545
    %v642 = vunpack.c.h.b16 %v545
    %v643 = vunpack.c.l.b16 %v546
    %v644 = vunpack.c.h.b16 %v546
    %v645 = vunpack.c.l.b16 %v547
    %v646 = vunpack.c.h.b16 %v547
    %v647 = vunpack.c.l.b16 %v548
    %v648 = vunpack.c.h.b16 %v548
    %v649 = vunpack.c.l.b16 %v549
    %v650 = vunpack.c.h.b16 %v549
    %v651 = vunpack.c.l.b16 %v550
    %v652 = vunpack.c.h.b16 %v550
    %v653 = vunpack.c.l.b16 %v551
    %v654 = vunpack.c.h.b16 %v551
    %v655 = vpack.c.b16 %v595, %v591
    %v656 = vpack.c.b16 %v596, %v592
    %v657 = vpack.c.b16 %v597, %v593
    %v658 = vpack.c.b16 %v598, %v594
    %v659 = vpack.c.b16 %v603, %v599
    %v660 = vpack.c.b16 %v604, %v600
    %v661 = vpack.c.b16 %v605, %v601
    %v662 = vpack.c.b16 %v606, %v602
    %v663 = vpack.c.b16 %v611, %v607
    %v664 = vpack.c.b16 %v612, %v608
    %v665 = vpack.c.b16 %v613, %v609
    %v666 = vpack.c.b16 %v614, %v610
    %v667 = vpack.c.b16 %v619, %v615
    %v668 = vpack.c.b16 %v620, %v616
    %v669 = vpack.c.b16 %v621, %v617
    %v670 = vpack.c.b16 %v622, %v618
    %v671 = vpack.c.b16 %v627, %v623
    %v672 = vpack.c.b16 %v628, %v624
    %v673 = vpack.c.b16 %v629, %v625
    %v674 = vpack.c.b16 %v630, %v626
    %v675 = vpack.c.b16 %v635, %v631
    %v676 = vpack.c.b16 %v636, %v632
    %v677 = vpack.c.b16 %v637, %v633
    %v678 = vpack.c.b16 %v638, %v634
    %v679 = vpack.c.b16 %v643, %v639
    %v680 = vpack.c.b16 %v644, %v640
    %v681 = vpack.c.b16 %v645, %v641
    %v682 = vpack.c.b16 %v646, %v642
    %v683 = vpack.c.b16 %v651, %v647
    %v684 = vpack.c.b16 %v652, %v648
    %v685 = vpack.c.b16 %v653, %v649
    %v686 = vpack.c.b16 %v654, %v650
    %719 = vmatprep.subr.bf16.mxu0 %v656
    %720 = vmatpush1.bf16.msra.mxu0 %v655
    %721 = vmatprep.subr.bf16.mxu0 %v660
    %722 = vmatpush1.bf16.msra.mxu0 %v659
    %723 = vmatprep.subr.bf16.mxu0 %v664
    %724 = vmatpush1.bf16.msra.mxu0 %v663
    %725 = vmatprep.subr.bf16.mxu0 %v668
    %726 = vmatpush1.bf16.msra.mxu0 %v667
    %727 = vmatprep.subr.bf16.mxu0 %v672
    %728 = vmatpush1.bf16.msra.mxu0 %v671
    %729 = vmatprep.subr.bf16.mxu0 %v676
    %730 = vmatpush1.bf16.msra.mxu0 %v675
    %731 = vmatprep.subr.bf16.mxu0 %v680
    %732 = vmatpush1.bf16.msra.mxu0 %v679
    %733 = vmatprep.subr.bf16.mxu0 %v684
    %734 = vmatpush1.bf16.msra.mxu0 %v683
    %735 = vmatprep.subr.bf16.mxu0 0
    %736 = vmatpush1.bf16.msra.mxu0 0
    %737 = vmatprep.subr.bf16.mxu0 0
    %738 = vmatpush1.bf16.msra.mxu0 0
    %739 = vmatprep.subr.bf16.mxu0 0
    %740 = vmatpush1.bf16.msra.mxu0 0
    %741 = vmatprep.subr.bf16.mxu0 0
    %742 = vmatpush1.bf16.msra.mxu0 0
    %743 = vmatprep.subr.bf16.mxu0 0
    %744 = vmatpush1.bf16.msra.mxu0 0
    %745 = vmatprep.subr.bf16.mxu0 0
    %746 = vmatpush1.bf16.msra.mxu0 0
    %747 = vmatprep.subr.bf16.mxu0 0
    %748 = vmatpush1.bf16.msra.mxu0 0
    %749 = vmatprep.subr.bf16.mxu0 0
    %750 = vmatpush1.bf16.msra.mxu0 0
    %751 = vmatprep.mubr.bf16.mxu0 0
    %752 = vmatmul.mubr.bf16.gmra.mrb[0].mxu0 %v558
    %v753 = vpop.f32.mrb[0].mxu0
    %v754 = vadd.f32 0.0, %v753
    %v755 = vpop.f32.mrb[0].mxu0
    %v756 = vadd.f32 0.0, %v755
    %v757 = vpop.f32.mrb[0].mxu0
    %v758 = vpop.f32.mrb[0].mxu0
    %759 = vdwg.mxu0
    %760 = vmatprep.subr.bf16.mxu0 %v658
    %761 = vmatpush1.bf16.msra.mxu0 %v657
    %762 = vmatprep.subr.bf16.mxu0 %v662
    %763 = vmatpush1.bf16.msra.mxu0 %v661
    %764 = vmatprep.subr.bf16.mxu0 %v666
    %765 = vmatpush1.bf16.msra.mxu0 %v665
    %766 = vmatprep.subr.bf16.mxu0 %v670
    %767 = vmatpush1.bf16.msra.mxu0 %v669
    %768 = vmatprep.subr.bf16.mxu0 %v674
    %769 = vmatpush1.bf16.msra.mxu0 %v673
    %770 = vmatprep.subr.bf16.mxu0 %v678
    %771 = vmatpush1.bf16.msra.mxu0 %v677
    %772 = vmatprep.subr.bf16.mxu0 %v682
    %773 = vmatpush1.bf16.msra.mxu0 %v681
    %774 = vmatprep.subr.bf16.mxu0 %v686
    %775 = vmatpush1.bf16.msra.mxu0 %v685
    %776 = vmatprep.subr.bf16.mxu0 0
    %777 = vmatpush1.bf16.msra.mxu0 0
    %778 = vmatprep.subr.bf16.mxu0 0
    %779 = vmatpush1.bf16.msra.mxu0 0
    %780 = vmatprep.subr.bf16.mxu0 0
    %781 = vmatpush1.bf16.msra.mxu0 0
    %782 = vmatprep.subr.bf16.mxu0 0
    %783 = vmatpush1.bf16.msra.mxu0 0
    %784 = vmatprep.subr.bf16.mxu0 0
    %785 = vmatpush1.bf16.msra.mxu0 0
    %786 = vmatprep.subr.bf16.mxu0 0
    %787 = vmatpush1.bf16.msra.mxu0 0
    %788 = vmatprep.subr.bf16.mxu0 0
    %789 = vmatpush1.bf16.msra.mxu0 0
    %790 = vmatprep.subr.bf16.mxu0 0
    %791 = vmatpush1.bf16.msra.mxu0 0
    %792 = vmatprep.mubr.bf16.mxu0 0
    %793 = vmatmul.mubr.bf16.gmra.mrb[0].mxu0 %v558
    %v794 = vpop.f32.mrb[0].mxu0
    %v795 = vadd.f32 0.0, %v794
    %v796 = vpop.f32.mrb[0].mxu0
    %v797 = vadd.f32 0.0, %v796
    %v798 = vpop.f32.mrb[0].mxu0
    %v799 = vpop.f32.mrb[0].mxu0
    %800 = vdwg.mxu0
    %v801 = vadd.f32 %v554, %v754
    %v802 = vadd.f32 %v555, %v756
    %v803 = vadd.f32 %v556, %v795
    %v804 = vadd.f32 %v557, %v797
    %v805 = vxor.u32 %v801, 2147483648
    %v806 = vmul.f32 %v805, 1.442695
    %v807 = vpow.pop %v806
    %v808 = vadd.f32 %v807, 1.0
    %v809 = vrcp.pop %v808
    %v810 = vmul.f32 1.0, %v809
    %v811 = vxor.u32 %v802, 2147483648
    %v812 = vmul.f32 %v811, 1.442695
    %v813 = vpow.pop %v812
    %v814 = vadd.f32 %v813, 1.0
    %v815 = vrcp.pop %v814
    %v816 = vmul.f32 1.0, %v815
    %v817 = vtanh.pop %v803
    %v818 = vxor.u32 %v804, 2147483648
    %v819 = vmul.f32 %v818, 1.442695
    %v820 = vpow.pop %v819
    %v821 = vadd.f32 %v820, 1.0
    %v822 = vrcp.pop %v821
    %v823 = vmul.f32 1.0, %v822
    %v824 = vmul.f32 %v816, %v553
    %v825 = vmul.f32 %v810, %v817
    %v826 = vadd.f32 %v824, %v825
    %v827 = vtanh.pop %v826
    %v828 = vmul.f32 %v823, %v827
    %v829 = vpack.c.bf16 %v828, %v828
    %830 = vst [vmem:[#allocation11] sm:$0xf] %v829
    %s831 = scalar_lea.vmem [#allocation2], 32
    %v832 = vld [vmem:[%s831] sm:$0xff]
    %v833 = vld [vmem:[%s831 + $0x8] sm:$0xff]
    %v834 = vld [vmem:[%s831 + $0x10] sm:$0xff]
    %v835 = vld [vmem:[%s831 + $0x18] sm:$0xff]
    %836 = vmatprep.subr.bf16.mxu0 %v656
    %837 = vmatpush1.bf16.msra.mxu0 %v655
    %838 = vmatprep.subr.bf16.mxu0 %v660
    %839 = vmatpush1.bf16.msra.mxu0 %v659
    %840 = vmatprep.subr.bf16.mxu0 %v664
    %841 = vmatpush1.bf16.msra.mxu0 %v663
    %842 = vmatprep.subr.bf16.mxu0 %v668
    %843 = vmatpush1.bf16.msra.mxu0 %v667
    %844 = vmatprep.subr.bf16.mxu0 %v672
    %845 = vmatpush1.bf16.msra.mxu0 %v671
    %846 = vmatprep.subr.bf16.mxu0 %v676
    %847 = vmatpush1.bf16.msra.mxu0 %v675
    %848 = vmatprep.subr.bf16.mxu0 %v680
    %849 = vmatpush1.bf16.msra.mxu0 %v679
    %850 = vmatprep.subr.bf16.mxu0 %v684
    %851 = vmatpush1.bf16.msra.mxu0 %v683
    %852 = vmatprep.subr.bf16.mxu0 0
    %853 = vmatpush1.bf16.msra.mxu0 0
    %854 = vmatprep.subr.bf16.mxu0 0
    %855 = vmatpush1.bf16.msra.mxu0 0
    %856 = vmatprep.subr.bf16.mxu0 0
    %857 = vmatpush1.bf16.msra.mxu0 0
    %858 = vmatprep.subr.bf16.mxu0 0
    %859 = vmatpush1.bf16.msra.mxu0 0
    %860 = vmatprep.subr.bf16.mxu0 0
    %861 = vmatpush1.bf16.msra.mxu0 0
    %862 = vmatprep.subr.bf16.mxu0 0
    %863 = vmatpush1.bf16.msra.mxu0 0
    %864 = vmatprep.subr.bf16.mxu0 0
    %865 = vmatpush1.bf16.msra.mxu0 0
    %866 = vmatprep.subr.bf16.mxu0 0
    %867 = vmatpush1.bf16.msra.mxu0 0
    %868 = vmatprep.mubr.bf16.mxu0 0
    %869 = vmatmul.mubr.bf16.gmra.mrb[0].mxu0 %v829
    %v870 = vpop.f32.mrb[0].mxu0
    %v871 = vadd.f32 0.0, %v870
    %v872 = vpop.f32.mrb[0].mxu0
    %v873 = vadd.f32 0.0, %v872
    %v874 = vpop.f32.mrb[0].mxu0
    %v875 = vpop.f32.mrb[0].mxu0
    %876 = vdwg.mxu0
    %877 = vmatprep.subr.bf16.mxu0 %v658
    %878 = vmatpush1.bf16.msra.mxu0 %v657
    %879 = vmatprep.subr.bf16.mxu0 %v662
    %880 = vmatpush1.bf16.msra.mxu0 %v661
    %881 = vmatprep.subr.bf16.mxu0 %v666
    %882 = vmatpush1.bf16.msra.mxu0 %v665
    %883 = vmatprep.subr.bf16.mxu0 %v670
    %884 = vmatpush1.bf16.msra.mxu0 %v669
    %885 = vmatprep.subr.bf16.mxu0 %v674
    %886 = vmatpush1.bf16.msra.mxu0 %v673
    %887 = vmatprep.subr.bf16.mxu0 %v678
    %888 = vmatpush1.bf16.msra.mxu0 %v677
    %889 = vmatprep.subr.bf16.mxu0 %v682
    %890 = vmatpush1.bf16.msra.mxu0 %v681
    %891 = vmatprep.subr.bf16.mxu0 %v686
    %892 = vmatpush1.bf16.msra.mxu0 %v685
    %893 = vmatprep.subr.bf16.mxu0 0
    %894 = vmatpush1.bf16.msra.mxu0 0
    %895 = vmatprep.subr.bf16.mxu0 0
    %896 = vmatpush1.bf16.msra.mxu0 0
    %897 = vmatprep.subr.bf16.mxu0 0
    %898 = vmatpush1.bf16.msra.mxu0 0
    %899 = vmatprep.subr.bf16.mxu0 0
    %900 = vmatpush1.bf16.msra.mxu0 0
    %901 = vmatprep.subr.bf16.mxu0 0
    %902 = vmatpush1.bf16.msra.mxu0 0
    %903 = vmatprep.subr.bf16.mxu0 0
    %904 = vmatpush1.bf16.msra.mxu0 0
    %905 = vmatprep.subr.bf16.mxu0 0
    %906 = vmatpush1.bf16.msra.mxu0 0
    %907 = vmatprep.subr.bf16.mxu0 0
    %908 = vmatpush1.bf16.msra.mxu0 0
    %909 = vmatprep.mubr.bf16.mxu0 0
    %910 = vmatmul.mubr.bf16.gmra.mrb[0].mxu0 %v829
    %v911 = vpop.f32.mrb[0].mxu0
    %v912 = vadd.f32 0.0, %v911
    %v913 = vpop.f32.mrb[0].mxu0
    %v914 = vadd.f32 0.0, %v913
    %v915 = vpop.f32.mrb[0].mxu0
    %v916 = vpop.f32.mrb[0].mxu0
    %917 = vdwg.mxu0
    %v918 = vadd.f32 %v832, %v871
    %v919 = vadd.f32 %v833, %v873
    %v920 = vadd.f32 %v834, %v912
    %v921 = vadd.f32 %v835, %v914
    %v922 = vxor.u32 %v918, 2147483648
    %v923 = vmul.f32 %v922, 1.442695
    %v924 = vpow.pop %v923
    %v925 = vadd.f32 %v924, 1.0
    %v926 = vrcp.pop %v925
    %v927 = vmul.f32 1.0, %v926
    %v928 = vxor.u32 %v919, 2147483648
    %v929 = vmul.f32 %v928, 1.442695
    %v930 = vpow.pop %v929
    %v931 = vadd.f32 %v930, 1.0
    %v932 = vrcp.pop %v931
    %v933 = vmul.f32 1.0, %v932
    %v934 = vtanh.pop %v920
    %v935 = vxor.u32 %v921, 2147483648
    %v936 = vmul.f32 %v935, 1.442695
    %v937 = vpow.pop %v936
    %v938 = vadd.f32 %v937, 1.0
    %v939 = vrcp.pop %v938
    %v940 = vmul.f32 1.0, %v939
    %v941 = vmul.f32 %v933, %v826
    %v942 = vmul.f32 %v927, %v934
    %v943 = vadd.f32 %v941, %v942
    %v944 = vtanh.pop %v943
    %v945 = vmul.f32 %v940, %v944
    %v946 = vpack.c.bf16 %v945, %v945
    %s947 = scalar_lea.vmem [#allocation11], 4
    %948 = vst [vmem:[%s947] sm:$0xf] %v946
    %s949 = scalar_lea.vmem [#allocation2], 64
    %v950 = vld [vmem:[%s949] sm:$0xff]
    %v951 = vld [vmem:[%s949 + $0x8] sm:$0xff]
    %v952 = vld [vmem:[%s949 + $0x10] sm:$0xff]
    %v953 = vld [vmem:[%s949 + $0x18] sm:$0xff]
    %954 = vmatprep.subr.bf16.mxu0 %v656
    %955 = vmatpush1.bf16.msra.mxu0 %v655
    %956 = vmatprep.subr.bf16.mxu0 %v660
    %957 = vmatpush1.bf16.msra.mxu0 %v659
    %958 = vmatprep.subr.bf16.mxu0 %v664
    %959 = vmatpush1.bf16.msra.mxu0 %v663
    %960 = vmatprep.subr.bf16.mxu0 %v668
    %961 = vmatpush1.bf16.msra.mxu0 %v667
    %962 = vmatprep.subr.bf16.mxu0 %v672
    %963 = vmatpush1.bf16.msra.mxu0 %v671
    %964 = vmatprep.subr.bf16.mxu0 %v676
    %965 = vmatpush1.bf16.msra.mxu0 %v675
    %966 = vmatprep.subr.bf16.mxu0 %v680
    %967 = vmatpush1.bf16.msra.mxu0 %v679
    %968 = vmatprep.subr.bf16.mxu0 %v684
    %969 = vmatpush1.bf16.msra.mxu0 %v683
    %970 = vmatprep.subr.bf16.mxu0 0
    %971 = vmatpush1.bf16.msra.mxu0 0
    %972 = vmatprep.subr.bf16.mxu0 0
    %973 = vmatpush1.bf16.msra.mxu0 0
    %974 = vmatprep.subr.bf16.mxu0 0
    %975 = vmatpush1.bf16.msra.mxu0 0
    %976 = vmatprep.subr.bf16.mxu0 0
    %977 = vmatpush1.bf16.msra.mxu0 0
    %978 = vmatprep.subr.bf16.mxu0 0
    %979 = vmatpush1.bf16.msra.mxu0 0
    %980 = vmatprep.subr.bf16.mxu0 0
    %981 = vmatpush1.bf16.msra.mxu0 0
    %982 = vmatprep.subr.bf16.mxu0 0
    %983 = vmatpush1.bf16.msra.mxu0 0
    %984 = vmatprep.subr.bf16.mxu0 0
    %985 = vmatpush1.bf16.msra.mxu0 0
    %986 = vmatprep.mubr.bf16.mxu0 0
    %987 = vmatmul.mubr.bf16.gmra.mrb[0].mxu0 %v946
    %v988 = vpop.f32.mrb[0].mxu0
    %v989 = vadd.f32 0.0, %v988
    %v990 = vpop.f32.mrb[0].mxu0
    %v991 = vadd.f32 0.0, %v990
    %v992 = vpop.f32.mrb[0].mxu0
    %v993 = vpop.f32.mrb[0].mxu0
    %994 = vdwg.mxu0
    %995 = vmatprep.subr.bf16.mxu0 %v658
    %996 = vmatpush1.bf16.msra.mxu0 %v657
    %997 = vmatprep.subr.bf16.mxu0 %v662
    %998 = vmatpush1.bf16.msra.mxu0 %v661
    %999 = vmatprep.subr.bf16.mxu0 %v666
    %1000 = vmatpush1.bf16.msra.mxu0 %v665
    %1001 = vmatprep.subr.bf16.mxu0 %v670
    %1002 = vmatpush1.bf16.msra.mxu0 %v669
    %1003 = vmatprep.subr.bf16.mxu0 %v674
    %1004 = vmatpush1.bf16.msra.mxu0 %v673
    %1005 = vmatprep.subr.bf16.mxu0 %v678
    %1006 = vmatpush1.bf16.msra.mxu0 %v677
    %1007 = vmatprep.subr.bf16.mxu0 %v682
    %1008 = vmatpush1.bf16.msra.mxu0 %v681
    %1009 = vmatprep.subr.bf16.mxu0 %v686
    %1010 = vmatpush1.bf16.msra.mxu0 %v685
    %1011 = vmatprep.subr.bf16.mxu0 0
    %1012 = vmatpush1.bf16.msra.mxu0 0
    %1013 = vmatprep.subr.bf16.mxu0 0
    %1014 = vmatpush1.bf16.msra.mxu0 0
    %1015 = vmatprep.subr.bf16.mxu0 0
    %1016 = vmatpush1.bf16.msra.mxu0 0
    %1017 = vmatprep.subr.bf16.mxu0 0
    %1018 = vmatpush1.bf16.msra.mxu0 0
    %1019 = vmatprep.subr.bf16.mxu0 0
    %1020 = vmatpush1.bf16.msra.mxu0 0
    %1021 = vmatprep.subr.bf16.mxu0 0
    %1022 = vmatpush1.bf16.msra.mxu0 0
    %1023 = vmatprep.subr.bf16.mxu0 0
    %1024 = vmatpush1.bf16.msra.mxu0 0
    %1025 = vmatprep.subr.bf16.mxu0 0
    %1026 = vmatpush1.bf16.msra.mxu0 0
    %1027 = vmatprep.mubr.bf16.mxu0 0
    %1028 = vmatmul.mubr.bf16.gmra.mrb[0].mxu0 %v946
    %v1029 = vpop.f32.mrb[0].mxu0
    %v1030 = vadd.f32 0.0, %v1029
    %v1031 = vpop.f32.mrb[0].mxu0
    %v1032 = vadd.f32 0.0, %v1031
    %v1033 = vpop.f32.mrb[0].mxu0
    %v1034 = vpop.f32.mrb[0].mxu0
    %1035 = vdwg.mxu0
    %v1036 = vadd.f32 %v950, %v989
    %v1037 = vadd.f32 %v951, %v991
    %v1038 = vadd.f32 %v952, %v1030
    %v1039 = vadd.f32 %v953, %v1032
    %v1040 = vxor.u32 %v1036, 2147483648
    %v1041 = vmul.f32 %v1040, 1.442695
    %v1042 = vpow.pop %v1041
    %v1043 = vadd.f32 %v1042, 1.0
    %v1044 = vrcp.pop %v1043
    %v1045 = vmul.f32 1.0, %v1044
    %v1046 = vxor.u32 %v1037, 2147483648
    %v1047 = vmul.f32 %v1046, 1.442695
    %v1048 = vpow.pop %v1047
    %v1049 = vadd.f32 %v1048, 1.0
    %v1050 = vrcp.pop %v1049
    %v1051 = vmul.f32 1.0, %v1050
    %v1052 = vtanh.pop %v1038
    %v1053 = vxor.u32 %v1039, 2147483648
    %v1054 = vmul.f32 %v1053, 1.442695
    %v1055 = vpow.pop %v1054
    %v1056 = vadd.f32 %v1055, 1.0
    %v1057 = vrcp.pop %v1056
    %v1058 = vmul.f32 1.0, %v1057
    %v1059 = vmul.f32 %v1051, %v943
    %v1060 = vmul.f32 %v1045, %v1052
    %v1061 = vadd.f32 %v1059, %v1060
    %v1062 = vtanh.pop %v1061
    %v1063 = vmul.f32 %v1058, %v1062
    %v1064 = vpack.c.bf16 %v1063, %v1063
    %s1065 = scalar_lea.vmem [#allocation11], 8
    %1066 = vst [vmem:[%s1065] sm:$0xf] %v1064
    %s1067 = scalar_lea.vmem [#allocation2], 96
    %v1068 = vld [vmem:[%s1067] sm:$0xff]
    %v1069 = vld [vmem:[%s1067 + $0x8] sm:$0xff]
    %v1070 = vld [vmem:[%s1067 + $0x10] sm:$0xff]
    %v1071 = vld [vmem:[%s1067 + $0x18] sm:$0xff]
    %1072 = vmatprep.subr.bf16.mxu0 %v656
    %1073 = vmatpush1.bf16.msra.mxu0 %v655
    %1074 = vmatprep.subr.bf16.mxu0 %v660
    %1075 = vmatpush1.bf16.msra.mxu0 %v659
    %1076 = vmatprep.subr.bf16.mxu0 %v664
    %1077 = vmatpush1.bf16.msra.mxu0 %v663
    %1078 = vmatprep.subr.bf16.mxu0 %v668
    %1079 = vmatpush1.bf16.msra.mxu0 %v667
    %1080 = vmatprep.subr.bf16.mxu0 %v672
    %1081 = vmatpush1.bf16.msra.mxu0 %v671
    %1082 = vmatprep.subr.bf16.mxu0 %v676
    %1083 = vmatpush1.bf16.msra.mxu0 %v675
    %1084 = vmatprep.subr.bf16.mxu0 %v680
    %1085 = vmatpush1.bf16.msra.mxu0 %v679
    %1086 = vmatprep.subr.bf16.mxu0 %v684
    %1087 = vmatpush1.bf16.msra.mxu0 %v683
    %1088 = vmatprep.subr.bf16.mxu0 0
    %1089 = vmatpush1.bf16.msra.mxu0 0
    %1090 = vmatprep.subr.bf16.mxu0 0
    %1091 = vmatpush1.bf16.msra.mxu0 0
    %1092 = vmatprep.subr.bf16.mxu0 0
    %1093 = vmatpush1.bf16.msra.mxu0 0
    %1094 = vmatprep.subr.bf16.mxu0 0
    %1095 = vmatpush1.bf16.msra.mxu0 0
    %1096 = vmatprep.subr.bf16.mxu0 0
    %1097 = vmatpush1.bf16.msra.mxu0 0
    %1098 = vmatprep.subr.bf16.mxu0 0
    %1099 = vmatpush1.bf16.msra.mxu0 0
    %1100 = vmatprep.subr.bf16.mxu0 0
    %1101 = vmatpush1.bf16.msra.mxu0 0
    %1102 = vmatprep.subr.bf16.mxu0 0
    %1103 = vmatpush1.bf16.msra.mxu0 0
    %1104 = vmatprep.mubr.bf16.mxu0 0
    %1105 = vmatmul.mubr.bf16.gmra.mrb[0].mxu0 %v1064
    %v1106 = vpop.f32.mrb[0].mxu0
    %v1107 = vadd.f32 0.0, %v1106
    %v1108 = vpop.f32.mrb[0].mxu0
    %v1109 = vadd.f32 0.0, %v1108
    %v1110 = vpop.f32.mrb[0].mxu0
    %v1111 = vpop.f32.mrb[0].mxu0
    %1112 = vdwg.mxu0
    %1113 = vmatprep.subr.bf16.mxu0 %v658
    %1114 = vmatpush1.bf16.msra.mxu0 %v657
    %1115 = vmatprep.subr.bf16.mxu0 %v662
    %1116 = vmatpush1.bf16.msra.mxu0 %v661
    %1117 = vmatprep.subr.bf16.mxu0 %v666
    %1118 = vmatpush1.bf16.msra.mxu0 %v665
    %1119 = vmatprep.subr.bf16.mxu0 %v670
    %1120 = vmatpush1.bf16.msra.mxu0 %v669
    %1121 = vmatprep.subr.bf16.mxu0 %v674
    %1122 = vmatpush1.bf16.msra.mxu0 %v673
    %1123 = vmatprep.subr.bf16.mxu0 %v678
    %1124 = vmatpush1.bf16.msra.mxu0 %v677
    %1125 = vmatprep.subr.bf16.mxu0 %v682
    %1126 = vmatpush1.bf16.msra.mxu0 %v681
    %1127 = vmatprep.subr.bf16.mxu0 %v686
    %1128 = vmatpush1.bf16.msra.mxu0 %v685
    %1129 = vmatprep.subr.bf16.mxu0 0
    %1130 = vmatpush1.bf16.msra.mxu0 0
    %1131 = vmatprep.subr.bf16.mxu0 0
    %1132 = vmatpush1.bf16.msra.mxu0 0
    %1133 = vmatprep.subr.bf16.mxu0 0
    %1134 = vmatpush1.bf16.msra.mxu0 0
    %1135 = vmatprep.subr.bf16.mxu0 0
    %1136 = vmatpush1.bf16.msra.mxu0 0
    %1137 = vmatprep.subr.bf16.mxu0 0
    %1138 = vmatpush1.bf16.msra.mxu0 0
    %1139 = vmatprep.subr.bf16.mxu0 0
    %1140 = vmatpush1.bf16.msra.mxu0 0
    %1141 = vmatprep.subr.bf16.mxu0 0
    %1142 = vmatpush1.bf16.msra.mxu0 0
    %1143 = vmatprep.subr.bf16.mxu0 0
    %1144 = vmatpush1.bf16.msra.mxu0 0
    %1145 = vmatprep.mubr.bf16.mxu0 0
    %1146 = vmatmul.mubr.bf16.gmra.mrb[0].mxu0 %v1064
    %v1147 = vpop.f32.mrb[0].mxu0
    %v1148 = vadd.f32 0.0, %v1147
    %v1149 = vpop.f32.mrb[0].mxu0
    %v1150 = vadd.f32 0.0, %v1149
    %v1151 = vpop.f32.mrb[0].mxu0
    %v1152 = vpop.f32.mrb[0].mxu0
    %1153 = vdwg.mxu0
    %v1154 = vadd.f32 %v1068, %v1107
    %v1155 = vadd.f32 %v1069, %v1109
    %v1156 = vadd.f32 %v1070, %v1148
    %v1157 = vadd.f32 %v1071, %v1150
    %v1158 = vxor.u32 %v1154, 2147483648
    %v1159 = vmul.f32 %v1158, 1.442695
    %v1160 = vpow.pop %v1159
    %v1161 = vadd.f32 %v1160, 1.0
    %v1162 = vrcp.pop %v1161
    %v1163 = vmul.f32 1.0, %v1162
    %v1164 = vxor.u32 %v1155, 2147483648
    %v1165 = vmul.f32 %v1164, 1.442695
    %v1166 = vpow.pop %v1165
    %v1167 = vadd.f32 %v1166, 1.0
    %v1168 = vrcp.pop %v1167
    %v1169 = vmul.f32 1.0, %v1168
    %v1170 = vtanh.pop %v1156
    %v1171 = vxor.u32 %v1157, 2147483648
    %v1172 = vmul.f32 %v1171, 1.442695
    %v1173 = vpow.pop %v1172
    %v1174 = vadd.f32 %v1173, 1.0
    %v1175 = vrcp.pop %v1174
    %v1176 = vmul.f32 1.0, %v1175
    %v1177 = vmul.f32 %v1169, %v1061
    %v1178 = vmul.f32 %v1163, %v1170
    %v1179 = vadd.f32 %v1177, %v1178
    %v1180 = vtanh.pop %v1179
    %v1181 = vmul.f32 %v1176, %v1180
    %v1182 = vpack.c.bf16 %v1181, %v1181
    %s1183 = scalar_lea.vmem [#allocation11], 12
    %1184 = vst [vmem:[%s1183] sm:$0xf] %v1182
    %s1185 = scalar_lea.vmem [#allocation2], 128
    %v1186 = vld [vmem:[%s1185] sm:$0xff]
    %v1187 = vld [vmem:[%s1185 + $0x8] sm:$0xff]
    %v1188 = vld [vmem:[%s1185 + $0x10] sm:$0xff]
    %v1189 = vld [vmem:[%s1185 + $0x18] sm:$0xff]
    %1190 = vmatprep.subr.bf16.mxu0 %v656
    %1191 = vmatpush1.bf16.msra.mxu0 %v655
    %1192 = vmatprep.subr.bf16.mxu0 %v660
    %1193 = vmatpush1.bf16.msra.mxu0 %v659
    %1194 = vmatprep.subr.bf16.mxu0 %v664
    %1195 = vmatpush1.bf16.msra.mxu0 %v663
    %1196 = vmatprep.subr.bf16.mxu0 %v668
    %1197 = vmatpush1.bf16.msra.mxu0 %v667
    %1198 = vmatprep.subr.bf16.mxu0 %v672
    %1199 = vmatpush1.bf16.msra.mxu0 %v671
    %1200 = vmatprep.subr.bf16.mxu0 %v676
    %1201 = vmatpush1.bf16.msra.mxu0 %v675
    %1202 = vmatprep.subr.bf16.mxu0 %v680
    %1203 = vmatpush1.bf16.msra.mxu0 %v679
    %1204 = vmatprep.subr.bf16.mxu0 %v684
    %1205 = vmatpush1.bf16.msra.mxu0 %v683
    %1206 = vmatprep.subr.bf16.mxu0 0
    %1207 = vmatpush1.bf16.msra.mxu0 0
    %1208 = vmatprep.subr.bf16.mxu0 0
    %1209 = vmatpush1.bf16.msra.mxu0 0
    %1210 = vmatprep.subr.bf16.mxu0 0
    %1211 = vmatpush1.bf16.msra.mxu0 0
    %1212 = vmatprep.subr.bf16.mxu0 0
    %1213 = vmatpush1.bf16.msra.mxu0 0
    %1214 = vmatprep.subr.bf16.mxu0 0
    %1215 = vmatpush1.bf16.msra.mxu0 0
    %1216 = vmatprep.subr.bf16.mxu0 0
    %1217 = vmatpush1.bf16.msra.mxu0 0
    %1218 = vmatprep.subr.bf16.mxu0 0
    %1219 = vmatpush1.bf16.msra.mxu0 0
    %1220 = vmatprep.subr.bf16.mxu0 0
    %1221 = vmatpush1.bf16.msra.mxu0 0
    %1222 = vmatprep.mubr.bf16.mxu0 0
    %1223 = vmatmul.mubr.bf16.gmra.mrb[0].mxu0 %v1182
    %v1224 = vpop.f32.mrb[0].mxu0
    %v1225 = vadd.f32 0.0, %v1224
    %v1226 = vpop.f32.mrb[0].mxu0
    %v1227 = vadd.f32 0.0, %v1226
    %v1228 = vpop.f32.mrb[0].mxu0
    %v1229 = vpop.f32.mrb[0].mxu0
    %1230 = vdwg.mxu0
    %1231 = vmatprep.subr.bf16.mxu0 %v658
    %1232 = vmatpush1.bf16.msra.mxu0 %v657
    %1233 = vmatprep.subr.bf16.mxu0 %v662
    %1234 = vmatpush1.bf16.msra.mxu0 %v661
    %1235 = vmatprep.subr.bf16.mxu0 %v666
    %1236 = vmatpush1.bf16.msra.mxu0 %v665
    %1237 = vmatprep.subr.bf16.mxu0 %v670
    %1238 = vmatpush1.bf16.msra.mxu0 %v669
    %1239 = vmatprep.subr.bf16.mxu0 %v674
    %1240 = vmatpush1.bf16.msra.mxu0 %v673
    %1241 = vmatprep.subr.bf16.mxu0 %v678
    %1242 = vmatpush1.bf16.msra.mxu0 %v677
    %1243 = vmatprep.subr.bf16.mxu0 %v682
    %1244 = vmatpush1.bf16.msra.mxu0 %v681
    %1245 = vmatprep.subr.bf16.mxu0 %v686
    %1246 = vmatpush1.bf16.msra.mxu0 %v685
    %1247 = vmatprep.subr.bf16.mxu0 0
    %1248 = vmatpush1.bf16.msra.mxu0 0
    %1249 = vmatprep.subr.bf16.mxu0 0
    %1250 = vmatpush1.bf16.msra.mxu0 0
    %1251 = vmatprep.subr.bf16.mxu0 0
    %1252 = vmatpush1.bf16.msra.mxu0 0
    %1253 = vmatprep.subr.bf16.mxu0 0
    %1254 = vmatpush1.bf16.msra.mxu0 0
    %1255 = vmatprep.subr.bf16.mxu0 0
    %1256 = vmatpush1.bf16.msra.mxu0 0
    %1257 = vmatprep.subr.bf16.mxu0 0
    %1258 = vmatpush1.bf16.msra.mxu0 0
    %1259 = vmatprep.subr.bf16.mxu0 0
    %1260 = vmatpush1.bf16.msra.mxu0 0
    %1261 = vmatprep.subr.bf16.mxu0 0
    %1262 = vmatpush1.bf16.msra.mxu0 0
    %1263 = vmatprep.mubr.bf16.mxu0 0
    %1264 = vmatmul.mubr.bf16.gmra.mrb[0].mxu0 %v1182
    %v1265 = vpop.f32.mrb[0].mxu0
    %v1266 = vadd.f32 0.0, %v1265
    %v1267 = vpop.f32.mrb[0].mxu0
    %v1268 = vadd.f32 0.0, %v1267
    %v1269 = vpop.f32.mrb[0].mxu0
    %v1270 = vpop.f32.mrb[0].mxu0
    %1271 = vdwg.mxu0
    %v1272 = vadd.f32 %v1186, %v1225
    %v1273 = vadd.f32 %v1187, %v1227
    %v1274 = vadd.f32 %v1188, %v1266
    %v1275 = vadd.f32 %v1189, %v1268
    %v1276 = vxor.u32 %v1272, 2147483648
    %v1277 = vmul.f32 %v1276, 1.442695
    %v1278 = vpow.pop %v1277
    %v1279 = vadd.f32 %v1278, 1.0
    %v1280 = vrcp.pop %v1279
    %v1281 = vmul.f32 1.0, %v1280
    %v1282 = vxor.u32 %v1273, 2147483648
    %v1283 = vmul.f32 %v1282, 1.442695
    %v1284 = vpow.pop %v1283
    %v1285 = vadd.f32 %v1284, 1.0
    %v1286 = vrcp.pop %v1285
    %v1287 = vmul.f32 1.0, %v1286
    %v1288 = vtanh.pop %v1274
    %v1289 = vxor.u32 %v1275, 2147483648
    %v1290 = vmul.f32 %v1289, 1.442695
    %v1291 = vpow.pop %v1290
    %v1292 = vadd.f32 %v1291, 1.0
    %v1293 = vrcp.pop %v1292
    %v1294 = vmul.f32 1.0, %v1293
    %v1295 = vmul.f32 %v1287, %v1179
    %v1296 = vmul.f32 %v1281, %v1288
    %v1297 = vadd.f32 %v1295, %v1296
    %v1298 = vtanh.pop %v1297
    %v1299 = vmul.f32 %v1294, %v1298
    %v1300 = vpack.c.bf16 %v1299, %v1299
    %s1301 = scalar_lea.vmem [#allocation11], 16
    %1302 = vst [vmem:[%s1301] sm:$0xf] %v1300
    %s1303 = scalar_lea.vmem [#allocation2], 160
    %v1304 = vld [vmem:[%s1303] sm:$0xff]
    %v1305 = vld [vmem:[%s1303 + $0x8] sm:$0xff]
    %v1306 = vld [vmem:[%s1303 + $0x10] sm:$0xff]
    %v1307 = vld [vmem:[%s1303 + $0x18] sm:$0xff]
    %1308 = vmatprep.subr.bf16.mxu0 %v656
    %1309 = vmatpush1.bf16.msra.mxu0 %v655
    %1310 = vmatprep.subr.bf16.mxu0 %v660
    %1311 = vmatpush1.bf16.msra.mxu0 %v659
    %1312 = vmatprep.subr.bf16.mxu0 %v664
    %1313 = vmatpush1.bf16.msra.mxu0 %v663
    %1314 = vmatprep.subr.bf16.mxu0 %v668
    %1315 = vmatpush1.bf16.msra.mxu0 %v667
    %1316 = vmatprep.subr.bf16.mxu0 %v672
    %1317 = vmatpush1.bf16.msra.mxu0 %v671
    %1318 = vmatprep.subr.bf16.mxu0 %v676
    %1319 = vmatpush1.bf16.msra.mxu0 %v675
    %1320 = vmatprep.subr.bf16.mxu0 %v680
    %1321 = vmatpush1.bf16.msra.mxu0 %v679
    %1322 = vmatprep.subr.bf16.mxu0 %v684
    %1323 = vmatpush1.bf16.msra.mxu0 %v683
    %1324 = vmatprep.subr.bf16.mxu0 0
    %1325 = vmatpush1.bf16.msra.mxu0 0
    %1326 = vmatprep.subr.bf16.mxu0 0
    %1327 = vmatpush1.bf16.msra.mxu0 0
    %1328 = vmatprep.subr.bf16.mxu0 0
    %1329 = vmatpush1.bf16.msra.mxu0 0
    %1330 = vmatprep.subr.bf16.mxu0 0
    %1331 = vmatpush1.bf16.msra.mxu0 0
    %1332 = vmatprep.subr.bf16.mxu0 0
    %1333 = vmatpush1.bf16.msra.mxu0 0
    %1334 = vmatprep.subr.bf16.mxu0 0
    %1335 = vmatpush1.bf16.msra.mxu0 0
    %1336 = vmatprep.subr.bf16.mxu0 0
    %1337 = vmatpush1.bf16.msra.mxu0 0
    %1338 = vmatprep.subr.bf16.mxu0 0
    %1339 = vmatpush1.bf16.msra.mxu0 0
    %1340 = vmatprep.mubr.bf16.mxu0 0
    %1341 = vmatmul.mubr.bf16.gmra.mrb[0].mxu0 %v1300
    %v1342 = vpop.f32.mrb[0].mxu0
    %v1343 = vadd.f32 0.0, %v1342
    %v1344 = vpop.f32.mrb[0].mxu0
    %v1345 = vadd.f32 0.0, %v1344
    %v1346 = vpop.f32.mrb[0].mxu0
    %v1347 = vpop.f32.mrb[0].mxu0
    %1348 = vdwg.mxu0
    %1349 = vmatprep.subr.bf16.mxu0 %v658
    %1350 = vmatpush1.bf16.msra.mxu0 %v657
    %1351 = vmatprep.subr.bf16.mxu0 %v662
    %1352 = vmatpush1.bf16.msra.mxu0 %v661
    %1353 = vmatprep.subr.bf16.mxu0 %v666
    %1354 = vmatpush1.bf16.msra.mxu0 %v665
    %1355 = vmatprep.subr.bf16.mxu0 %v670
    %1356 = vmatpush1.bf16.msra.mxu0 %v669
    %1357 = vmatprep.subr.bf16.mxu0 %v674
    %1358 = vmatpush1.bf16.msra.mxu0 %v673
    %1359 = vmatprep.subr.bf16.mxu0 %v678
    %1360 = vmatpush1.bf16.msra.mxu0 %v677
    %1361 = vmatprep.subr.bf16.mxu0 %v682
    %1362 = vmatpush1.bf16.msra.mxu0 %v681
    %1363 = vmatprep.subr.bf16.mxu0 %v686
    %1364 = vmatpush1.bf16.msra.mxu0 %v685
    %1365 = vmatprep.subr.bf16.mxu0 0
    %1366 = vmatpush1.bf16.msra.mxu0 0
    %1367 = vmatprep.subr.bf16.mxu0 0
    %1368 = vmatpush1.bf16.msra.mxu0 0
    %1369 = vmatprep.subr.bf16.mxu0 0
    %1370 = vmatpush1.bf16.msra.mxu0 0
    %1371 = vmatprep.subr.bf16.mxu0 0
    %1372 = vmatpush1.bf16.msra.mxu0 0
    %1373 = vmatprep.subr.bf16.mxu0 0
    %1374 = vmatpush1.bf16.msra.mxu0 0
    %1375 = vmatprep.subr.bf16.mxu0 0
    %1376 = vmatpush1.bf16.msra.mxu0 0
    %1377 = vmatprep.subr.bf16.mxu0 0
    %1378 = vmatpush1.bf16.msra.mxu0 0
    %1379 = vmatprep.subr.bf16.mxu0 0
    %1380 = vmatpush1.bf16.msra.mxu0 0
    %1381 = vmatprep.mubr.bf16.mxu0 0
    %1382 = vmatmul.mubr.bf16.gmra.mrb[0].mxu0 %v1300
    %v1383 = vpop.f32.mrb[0].mxu0
    %v1384 = vadd.f32 0.0, %v1383
    %v1385 = vpop.f32.mrb[0].mxu0
    %v1386 = vadd.f32 0.0, %v1385
    %v1387 = vpop.f32.mrb[0].mxu0
    %v1388 = vpop.f32.mrb[0].mxu0
    %1389 = vdwg.mxu0
    %v1390 = vadd.f32 %v1304, %v1343
    %v1391 = vadd.f32 %v1305, %v1345
    %v1392 = vadd.f32 %v1306, %v1384
    %v1393 = vadd.f32 %v1307, %v1386
    %v1394 = vxor.u32 %v1390, 2147483648
    %v1395 = vmul.f32 %v1394, 1.442695
    %v1396 = vpow.pop %v1395
    %v1397 = vadd.f32 %v1396, 1.0
    %v1398 = vrcp.pop %v1397
    %v1399 = vmul.f32 1.0, %v1398
    %v1400 = vxor.u32 %v1391, 2147483648
    %v1401 = vmul.f32 %v1400, 1.442695
    %v1402 = vpow.pop %v1401
    %v1403 = vadd.f32 %v1402, 1.0
    %v1404 = vrcp.pop %v1403
    %v1405 = vmul.f32 1.0, %v1404
    %v1406 = vtanh.pop %v1392
    %v1407 = vxor.u32 %v1393, 2147483648
    %v1408 = vmul.f32 %v1407, 1.442695
    %v1409 = vpow.pop %v1408
    %v1410 = vadd.f32 %v1409, 1.0
    %v1411 = vrcp.pop %v1410
    %v1412 = vmul.f32 1.0, %v1411
    %v1413 = vmul.f32 %v1405, %v1297
    %v1414 = vmul.f32 %v1399, %v1406
    %v1415 = vadd.f32 %v1413, %v1414
    %v1416 = vtanh.pop %v1415
    %v1417 = vmul.f32 %v1412, %v1416
    %v1418 = vpack.c.bf16 %v1417, %v1417
    %s1419 = scalar_lea.vmem [#allocation11], 20
    %1420 = vst [vmem:[%s1419] sm:$0xf] %v1418
    %s1421 = scalar_lea.vmem [#allocation2], 192
    %v1422 = vld [vmem:[%s1421] sm:$0xff]
    %v1423 = vld [vmem:[%s1421 + $0x8] sm:$0xff]
    %v1424 = vld [vmem:[%s1421 + $0x10] sm:$0xff]
    %v1425 = vld [vmem:[%s1421 + $0x18] sm:$0xff]
    %1426 = vmatprep.subr.bf16.mxu0 %v656
    %1427 = vmatpush1.bf16.msra.mxu0 %v655
    %1428 = vmatprep.subr.bf16.mxu0 %v660
    %1429 = vmatpush1.bf16.msra.mxu0 %v659
    %1430 = vmatprep.subr.bf16.mxu0 %v664
    %1431 = vmatpush1.bf16.msra.mxu0 %v663
    %1432 = vmatprep.subr.bf16.mxu0 %v668
    %1433 = vmatpush1.bf16.msra.mxu0 %v667
    %1434 = vmatprep.subr.bf16.mxu0 %v672
    %1435 = vmatpush1.bf16.msra.mxu0 %v671
    %1436 = vmatprep.subr.bf16.mxu0 %v676
    %1437 = vmatpush1.bf16.msra.mxu0 %v675
    %1438 = vmatprep.subr.bf16.mxu0 %v680
    %1439 = vmatpush1.bf16.msra.mxu0 %v679
    %1440 = vmatprep.subr.bf16.mxu0 %v684
    %1441 = vmatpush1.bf16.msra.mxu0 %v683
    %1442 = vmatprep.subr.bf16.mxu0 0
    %1443 = vmatpush1.bf16.msra.mxu0 0
    %1444 = vmatprep.subr.bf16.mxu0 0
    %1445 = vmatpush1.bf16.msra.mxu0 0
    %1446 = vmatprep.subr.bf16.mxu0 0
    %1447 = vmatpush1.bf16.msra.mxu0 0
    %1448 = vmatprep.subr.bf16.mxu0 0
    %1449 = vmatpush1.bf16.msra.mxu0 0
    %1450 = vmatprep.subr.bf16.mxu0 0
    %1451 = vmatpush1.bf16.msra.mxu0 0
    %1452 = vmatprep.subr.bf16.mxu0 0
    %1453 = vmatpush1.bf16.msra.mxu0 0
    %1454 = vmatprep.subr.bf16.mxu0 0
    %1455 = vmatpush1.bf16.msra.mxu0 0
    %1456 = vmatprep.subr.bf16.mxu0 0
    %1457 = vmatpush1.bf16.msra.mxu0 0
    %1458 = vmatprep.mubr.bf16.mxu0 0
    %1459 = vmatmul.mubr.bf16.gmra.mrb[0].mxu0 %v1418
    %v1460 = vpop.f32.mrb[0].mxu0
    %v1461 = vadd.f32 0.0, %v1460
    %v1462 = vpop.f32.mrb[0].mxu0
    %v1463 = vadd.f32 0.0, %v1462
    %v1464 = vpop.f32.mrb[0].mxu0
    %v1465 = vpop.f32.mrb[0].mxu0
    %1466 = vdwg.mxu0
    %1467 = vmatprep.subr.bf16.mxu0 %v658
    %1468 = vmatpush1.bf16.msra.mxu0 %v657
    %1469 = vmatprep.subr.bf16.mxu0 %v662
    %1470 = vmatpush1.bf16.msra.mxu0 %v661
    %1471 = vmatprep.subr.bf16.mxu0 %v666
    %1472 = vmatpush1.bf16.msra.mxu0 %v665
    %1473 = vmatprep.subr.bf16.mxu0 %v670
    %1474 = vmatpush1.bf16.msra.mxu0 %v669
    %1475 = vmatprep.subr.bf16.mxu0 %v674
    %1476 = vmatpush1.bf16.msra.mxu0 %v673
    %1477 = vmatprep.subr.bf16.mxu0 %v678
    %1478 = vmatpush1.bf16.msra.mxu0 %v677
    %1479 = vmatprep.subr.bf16.mxu0 %v682
    %1480 = vmatpush1.bf16.msra.mxu0 %v681
    %1481 = vmatprep.subr.bf16.mxu0 %v686
    %1482 = vmatpush1.bf16.msra.mxu0 %v685
    %1483 = vmatprep.subr.bf16.mxu0 0
    %1484 = vmatpush1.bf16.msra.mxu0 0
    %1485 = vmatprep.subr.bf16.mxu0 0
    %1486 = vmatpush1.bf16.msra.mxu0 0
    %1487 = vmatprep.subr.bf16.mxu0 0
    %1488 = vmatpush1.bf16.msra.mxu0 0
    %1489 = vmatprep.subr.bf16.mxu0 0
    %1490 = vmatpush1.bf16.msra.mxu0 0
    %1491 = vmatprep.subr.bf16.mxu0 0
    %1492 = vmatpush1.bf16.msra.mxu0 0
    %1493 = vmatprep.subr.bf16.mxu0 0
    %1494 = vmatpush1.bf16.msra.mxu0 0
    %1495 = vmatprep.subr.bf16.mxu0 0
    %1496 = vmatpush1.bf16.msra.mxu0 0
    %1497 = vmatprep.subr.bf16.mxu0 0
    %1498 = vmatpush1.bf16.msra.mxu0 0
    %1499 = vmatprep.mubr.bf16.mxu0 0
    %1500 = vmatmul.mubr.bf16.gmra.mrb[0].mxu0 %v1418
    %v1501 = vpop.f32.mrb[0].mxu0
    %v1502 = vadd.f32 0.0, %v1501
    %v1503 = vpop.f32.mrb[0].mxu0
    %v1504 = vadd.f32 0.0, %v1503
    %v1505 = vpop.f32.mrb[0].mxu0
    %v1506 = vpop.f32.mrb[0].mxu0
    %1507 = vdwg.mxu0
    %v1508 = vadd.f32 %v1422, %v1461
    %v1509 = vadd.f32 %v1423, %v1463
    %v1510 = vadd.f32 %v1424, %v1502
    %v1511 = vadd.f32 %v1425, %v1504
    %v1512 = vxor.u32 %v1508, 2147483648
    %v1513 = vmul.f32 %v1512, 1.442695
    %v1514 = vpow.pop %v1513
    %v1515 = vadd.f32 %v1514, 1.0
    %v1516 = vrcp.pop %v1515
    %v1517 = vmul.f32 1.0, %v1516
    %v1518 = vxor.u32 %v1509, 2147483648
    %v1519 = vmul.f32 %v1518, 1.442695
    %v1520 = vpow.pop %v1519
    %v1521 = vadd.f32 %v1520, 1.0
    %v1522 = vrcp.pop %v1521
    %v1523 = vmul.f32 1.0, %v1522
    %v1524 = vtanh.pop %v1510
    %v1525 = vxor.u32 %v1511, 2147483648
    %v1526 = vmul.f32 %v1525, 1.442695
    %v1527 = vpow.pop %v1526
    %v1528 = vadd.f32 %v1527, 1.0
    %v1529 = vrcp.pop %v1528
    %v1530 = vmul.f32 1.0, %v1529
    %v1531 = vmul.f32 %v1523, %v1415
    %v1532 = vmul.f32 %v1517, %v1524
    %v1533 = vadd.f32 %v1531, %v1532
    %v1534 = vtanh.pop %v1533
    %v1535 = vmul.f32 %v1530, %v1534
    %v1536 = vpack.c.bf16 %v1535, %v1535
    %s1537 = scalar_lea.vmem [#allocation11], 24
    %1538 = vst [vmem:[%s1537] sm:$0xf] %v1536
    %s1539 = scalar_lea.vmem [#allocation2], 224
    %v1540 = vld [vmem:[%s1539] sm:$0xff]
    %v1541 = vld [vmem:[%s1539 + $0x8] sm:$0xff]
    %v1542 = vld [vmem:[%s1539 + $0x10] sm:$0xff]
    %v1543 = vld [vmem:[%s1539 + $0x18] sm:$0xff]
    %1544 = vmatprep.subr.bf16.mxu0 %v656
    %1545 = vmatpush1.bf16.msra.mxu0 %v655
    %1546 = vmatprep.subr.bf16.mxu0 %v660
    %1547 = vmatpush1.bf16.msra.mxu0 %v659
    %1548 = vmatprep.subr.bf16.mxu0 %v664
    %1549 = vmatpush1.bf16.msra.mxu0 %v663
    %1550 = vmatprep.subr.bf16.mxu0 %v668
    %1551 = vmatpush1.bf16.msra.mxu0 %v667
    %1552 = vmatprep.subr.bf16.mxu0 %v672
    %1553 = vmatpush1.bf16.msra.mxu0 %v671
    %1554 = vmatprep.subr.bf16.mxu0 %v676
    %1555 = vmatpush1.bf16.msra.mxu0 %v675
    %1556 = vmatprep.subr.bf16.mxu0 %v680
    %1557 = vmatpush1.bf16.msra.mxu0 %v679
    %1558 = vmatprep.subr.bf16.mxu0 %v684
    %1559 = vmatpush1.bf16.msra.mxu0 %v683
    %1560 = vmatprep.subr.bf16.mxu0 0
    %1561 = vmatpush1.bf16.msra.mxu0 0
    %1562 = vmatprep.subr.bf16.mxu0 0
    %1563 = vmatpush1.bf16.msra.mxu0 0
    %1564 = vmatprep.subr.bf16.mxu0 0
    %1565 = vmatpush1.bf16.msra.mxu0 0
    %1566 = vmatprep.subr.bf16.mxu0 0
    %1567 = vmatpush1.bf16.msra.mxu0 0
    %1568 = vmatprep.subr.bf16.mxu0 0
    %1569 = vmatpush1.bf16.msra.mxu0 0
    %1570 = vmatprep.subr.bf16.mxu0 0
    %1571 = vmatpush1.bf16.msra.mxu0 0
    %1572 = vmatprep.subr.bf16.mxu0 0
    %1573 = vmatpush1.bf16.msra.mxu0 0
    %1574 = vmatprep.subr.bf16.mxu0 0
    %1575 = vmatpush1.bf16.msra.mxu0 0
    %1576 = vmatprep.mubr.bf16.mxu0 0
    %1577 = vmatmul.mubr.bf16.gmra.mrb[0].mxu0 %v1536
    %v1578 = vpop.f32.mrb[0].mxu0
    %v1579 = vadd.f32 0.0, %v1578
    %v1580 = vpop.f32.mrb[0].mxu0
    %v1581 = vadd.f32 0.0, %v1580
    %v1582 = vpop.f32.mrb[0].mxu0
    %v1583 = vpop.f32.mrb[0].mxu0
    %1584 = vdwg.mxu0
    %1585 = vmatprep.subr.bf16.mxu0 %v658
    %1586 = vmatpush1.bf16.msra.mxu0 %v657
    %1587 = vmatprep.subr.bf16.mxu0 %v662
    %1588 = vmatpush1.bf16.msra.mxu0 %v661
    %1589 = vmatprep.subr.bf16.mxu0 %v666
    %1590 = vmatpush1.bf16.msra.mxu0 %v665
    %1591 = vmatprep.subr.bf16.mxu0 %v670
    %1592 = vmatpush1.bf16.msra.mxu0 %v669
    %1593 = vmatprep.subr.bf16.mxu0 %v674
    %1594 = vmatpush1.bf16.msra.mxu0 %v673
    %1595 = vmatprep.subr.bf16.mxu0 %v678
    %1596 = vmatpush1.bf16.msra.mxu0 %v677
    %1597 = vmatprep.subr.bf16.mxu0 %v682
    %1598 = vmatpush1.bf16.msra.mxu0 %v681
    %1599 = vmatprep.subr.bf16.mxu0 %v686
    %1600 = vmatpush1.bf16.msra.mxu0 %v685
    %1601 = vmatprep.subr.bf16.mxu0 0
    %1602 = vmatpush1.bf16.msra.mxu0 0
    %1603 = vmatprep.subr.bf16.mxu0 0
    %1604 = vmatpush1.bf16.msra.mxu0 0
    %1605 = vmatprep.subr.bf16.mxu0 0
    %1606 = vmatpush1.bf16.msra.mxu0 0
    %1607 = vmatprep.subr.bf16.mxu0 0
    %1608 = vmatpush1.bf16.msra.mxu0 0
    %1609 = vmatprep.subr.bf16.mxu0 0
    %1610 = vmatpush1.bf16.msra.mxu0 0
    %1611 = vmatprep.subr.bf16.mxu0 0
    %1612 = vmatpush1.bf16.msra.mxu0 0
    %1613 = vmatprep.subr.bf16.mxu0 0
    %1614 = vmatpush1.bf16.msra.mxu0 0
    %1615 = vmatprep.subr.bf16.mxu0 0
    %1616 = vmatpush1.bf16.msra.mxu0 0
    %1617 = vmatprep.mubr.bf16.mxu0 0
    %1618 = vmatmul.mubr.bf16.gmra.mrb[0].mxu0 %v1536
    %v1619 = vpop.f32.mrb[0].mxu0
    %v1620 = vadd.f32 0.0, %v1619
    %v1621 = vpop.f32.mrb[0].mxu0
    %v1622 = vadd.f32 0.0, %v1621
    %v1623 = vpop.f32.mrb[0].mxu0
    %v1624 = vpop.f32.mrb[0].mxu0
    %1625 = vdwg.mxu0
    %v1626 = vadd.f32 %v1540, %v1579
    %v1627 = vadd.f32 %v1541, %v1581
    %v1628 = vadd.f32 %v1542, %v1620
    %v1629 = vadd.f32 %v1543, %v1622
    %v1630 = vxor.u32 %v1626, 2147483648
    %v1631 = vmul.f32 %v1630, 1.442695
    %v1632 = vpow.pop %v1631
    %v1633 = vadd.f32 %v1632, 1.0
    %v1634 = vrcp.pop %v1633
    %v1635 = vmul.f32 1.0, %v1634
    %v1636 = vxor.u32 %v1627, 2147483648
    %v1637 = vmul.f32 %v1636, 1.442695
    %v1638 = vpow.pop %v1637
    %v1639 = vadd.f32 %v1638, 1.0
    %v1640 = vrcp.pop %v1639
    %v1641 = vmul.f32 1.0, %v1640
    %v1642 = vtanh.pop %v1628
    %v1643 = vxor.u32 %v1629, 2147483648
    %v1644 = vmul.f32 %v1643, 1.442695
    %v1645 = vpow.pop %v1644
    %v1646 = vadd.f32 %v1645, 1.0
    %v1647 = vrcp.pop %v1646
    %v1648 = vmul.f32 1.0, %v1647
    %v1649 = vmul.f32 %v1641, %v1533
    %v1650 = vmul.f32 %v1635, %v1642
    %v1651 = vadd.f32 %v1649, %v1650
    %v1652 = vtanh.pop %v1651
    %v1653 = vmul.f32 %v1648, %v1652
    %v1654 = vpack.c.bf16 %v1653, %v1653
    %s1655 = scalar_lea.vmem [#allocation11], 28
    %1656 = vst [vmem:[%s1655] sm:$0xf] %v1654
    %1657 = vst [vmem:[#allocation12] sm:$0xff] %v1653
    %1658 = vst [vmem:[#allocation14] sm:$0xff] %v1651
    %v1659 = vld [vmem:[#allocation11] sm:$0xf]
    %v1660 = vld [vmem:[#allocation11 + $0x4] sm:$0xf]
    %v1661 = vld [vmem:[#allocation11 + $0x8] sm:$0xf]
    %v1662 = vld [vmem:[#allocation11 + $0xc] sm:$0xf]
    %v1663 = vld [vmem:[#allocation11 + $0x10] sm:$0xf]
    %v1664 = vld [vmem:[#allocation11 + $0x14] sm:$0xf]
    %v1665 = vld [vmem:[#allocation11 + $0x18] sm:$0xf]
    %v1666 = vld [vmem:[#allocation11 + $0x1c] sm:$0xf]
    %s1667 = scalar_lea.vmem [#allocation3], 256
    %v1668 = vld [vmem:[%s1667] sm:$0xff]
    %v1669 = vld [vmem:[%s1667 + $0x8] sm:$0xff]
    %v1670 = vld [vmem:[%s1667 + $0x10] sm:$0xff]
    %v1671 = vld [vmem:[%s1667 + $0x18] sm:$0xff]
    %v1672 = vld [vmem:[%s1667 + $0x20] sm:$0xff]
    %v1673 = vld [vmem:[%s1667 + $0x28] sm:$0xff]
    %v1674 = vld [vmem:[%s1667 + $0x30] sm:$0xff]
    %v1675 = vld [vmem:[%s1667 + $0x38] sm:$0xff]
    %v1676 = vld [vmem:[%s1667 + $0x40] sm:$0xff]
    %v1677 = vld [vmem:[%s1667 + $0x48] sm:$0xff]
    %v1678 = vld [vmem:[%s1667 + $0x50] sm:$0xff]
    %v1679 = vld [vmem:[%s1667 + $0x58] sm:$0xff]
    %v1680 = vld [vmem:[%s1667 + $0x60] sm:$0xff]
    %v1681 = vld [vmem:[%s1667 + $0x68] sm:$0xff]
    %v1682 = vld [vmem:[%s1667 + $0x70] sm:$0xff]
    %v1683 = vld [vmem:[%s1667 + $0x78] sm:$0xff]
    %v1684 = vld [vmem:[%s1667 + $0x80] sm:$0xff]
    %v1685 = vld [vmem:[%s1667 + $0x88] sm:$0xff]
    %v1686 = vld [vmem:[%s1667 + $0x90] sm:$0xff]
    %v1687 = vld [vmem:[%s1667 + $0x98] sm:$0xff]
    %v1688 = vld [vmem:[%s1667 + $0xa0] sm:$0xff]
    %v1689 = vld [vmem:[%s1667 + $0xa8] sm:$0xff]
    %v1690 = vld [vmem:[%s1667 + $0xb0] sm:$0xff]
    %v1691 = vld [vmem:[%s1667 + $0xb8] sm:$0xff]
    %v1692 = vld [vmem:[%s1667 + $0xc0] sm:$0xff]
    %v1693 = vld [vmem:[%s1667 + $0xc8] sm:$0xff]
    %v1694 = vld [vmem:[%s1667 + $0xd0] sm:$0xff]
    %v1695 = vld [vmem:[%s1667 + $0xd8] sm:$0xff]
    %v1696 = vld [vmem:[%s1667 + $0xe0] sm:$0xff]
    %v1697 = vld [vmem:[%s1667 + $0xe8] sm:$0xff]
    %v1698 = vld [vmem:[%s1667 + $0xf0] sm:$0xff]
    %v1699 = vld [vmem:[%s1667 + $0xf8] sm:$0xff]
    %s1700 = scalar_lea.vmem %s3, 4
    %v1701 = vld [vmem:[%s1700] sm:$0xf]
    %v1703 = vlaneseq
    %v1704 = vshrl.u32 %v1703, 7
    %v1705 = vsub.s32 0, %v1704
    %v1706 = vrot.slane %v1701, %v1705
    %v1707 = vlaneseq
    %v1708 = vshrl.u32 %v1707, 7
    %v1709 = vsub.s32 1, %v1708
    %v1710 = vrot.slane %v1701, %v1709
    %v1711 = vlaneseq
    %v1712 = vshrl.u32 %v1711, 7
    %v1713 = vsub.s32 2, %v1712
    %v1714 = vrot.slane %v1701, %v1713
    %v1715 = vlaneseq
    %v1716 = vshrl.u32 %v1715, 7
    %v1717 = vsub.s32 3, %v1716
    %v1718 = vrot.slane %v1701, %v1717
    %v1731 = vunpack.c.l.b16 %v1659
    %v1732 = vunpack.c.l.b16 %v1660
    %v1733 = vunpack.c.l.b16 %v1661
    %v1734 = vunpack.c.l.b16 %v1662
    %v1735 = vunpack.c.l.b16 %v1663
    %v1736 = vunpack.c.l.b16 %v1664
    %v1737 = vunpack.c.l.b16 %v1665
    %v1738 = vunpack.c.l.b16 %v1666
    %v1739 = vpack.c.b16 %v1732, %v1731
    %v1740 = vpack.c.b16 %v1734, %v1733
    %v1741 = vpack.c.b16 %v1736, %v1735
    %v1742 = vpack.c.b16 %v1738, %v1737
    %v1779 = vunpack.c.l.b16 %v1668
    %v1780 = vunpack.c.h.b16 %v1668
    %v1781 = vunpack.c.l.b16 %v1669
    %v1782 = vunpack.c.h.b16 %v1669
    %v1783 = vunpack.c.l.b16 %v1670
    %v1784 = vunpack.c.h.b16 %v1670
    %v1785 = vunpack.c.l.b16 %v1671
    %v1786 = vunpack.c.h.b16 %v1671
    %v1787 = vunpack.c.l.b16 %v1672
    %v1788 = vunpack.c.h.b16 %v1672
    %v1789 = vunpack.c.l.b16 %v1673
    %v1790 = vunpack.c.h.b16 %v1673
    %v1791 = vunpack.c.l.b16 %v1674
    %v1792 = vunpack.c.h.b16 %v1674
    %v1793 = vunpack.c.l.b16 %v1675
    %v1794 = vunpack.c.h.b16 %v1675
    %v1795 = vunpack.c.l.b16 %v1676
    %v1796 = vunpack.c.h.b16 %v1676
    %v1797 = vunpack.c.l.b16 %v1677
    %v1798 = vunpack.c.h.b16 %v1677
    %v1799 = vunpack.c.l.b16 %v1678
    %v1800 = vunpack.c.h.b16 %v1678
    %v1801 = vunpack.c.l.b16 %v1679
    %v1802 = vunpack.c.h.b16 %v1679
    %v1803 = vunpack.c.l.b16 %v1680
    %v1804 = vunpack.c.h.b16 %v1680
    %v1805 = vunpack.c.l.b16 %v1681
    %v1806 = vunpack.c.h.b16 %v1681
    %v1807 = vunpack.c.l.b16 %v1682
    %v1808 = vunpack.c.h.b16 %v1682
    %v1809 = vunpack.c.l.b16 %v1683
    %v1810 = vunpack.c.h.b16 %v1683
    %v1811 = vunpack.c.l.b16 %v1684
    %v1812 = vunpack.c.h.b16 %v1684
    %v1813 = vunpack.c.l.b16 %v1685
    %v1814 = vunpack.c.h.b16 %v1685
    %v1815 = vunpack.c.l.b16 %v1686
    %v1816 = vunpack.c.h.b16 %v1686
    %v1817 = vunpack.c.l.b16 %v1687
    %v1818 = vunpack.c.h.b16 %v1687
    %v1819 = vunpack.c.l.b16 %v1688
    %v1820 = vunpack.c.h.b16 %v1688
    %v1821 = vunpack.c.l.b16 %v1689
    %v1822 = vunpack.c.h.b16 %v1689
    %v1823 = vunpack.c.l.b16 %v1690
    %v1824 = vunpack.c.h.b16 %v1690
    %v1825 = vunpack.c.l.b16 %v1691
    %v1826 = vunpack.c.h.b16 %v1691
    %v1827 = vunpack.c.l.b16 %v1692
    %v1828 = vunpack.c.h.b16 %v1692
    %v1829 = vunpack.c.l.b16 %v1693
    %v1830 = vunpack.c.h.b16 %v1693
    %v1831 = vunpack.c.l.b16 %v1694
    %v1832 = vunpack.c.h.b16 %v1694
    %v1833 = vunpack.c.l.b16 %v1695
    %v1834 = vunpack.c.h.b16 %v1695
    %v1835 = vunpack.c.l.b16 %v1696
    %v1836 = vunpack.c.h.b16 %v1696
    %v1837 = vunpack.c.l.b16 %v1697
    %v1838 = vunpack.c.h.b16 %v1697
    %v1839 = vunpack.c.l.b16 %v1698
    %v1840 = vunpack.c.h.b16 %v1698
    %v1841 = vunpack.c.l.b16 %v1699
    %v1842 = vunpack.c.h.b16 %v1699
    %v1843 = vpack.c.b16 %v1783, %v1779
    %v1844 = vpack.c.b16 %v1784, %v1780
    %v1845 = vpack.c.b16 %v1785, %v1781
    %v1846 = vpack.c.b16 %v1786, %v1782
    %v1847 = vpack.c.b16 %v1791, %v1787
    %v1848 = vpack.c.b16 %v1792, %v1788
    %v1849 = vpack.c.b16 %v1793, %v1789
    %v1850 = vpack.c.b16 %v1794, %v1790
    %v1851 = vpack.c.b16 %v1799, %v1795
    %v1852 = vpack.c.b16 %v1800, %v1796
    %v1853 = vpack.c.b16 %v1801, %v1797
    %v1854 = vpack.c.b16 %v1802, %v1798
    %v1855 = vpack.c.b16 %v1807, %v1803
    %v1856 = vpack.c.b16 %v1808, %v1804
    %v1857 = vpack.c.b16 %v1809, %v1805
    %v1858 = vpack.c.b16 %v1810, %v1806
    %v1859 = vpack.c.b16 %v1815, %v1811
    %v1860 = vpack.c.b16 %v1816, %v1812
    %v1861 = vpack.c.b16 %v1817, %v1813
    %v1862 = vpack.c.b16 %v1818, %v1814
    %v1863 = vpack.c.b16 %v1823, %v1819
    %v1864 = vpack.c.b16 %v1824, %v1820
    %v1865 = vpack.c.b16 %v1825, %v1821
    %v1866 = vpack.c.b16 %v1826, %v1822
    %v1867 = vpack.c.b16 %v1831, %v1827
    %v1868 = vpack.c.b16 %v1832, %v1828
    %v1869 = vpack.c.b16 %v1833, %v1829
    %v1870 = vpack.c.b16 %v1834, %v1830
    %v1871 = vpack.c.b16 %v1839, %v1835
    %v1872 = vpack.c.b16 %v1840, %v1836
    %v1873 = vpack.c.b16 %v1841, %v1837
    %v1874 = vpack.c.b16 %v1842, %v1838
    %1907 = vmatprep.subr.bf16.mxu0 %v1844
    %1908 = vmatpush1.bf16.msra.mxu0 %v1843
    %1909 = vmatprep.subr.bf16.mxu0 %v1848
    %1910 = vmatpush1.bf16.msra.mxu0 %v1847
    %1911 = vmatprep.subr.bf16.mxu0 %v1852
    %1912 = vmatpush1.bf16.msra.mxu0 %v1851
    %1913 = vmatprep.subr.bf16.mxu0 %v1856
    %1914 = vmatpush1.bf16.msra.mxu0 %v1855
    %1915 = vmatprep.subr.bf16.mxu0 %v1860
    %1916 = vmatpush1.bf16.msra.mxu0 %v1859
    %1917 = vmatprep.subr.bf16.mxu0 %v1864
    %1918 = vmatpush1.bf16.msra.mxu0 %v1863
    %1919 = vmatprep.subr.bf16.mxu0 %v1868
    %1920 = vmatpush1.bf16.msra.mxu0 %v1867
    %1921 = vmatprep.subr.bf16.mxu0 %v1872
    %1922 = vmatpush1.bf16.msra.mxu0 %v1871
    %1923 = vmatprep.subr.bf16.mxu0 0
    %1924 = vmatpush1.bf16.msra.mxu0 0
    %1925 = vmatprep.subr.bf16.mxu0 0
    %1926 = vmatpush1.bf16.msra.mxu0 0
    %1927 = vmatprep.subr.bf16.mxu0 0
    %1928 = vmatpush1.bf16.msra.mxu0 0
    %1929 = vmatprep.subr.bf16.mxu0 0
    %1930 = vmatpush1.bf16.msra.mxu0 0
    %1931 = vmatprep.subr.bf16.mxu0 0
    %1932 = vmatpush1.bf16.msra.mxu0 0
    %1933 = vmatprep.subr.bf16.mxu0 0
    %1934 = vmatpush1.bf16.msra.mxu0 0
    %1935 = vmatprep.subr.bf16.mxu0 0
    %1936 = vmatpush1.bf16.msra.mxu0 0
    %1937 = vmatprep.subr.bf16.mxu0 0
    %1938 = vmatpush1.bf16.msra.mxu0 0
    %1939 = vmatprep.mubr.bf16.mxu0 0
    %1940 = vmatmul.mubr.bf16.gmra.mrb[0].mxu0 %v1739
    %v1941 = vpop.f32.mrb[0].mxu0
    %v1942 = vadd.f32 %v1706, %v1941
    %v1943 = vpop.f32.mrb[0].mxu0
    %v1944 = vadd.f32 %v1710, %v1943
    %v1945 = vpop.f32.mrb[0].mxu0
    %v1946 = vadd.f32 %v1706, %v1945
    %v1947 = vpop.f32.mrb[0].mxu0
    %v1948 = vadd.f32 %v1710, %v1947
    %1949 = vmatprep.mubr.bf16.mxu0 0
    %1950 = vmatmul.mubr.bf16.gmra.mrb[0].mxu0 %v1740
    %v1951 = vpop.f32.mrb[0].mxu0
    %v1952 = vadd.f32 %v1706, %v1951
    %v1953 = vpop.f32.mrb[0].mxu0
    %v1954 = vadd.f32 %v1710, %v1953
    %v1955 = vpop.f32.mrb[0].mxu0
    %v1956 = vadd.f32 %v1706, %v1955
    %v1957 = vpop.f32.mrb[0].mxu0
    %v1958 = vadd.f32 %v1710, %v1957
    %1959 = vmatprep.mubr.bf16.mxu0 0
    %1960 = vmatmul.mubr.bf16.gmra.mrb[0].mxu0 %v1741
    %v1961 = vpop.f32.mrb[0].mxu0
    %v1962 = vadd.f32 %v1706, %v1961
    %v1963 = vpop.f32.mrb[0].mxu0
    %v1964 = vadd.f32 %v1710, %v1963
    %v1965 = vpop.f32.mrb[0].mxu0
    %v1966 = vadd.f32 %v1706, %v1965
    %v1967 = vpop.f32.mrb[0].mxu0
    %v1968 = vadd.f32 %v1710, %v1967
    %1969 = vmatprep.mubr.bf16.mxu0 0
    %1970 = vmatmul.mubr.bf16.gmra.mrb[0].mxu0 %v1742
    %v1971 = vpop.f32.mrb[0].mxu0
    %v1972 = vadd.f32 %v1706, %v1971
    %v1973 = vpop.f32.mrb[0].mxu0
    %v1974 = vadd.f32 %v1710, %v1973
    %v1975 = vpop.f32.mrb[0].mxu0
    %v1976 = vadd.f32 %v1706, %v1975
    %v1977 = vpop.f32.mrb[0].mxu0
    %v1978 = vadd.f32 %v1710, %v1977
    %1979 = vdwg.mxu0
    %1980 = vmatprep.subr.bf16.mxu0 %v1846
    %1981 = vmatpush1.bf16.msra.mxu0 %v1845
    %1982 = vmatprep.subr.bf16.mxu0 %v1850
    %1983 = vmatpush1.bf16.msra.mxu0 %v1849
    %1984 = vmatprep.subr.bf16.mxu0 %v1854
    %1985 = vmatpush1.bf16.msra.mxu0 %v1853
    %1986 = vmatprep.subr.bf16.mxu0 %v1858
    %1987 = vmatpush1.bf16.msra.mxu0 %v1857
    %1988 = vmatprep.subr.bf16.mxu0 %v1862
    %1989 = vmatpush1.bf16.msra.mxu0 %v1861
    %1990 = vmatprep.subr.bf16.mxu0 %v1866
    %1991 = vmatpush1.bf16.msra.mxu0 %v1865
    %1992 = vmatprep.subr.bf16.mxu0 %v1870
    %1993 = vmatpush1.bf16.msra.mxu0 %v1869
    %1994 = vmatprep.subr.bf16.mxu0 %v1874
    %1995 = vmatpush1.bf16.msra.mxu0 %v1873
    %1996 = vmatprep.subr.bf16.mxu0 0
    %1997 = vmatpush1.bf16.msra.mxu0 0
    %1998 = vmatprep.subr.bf16.mxu0 0
    %1999 = vmatpush1.bf16.msra.mxu0 0
    %2000 = vmatprep.subr.bf16.mxu0 0
    %2001 = vmatpush1.bf16.msra.mxu0 0
    %2002 = vmatprep.subr.bf16.mxu0 0
    %2003 = vmatpush1.bf16.msra.mxu0 0
    %2004 = vmatprep.subr.bf16.mxu0 0
    %2005 = vmatpush1.bf16.msra.mxu0 0
    %2006 = vmatprep.subr.bf16.mxu0 0
    %2007 = vmatpush1.bf16.msra.mxu0 0
    %2008 = vmatprep.subr.bf16.mxu0 0
    %2009 = vmatpush1.bf16.msra.mxu0 0
    %2010 = vmatprep.subr.bf16.mxu0 0
    %2011 = vmatpush1.bf16.msra.mxu0 0
    %2012 = vmatprep.mubr.bf16.mxu0 0
    %2013 = vmatmul.mubr.bf16.gmra.mrb[0].mxu0 %v1739
    %v2014 = vpop.f32.mrb[0].mxu0
    %v2015 = vadd.f32 %v1714, %v2014
    %v2016 = vpop.f32.mrb[0].mxu0
    %v2017 = vadd.f32 %v1718, %v2016
    %v2018 = vpop.f32.mrb[0].mxu0
    %v2019 = vadd.f32 %v1714, %v2018
    %v2020 = vpop.f32.mrb[0].mxu0
    %v2021 = vadd.f32 %v1718, %v2020
    %2022 = vmatprep.mubr.bf16.mxu0 0
    %2023 = vmatmul.mubr.bf16.gmra.mrb[0].mxu0 %v1740
    %v2024 = vpop.f32.mrb[0].mxu0
    %v2025 = vadd.f32 %v1714, %v2024
    %v2026 = vpop.f32.mrb[0].mxu0
    %v2027 = vadd.f32 %v1718, %v2026
    %v2028 = vpop.f32.mrb[0].mxu0
    %v2029 = vadd.f32 %v1714, %v2028
    %v2030 = vpop.f32.mrb[0].mxu0
    %v2031 = vadd.f32 %v1718, %v2030
    %2032 = vmatprep.mubr.bf16.mxu0 0
    %2033 = vmatmul.mubr.bf16.gmra.mrb[0].mxu0 %v1741
    %v2034 = vpop.f32.mrb[0].mxu0
    %v2035 = vadd.f32 %v1714, %v2034
    %v2036 = vpop.f32.mrb[0].mxu0
    %v2037 = vadd.f32 %v1718, %v2036
    %v2038 = vpop.f32.mrb[0].mxu0
    %v2039 = vadd.f32 %v1714, %v2038
    %v2040 = vpop.f32.mrb[0].mxu0
    %v2041 = vadd.f32 %v1718, %v2040
    %2042 = vmatprep.mubr.bf16.mxu0 0
    %2043 = vmatmul.mubr.bf16.gmra.mrb[0].mxu0 %v1742
    %v2044 = vpop.f32.mrb[0].mxu0
    %v2045 = vadd.f32 %v1714, %v2044
    %v2046 = vpop.f32.mrb[0].mxu0
    %v2047 = vadd.f32 %v1718, %v2046
    %v2048 = vpop.f32.mrb[0].mxu0
    %v2049 = vadd.f32 %v1714, %v2048
    %v2050 = vpop.f32.mrb[0].mxu0
    %v2051 = vadd.f32 %v1718, %v2050
    %2052 = vdwg.mxu0
    %2053 = vst [vmem:[#allocation2] sm:$0xff] %v1942
    %2054 = vst [vmem:[#allocation2 + $0x8] sm:$0xff] %v1944
    %2055 = vst [vmem:[#allocation2 + $0x10] sm:$0xff] %v2015
    %2056 = vst [vmem:[#allocation2 + $0x18] sm:$0xff] %v2017
    %2057 = vst [vmem:[#allocation2 + $0x20] sm:$0xff] %v1946
    %2058 = vst [vmem:[#allocation2 + $0x28] sm:$0xff] %v1948
    %2059 = vst [vmem:[#allocation2 + $0x30] sm:$0xff] %v2019
    %2060 = vst [vmem:[#allocation2 + $0x38] sm:$0xff] %v2021
    %2061 = vst [vmem:[#allocation2 + $0x40] sm:$0xff] %v1952
    %2062 = vst [vmem:[#allocation2 + $0x48] sm:$0xff] %v1954
    %2063 = vst [vmem:[#allocation2 + $0x50] sm:$0xff] %v2025
    %2064 = vst [vmem:[#allocation2 + $0x58] sm:$0xff] %v2027
    %2065 = vst [vmem:[#allocation2 + $0x60] sm:$0xff] %v1956
    %2066 = vst [vmem:[#allocation2 + $0x68] sm:$0xff] %v1958
    %2067 = vst [vmem:[#allocation2 + $0x70] sm:$0xff] %v2029
    %2068 = vst [vmem:[#allocation2 + $0x78] sm:$0xff] %v2031
    %2069 = vst [vmem:[#allocation2 + $0x80] sm:$0xff] %v1962
    %2070 = vst [vmem:[#allocation2 + $0x88] sm:$0xff] %v1964
    %2071 = vst [vmem:[#allocation2 + $0x90] sm:$0xff] %v2035
    %2072 = vst [vmem:[#allocation2 + $0x98] sm:$0xff] %v2037
    %2073 = vst [vmem:[#allocation2 + $0xa0] sm:$0xff] %v1966
    %2074 = vst [vmem:[#allocation2 + $0xa8] sm:$0xff] %v1968
    %2075 = vst [vmem:[#allocation2 + $0xb0] sm:$0xff] %v2039
    %2076 = vst [vmem:[#allocation2 + $0xb8] sm:$0xff] %v2041
    %2077 = vst [vmem:[#allocation2 + $0xc0] sm:$0xff] %v1972
    %2078 = vst [vmem:[#allocation2 + $0xc8] sm:$0xff] %v1974
    %2079 = vst [vmem:[#allocation2 + $0xd0] sm:$0xff] %v2045
    %2080 = vst [vmem:[#allocation2 + $0xd8] sm:$0xff] %v2047
    %2081 = vst [vmem:[#allocation2 + $0xe0] sm:$0xff] %v1976
    %2082 = vst [vmem:[#allocation2 + $0xe8] sm:$0xff] %v1978
    %2083 = vst [vmem:[#allocation2 + $0xf0] sm:$0xff] %v2049
    %2084 = vst [vmem:[#allocation2 + $0xf8] sm:$0xff] %v2051
    %s2085 = scalar_lea.vmem [#allocation6], 256
    %v2086 = vld [vmem:[%s2085] sm:$0xff]
    %v2087 = vld [vmem:[%s2085 + $0x8] sm:$0xff]
    %v2088 = vld [vmem:[%s2085 + $0x10] sm:$0xff]
    %v2089 = vld [vmem:[%s2085 + $0x18] sm:$0xff]
    %v2090 = vld [vmem:[%s2085 + $0x20] sm:$0xff]
    %v2091 = vld [vmem:[%s2085 + $0x28] sm:$0xff]
    %v2092 = vld [vmem:[%s2085 + $0x30] sm:$0xff]
    %v2093 = vld [vmem:[%s2085 + $0x38] sm:$0xff]
    %v2094 = vld [vmem:[%s2085 + $0x40] sm:$0xff]
    %v2095 = vld [vmem:[%s2085 + $0x48] sm:$0xff]
    %v2096 = vld [vmem:[%s2085 + $0x50] sm:$0xff]
    %v2097 = vld [vmem:[%s2085 + $0x58] sm:$0xff]
    %v2098 = vld [vmem:[%s2085 + $0x60] sm:$0xff]
    %v2099 = vld [vmem:[%s2085 + $0x68] sm:$0xff]
    %v2100 = vld [vmem:[%s2085 + $0x70] sm:$0xff]
    %v2101 = vld [vmem:[%s2085 + $0x78] sm:$0xff]
    %v2102 = vld [vmem:[%s2085 + $0x80] sm:$0xff]
    %v2103 = vld [vmem:[%s2085 + $0x88] sm:$0xff]
    %v2104 = vld [vmem:[%s2085 + $0x90] sm:$0xff]
    %v2105 = vld [vmem:[%s2085 + $0x98] sm:$0xff]
    %v2106 = vld [vmem:[%s2085 + $0xa0] sm:$0xff]
    %v2107 = vld [vmem:[%s2085 + $0xa8] sm:$0xff]
    %v2108 = vld [vmem:[%s2085 + $0xb0] sm:$0xff]
    %v2109 = vld [vmem:[%s2085 + $0xb8] sm:$0xff]
    %v2110 = vld [vmem:[%s2085 + $0xc0] sm:$0xff]
    %v2111 = vld [vmem:[%s2085 + $0xc8] sm:$0xff]
    %v2112 = vld [vmem:[%s2085 + $0xd0] sm:$0xff]
    %v2113 = vld [vmem:[%s2085 + $0xd8] sm:$0xff]
    %v2114 = vld [vmem:[%s2085 + $0xe0] sm:$0xff]
    %v2115 = vld [vmem:[%s2085 + $0xe8] sm:$0xff]
    %v2116 = vld [vmem:[%s2085 + $0xf0] sm:$0xff]
    %v2117 = vld [vmem:[%s2085 + $0xf8] sm:$0xff]
    %s2118 = scalar_lea.vmem [#allocation12], 8
    %v2119 = vld [vmem:[%s2118] sm:$0xff]
    %s2120 = scalar_lea.vmem [#allocation14], 8
    %v2121 = vld [vmem:[%s2120] sm:$0xff]
    %v2122 = vld [vmem:[#allocation2] sm:$0xff]
    %v2123 = vld [vmem:[#allocation2 + $0x8] sm:$0xff]
    %v2124 = vld [vmem:[#allocation2 + $0x10] sm:$0xff]
    %v2125 = vld [vmem:[#allocation2 + $0x18] sm:$0xff]
    %v2126 = vpack.c.bf16 %v2119, %v2119
    %v2159 = vunpack.c.l.b16 %v2086
    %v2160 = vunpack.c.h.b16 %v2086
    %v2161 = vunpack.c.l.b16 %v2087
    %v2162 = vunpack.c.h.b16 %v2087
    %v2163 = vunpack.c.l.b16 %v2088
    %v2164 = vunpack.c.h.b16 %v2088
    %v2165 = vunpack.c.l.b16 %v2089
    %v2166 = vunpack.c.h.b16 %v2089
    %v2167 = vunpack.c.l.b16 %v2090
    %v2168 = vunpack.c.h.b16 %v2090
    %v2169 = vunpack.c.l.b16 %v2091
    %v2170 = vunpack.c.h.b16 %v2091
    %v2171 = vunpack.c.l.b16 %v2092
    %v2172 = vunpack.c.h.b16 %v2092
    %v2173 = vunpack.c.l.b16 %v2093
    %v2174 = vunpack.c.h.b16 %v2093
    %v2175 = vunpack.c.l.b16 %v2094
    %v2176 = vunpack.c.h.b16 %v2094
    %v2177 = vunpack.c.l.b16 %v2095
    %v2178 = vunpack.c.h.b16 %v2095
    %v2179 = vunpack.c.l.b16 %v2096
    %v2180 = vunpack.c.h.b16 %v2096
    %v2181 = vunpack.c.l.b16 %v2097
    %v2182 = vunpack.c.h.b16 %v2097
    %v2183 = vunpack.c.l.b16 %v2098
    %v2184 = vunpack.c.h.b16 %v2098
    %v2185 = vunpack.c.l.b16 %v2099
    %v2186 = vunpack.c.h.b16 %v2099
    %v2187 = vunpack.c.l.b16 %v2100
    %v2188 = vunpack.c.h.b16 %v2100
    %v2189 = vunpack.c.l.b16 %v2101
    %v2190 = vunpack.c.h.b16 %v2101
    %v2191 = vunpack.c.l.b16 %v2102
    %v2192 = vunpack.c.h.b16 %v2102
    %v2193 = vunpack.c.l.b16 %v2103
    %v2194 = vunpack.c.h.b16 %v2103
    %v2195 = vunpack.c.l.b16 %v2104
    %v2196 = vunpack.c.h.b16 %v2104
    %v2197 = vunpack.c.l.b16 %v2105
    %v2198 = vunpack.c.h.b16 %v2105
    %v2199 = vunpack.c.l.b16 %v2106
    %v2200 = vunpack.c.h.b16 %v2106
    %v2201 = vunpack.c.l.b16 %v2107
    %v2202 = vunpack.c.h.b16 %v2107
    %v2203 = vunpack.c.l.b16 %v2108
    %v2204 = vunpack.c.h.b16 %v2108
    %v2205 = vunpack.c.l.b16 %v2109
    %v2206 = vunpack.c.h.b16 %v2109
    %v2207 = vunpack.c.l.b16 %v2110
    %v2208 = vunpack.c.h.b16 %v2110
    %v2209 = vunpack.c.l.b16 %v2111
    %v2210 = vunpack.c.h.b16 %v2111
    %v2211 = vunpack.c.l.b16 %v2112
    %v2212 = vunpack.c.h.b16 %v2112
    %v2213 = vunpack.c.l.b16 %v2113
    %v2214 = vunpack.c.h.b16 %v2113
    %v2215 = vunpack.c.l.b16 %v2114
    %v2216 = vunpack.c.h.b16 %v2114
    %v2217 = vunpack.c.l.b16 %v2115
    %v2218 = vunpack.c.h.b16 %v2115
    %v2219 = vunpack.c.l.b16 %v2116
    %v2220 = vunpack.c.h.b16 %v2116
    %v2221 = vunpack.c.l.b16 %v2117
    %v2222 = vunpack.c.h.b16 %v2117
    %v2223 = vpack.c.b16 %v2163, %v2159
    %v2224 = vpack.c.b16 %v2164, %v2160
    %v2225 = vpack.c.b16 %v2165, %v2161
    %v2226 = vpack.c.b16 %v2166, %v2162
    %v2227 = vpack.c.b16 %v2171, %v2167
    %v2228 = vpack.c.b16 %v2172, %v2168
    %v2229 = vpack.c.b16 %v2173, %v2169
    %v2230 = vpack.c.b16 %v2174, %v2170
    %v2231 = vpack.c.b16 %v2179, %v2175
    %v2232 = vpack.c.b16 %v2180, %v2176
    %v2233 = vpack.c.b16 %v2181, %v2177
    %v2234 = vpack.c.b16 %v2182, %v2178
    %v2235 = vpack.c.b16 %v2187, %v2183
    %v2236 = vpack.c.b16 %v2188, %v2184
    %v2237 = vpack.c.b16 %v2189, %v2185
    %v2238 = vpack.c.b16 %v2190, %v2186
    %v2239 = vpack.c.b16 %v2195, %v2191
    %v2240 = vpack.c.b16 %v2196, %v2192
    %v2241 = vpack.c.b16 %v2197, %v2193
    %v2242 = vpack.c.b16 %v2198, %v2194
    %v2243 = vpack.c.b16 %v2203, %v2199
    %v2244 = vpack.c.b16 %v2204, %v2200
    %v2245 = vpack.c.b16 %v2205, %v2201
    %v2246 = vpack.c.b16 %v2206, %v2202
    %v2247 = vpack.c.b16 %v2211, %v2207
    %v2248 = vpack.c.b16 %v2212, %v2208
    %v2249 = vpack.c.b16 %v2213, %v2209
    %v2250 = vpack.c.b16 %v2214, %v2210
    %v2251 = vpack.c.b16 %v2219, %v2215
    %v2252 = vpack.c.b16 %v2220, %v2216
    %v2253 = vpack.c.b16 %v2221, %v2217
    %v2254 = vpack.c.b16 %v2222, %v2218
    %2287 = vmatprep.subr.bf16.mxu0 %v2224
    %2288 = vmatpush1.bf16.msra.mxu0 %v2223
    %2289 = vmatprep.subr.bf16.mxu0 %v2228
    %2290 = vmatpush1.bf16.msra.mxu0 %v2227
    %2291 = vmatprep.subr.bf16.mxu0 %v2232
    %2292 = vmatpush1.bf16.msra.mxu0 %v2231
    %2293 = vmatprep.subr.bf16.mxu0 %v2236
    %2294 = vmatpush1.bf16.msra.mxu0 %v2235
    %2295 = vmatprep.subr.bf16.mxu0 %v2240
    %2296 = vmatpush1.bf16.msra.mxu0 %v2239
    %2297 = vmatprep.subr.bf16.mxu0 %v2244
    %2298 = vmatpush1.bf16.msra.mxu0 %v2243
    %2299 = vmatprep.subr.bf16.mxu0 %v2248
    %2300 = vmatpush1.bf16.msra.mxu0 %v2247
    %2301 = vmatprep.subr.bf16.mxu0 %v2252
    %2302 = vmatpush1.bf16.msra.mxu0 %v2251
    %2303 = vmatprep.subr.bf16.mxu0 0
    %2304 = vmatpush1.bf16.msra.mxu0 0
    %2305 = vmatprep.subr.bf16.mxu0 0
    %2306 = vmatpush1.bf16.msra.mxu0 0
    %2307 = vmatprep.subr.bf16.mxu0 0
    %2308 = vmatpush1.bf16.msra.mxu0 0
    %2309 = vmatprep.subr.bf16.mxu0 0
    %2310 = vmatpush1.bf16.msra.mxu0 0
    %2311 = vmatprep.subr.bf16.mxu0 0
    %2312 = vmatpush1.bf16.msra.mxu0 0
    %2313 = vmatprep.subr.bf16.mxu0 0
    %2314 = vmatpush1.bf16.msra.mxu0 0
    %2315 = vmatprep.subr.bf16.mxu0 0
    %2316 = vmatpush1.bf16.msra.mxu0 0
    %2317 = vmatprep.subr.bf16.mxu0 0
    %2318 = vmatpush1.bf16.msra.mxu0 0
    %2319 = vmatprep.mubr.bf16.mxu0 0
    %2320 = vmatmul.mubr.bf16.gmra.mrb[0].mxu0 %v2126
    %v2321 = vpop.f32.mrb[0].mxu0
    %v2322 = vadd.f32 0.0, %v2321
    %v2323 = vpop.f32.mrb[0].mxu0
    %v2324 = vadd.f32 0.0, %v2323
    %v2325 = vpop.f32.mrb[0].mxu0
    %v2326 = vpop.f32.mrb[0].mxu0
    %2327 = vdwg.mxu0
    %2328 = vmatprep.subr.bf16.mxu0 %v2226
    %2329 = vmatpush1.bf16.msra.mxu0 %v2225
    %2330 = vmatprep.subr.bf16.mxu0 %v2230
    %2331 = vmatpush1.bf16.msra.mxu0 %v2229
    %2332 = vmatprep.subr.bf16.mxu0 %v2234
    %2333 = vmatpush1.bf16.msra.mxu0 %v2233
    %2334 = vmatprep.subr.bf16.mxu0 %v2238
    %2335 = vmatpush1.bf16.msra.mxu0 %v2237
    %2336 = vmatprep.subr.bf16.mxu0 %v2242
    %2337 = vmatpush1.bf16.msra.mxu0 %v2241
    %2338 = vmatprep.subr.bf16.mxu0 %v2246
    %2339 = vmatpush1.bf16.msra.mxu0 %v2245
    %2340 = vmatprep.subr.bf16.mxu0 %v2250
    %2341 = vmatpush1.bf16.msra.mxu0 %v2249
    %2342 = vmatprep.subr.bf16.mxu0 %v2254
    %2343 = vmatpush1.bf16.msra.mxu0 %v2253
    %2344 = vmatprep.subr.bf16.mxu0 0
    %2345 = vmatpush1.bf16.msra.mxu0 0
    %2346 = vmatprep.subr.bf16.mxu0 0
    %2347 = vmatpush1.bf16.msra.mxu0 0
    %2348 = vmatprep.subr.bf16.mxu0 0
    %2349 = vmatpush1.bf16.msra.mxu0 0
    %2350 = vmatprep.subr.bf16.mxu0 0
    %2351 = vmatpush1.bf16.msra.mxu0 0
    %2352 = vmatprep.subr.bf16.mxu0 0
    %2353 = vmatpush1.bf16.msra.mxu0 0
    %2354 = vmatprep.subr.bf16.mxu0 0
    %2355 = vmatpush1.bf16.msra.mxu0 0
    %2356 = vmatprep.subr.bf16.mxu0 0
    %2357 = vmatpush1.bf16.msra.mxu0 0
    %2358 = vmatprep.subr.bf16.mxu0 0
    %2359 = vmatpush1.bf16.msra.mxu0 0
    %2360 = vmatprep.mubr.bf16.mxu0 0
    %2361 = vmatmul.mubr.bf16.gmra.mrb[0].mxu0 %v2126
    %v2362 = vpop.f32.mrb[0].mxu0
    %v2363 = vadd.f32 0.0, %v2362
    %v2364 = vpop.f32.mrb[0].mxu0
    %v2365 = vadd.f32 0.0, %v2364
    %v2366 = vpop.f32.mrb[0].mxu0
    %v2367 = vpop.f32.mrb[0].mxu0
    %2368 = vdwg.mxu0
    %v2369 = vadd.f32 %v2122, %v2322
    %v2370 = vadd.f32 %v2123, %v2324
    %v2371 = vadd.f32 %v2124, %v2363
    %v2372 = vadd.f32 %v2125, %v2365
    %v2373 = vxor.u32 %v2369, 2147483648
    %v2374 = vmul.f32 %v2373, 1.442695
    %v2375 = vpow.pop %v2374
    %v2376 = vadd.f32 %v2375, 1.0
    %v2377 = vrcp.pop %v2376
    %v2378 = vmul.f32 1.0, %v2377
    %v2379 = vxor.u32 %v2370, 2147483648
    %v2380 = vmul.f32 %v2379, 1.442695
    %v2381 = vpow.pop %v2380
    %v2382 = vadd.f32 %v2381, 1.0
    %v2383 = vrcp.pop %v2382
    %v2384 = vmul.f32 1.0, %v2383
    %v2385 = vtanh.pop %v2371
    %v2386 = vxor.u32 %v2372, 2147483648
    %v2387 = vmul.f32 %v2386, 1.442695
    %v2388 = vpow.pop %v2387
    %v2389 = vadd.f32 %v2388, 1.0
    %v2390 = vrcp.pop %v2389
    %v2391 = vmul.f32 1.0, %v2390
    %v2392 = vmul.f32 %v2384, %v2121
    %v2393 = vmul.f32 %v2378, %v2385
    %v2394 = vadd.f32 %v2392, %v2393
    %v2395 = vtanh.pop %v2394
    %v2396 = vmul.f32 %v2391, %v2395
    %v2397 = vpack.c.bf16 %v2396, %v2396
    %2398 = vst [vmem:[#allocation11] sm:$0xf] %v2397
    %v2399 = vld [vmem:[%s831] sm:$0xff]
    %v2400 = vld [vmem:[%s831 + $0x8] sm:$0xff]
    %v2401 = vld [vmem:[%s831 + $0x10] sm:$0xff]
    %v2402 = vld [vmem:[%s831 + $0x18] sm:$0xff]
    %2403 = vmatprep.subr.bf16.mxu0 %v2224
    %2404 = vmatpush1.bf16.msra.mxu0 %v2223
    %2405 = vmatprep.subr.bf16.mxu0 %v2228
    %2406 = vmatpush1.bf16.msra.mxu0 %v2227
    %2407 = vmatprep.subr.bf16.mxu0 %v2232
    %2408 = vmatpush1.bf16.msra.mxu0 %v2231
    %2409 = vmatprep.subr.bf16.mxu0 %v2236
    %2410 = vmatpush1.bf16.msra.mxu0 %v2235
    %2411 = vmatprep.subr.bf16.mxu0 %v2240
    %2412 = vmatpush1.bf16.msra.mxu0 %v2239
    %2413 = vmatprep.subr.bf16.mxu0 %v2244
    %2414 = vmatpush1.bf16.msra.mxu0 %v2243
    %2415 = vmatprep.subr.bf16.mxu0 %v2248
    %2416 = vmatpush1.bf16.msra.mxu0 %v2247
    %2417 = vmatprep.subr.bf16.mxu0 %v2252
    %2418 = vmatpush1.bf16.msra.mxu0 %v2251
    %2419 = vmatprep.subr.bf16.mxu0 0
    %2420 = vmatpush1.bf16.msra.mxu0 0
    %2421 = vmatprep.subr.bf16.mxu0 0
    %2422 = vmatpush1.bf16.msra.mxu0 0
    %2423 = vmatprep.subr.bf16.mxu0 0
    %2424 = vmatpush1.bf16.msra.mxu0 0
    %2425 = vmatprep.subr.bf16.mxu0 0
    %2426 = vmatpush1.bf16.msra.mxu0 0
    %2427 = vmatprep.subr.bf16.mxu0 0
    %2428 = vmatpush1.bf16.msra.mxu0 0
    %2429 = vmatprep.subr.bf16.mxu0 0
    %2430 = vmatpush1.bf16.msra.mxu0 0
    %2431 = vmatprep.subr.bf16.mxu0 0
    %2432 = vmatpush1.bf16.msra.mxu0 0
    %2433 = vmatprep.subr.bf16.mxu0 0
    %2434 = vmatpush1.bf16.msra.mxu0 0
    %2435 = vmatprep.mubr.bf16.mxu0 0
    %2436 = vmatmul.mubr.bf16.gmra.mrb[0].mxu0 %v2397
    %v2437 = vpop.f32.mrb[0].mxu0
    %v2438 = vadd.f32 0.0, %v2437
    %v2439 = vpop.f32.mrb[0].mxu0
    %v2440 = vadd.f32 0.0, %v2439
    %v2441 = vpop.f32.mrb[0].mxu0
    %v2442 = vpop.f32.mrb[0].mxu0
    %2443 = vdwg.mxu0
    %2444 = vmatprep.subr.bf16.mxu0 %v2226
    %2445 = vmatpush1.bf16.msra.mxu0 %v2225
    %2446 = vmatprep.subr.bf16.mxu0 %v2230
    %2447 = vmatpush1.bf16.msra.mxu0 %v2229
    %2448 = vmatprep.subr.bf16.mxu0 %v2234
    %2449 = vmatpush1.bf16.msra.mxu0 %v2233
    %2450 = vmatprep.subr.bf16.mxu0 %v2238
    %2451 = vmatpush1.bf16.msra.mxu0 %v2237
    %2452 = vmatprep.subr.bf16.mxu0 %v2242
    %2453 = vmatpush1.bf16.msra.mxu0 %v2241
    %2454 = vmatprep.subr.bf16.mxu0 %v2246
    %2455 = vmatpush1.bf16.msra.mxu0 %v2245
    %2456 = vmatprep.subr.bf16.mxu0 %v2250
    %2457 = vmatpush1.bf16.msra.mxu0 %v2249
    %2458 = vmatprep.subr.bf16.mxu0 %v2254
    %2459 = vmatpush1.bf16.msra.mxu0 %v2253
    %2460 = vmatprep.subr.bf16.mxu0 0
    %2461 = vmatpush1.bf16.msra.mxu0 0
    %2462 = vmatprep.subr.bf16.mxu0 0
    %2463 = vmatpush1.bf16.msra.mxu0 0
    %2464 = vmatprep.subr.bf16.mxu0 0
    %2465 = vmatpush1.bf16.msra.mxu0 0
    %2466 = vmatprep.subr.bf16.mxu0 0
    %2467 = vmatpush1.bf16.msra.mxu0 0
    %2468 = vmatprep.subr.bf16.mxu0 0
    %2469 = vmatpush1.bf16.msra.mxu0 0
    %2470 = vmatprep.subr.bf16.mxu0 0
    %2471 = vmatpush1.bf16.msra.mxu0 0
    %2472 = vmatprep.subr.bf16.mxu0 0
    %2473 = vmatpush1.bf16.msra.mxu0 0
    %2474 = vmatprep.subr.bf16.mxu0 0
    %2475 = vmatpush1.bf16.msra.mxu0 0
    %2476 = vmatprep.mubr.bf16.mxu0 0
    %2477 = vmatmul.mubr.bf16.gmra.mrb[0].mxu0 %v2397
    %v2478 = vpop.f32.mrb[0].mxu0
    %v2479 = vadd.f32 0.0, %v2478
    %v2480 = vpop.f32.mrb[0].mxu0
    %v2481 = vadd.f32 0.0, %v2480
    %v2482 = vpop.f32.mrb[0].mxu0
    %v2483 = vpop.f32.mrb[0].mxu0
    %2484 = vdwg.mxu0
    %v2485 = vadd.f32 %v2399, %v2438
    %v2486 = vadd.f32 %v2400, %v2440
    %v2487 = vadd.f32 %v2401, %v2479
    %v2488 = vadd.f32 %v2402, %v2481
    %v2489 = vxor.u32 %v2485, 2147483648
    %v2490 = vmul.f32 %v2489, 1.442695
    %v2491 = vpow.pop %v2490
    %v2492 = vadd.f32 %v2491, 1.0
    %v2493 = vrcp.pop %v2492
    %v2494 = vmul.f32 1.0, %v2493
    %v2495 = vxor.u32 %v2486, 2147483648
    %v2496 = vmul.f32 %v2495, 1.442695
    %v2497 = vpow.pop %v2496
    %v2498 = vadd.f32 %v2497, 1.0
    %v2499 = vrcp.pop %v2498
    %v2500 = vmul.f32 1.0, %v2499
    %v2501 = vtanh.pop %v2487
    %v2502 = vxor.u32 %v2488, 2147483648
    %v2503 = vmul.f32 %v2502, 1.442695
    %v2504 = vpow.pop %v2503
    %v2505 = vadd.f32 %v2504, 1.0
    %v2506 = vrcp.pop %v2505
    %v2507 = vmul.f32 1.0, %v2506
    %v2508 = vmul.f32 %v2500, %v2394
    %v2509 = vmul.f32 %v2494, %v2501
    %v2510 = vadd.f32 %v2508, %v2509
    %v2511 = vtanh.pop %v2510
    %v2512 = vmul.f32 %v2507, %v2511
    %v2513 = vpack.c.bf16 %v2512, %v2512
    %2514 = vst [vmem:[%s947] sm:$0xf] %v2513
    %v2515 = vld [vmem:[%s949] sm:$0xff]
    %v2516 = vld [vmem:[%s949 + $0x8] sm:$0xff]
    %v2517 = vld [vmem:[%s949 + $0x10] sm:$0xff]
    %v2518 = vld [vmem:[%s949 + $0x18] sm:$0xff]
    %2519 = vmatprep.subr.bf16.mxu0 %v2224
    %2520 = vmatpush1.bf16.msra.mxu0 %v2223
    %2521 = vmatprep.subr.bf16.mxu0 %v2228
    %2522 = vmatpush1.bf16.msra.mxu0 %v2227
    %2523 = vmatprep.subr.bf16.mxu0 %v2232
    %2524 = vmatpush1.bf16.msra.mxu0 %v2231
    %2525 = vmatprep.subr.bf16.mxu0 %v2236
    %2526 = vmatpush1.bf16.msra.mxu0 %v2235
    %2527 = vmatprep.subr.bf16.mxu0 %v2240
    %2528 = vmatpush1.bf16.msra.mxu0 %v2239
    %2529 = vmatprep.subr.bf16.mxu0 %v2244
    %2530 = vmatpush1.bf16.msra.mxu0 %v2243
    %2531 = vmatprep.subr.bf16.mxu0 %v2248
    %2532 = vmatpush1.bf16.msra.mxu0 %v2247
    %2533 = vmatprep.subr.bf16.mxu0 %v2252
    %2534 = vmatpush1.bf16.msra.mxu0 %v2251
    %2535 = vmatprep.subr.bf16.mxu0 0
    %2536 = vmatpush1.bf16.msra.mxu0 0
    %2537 = vmatprep.subr.bf16.mxu0 0
    %2538 = vmatpush1.bf16.msra.mxu0 0
    %2539 = vmatprep.subr.bf16.mxu0 0
    %2540 = vmatpush1.bf16.msra.mxu0 0
    %2541 = vmatprep.subr.bf16.mxu0 0
    %2542 = vmatpush1.bf16.msra.mxu0 0
    %2543 = vmatprep.subr.bf16.mxu0 0
    %2544 = vmatpush1.bf16.msra.mxu0 0
    %2545 = vmatprep.subr.bf16.mxu0 0
    %2546 = vmatpush1.bf16.msra.mxu0 0
    %2547 = vmatprep.subr.bf16.mxu0 0
    %2548 = vmatpush1.bf16.msra.mxu0 0
    %2549 = vmatprep.subr.bf16.mxu0 0
    %2550 = vmatpush1.bf16.msra.mxu0 0
    %2551 = vmatprep.mubr.bf16.mxu0 0
    %2552 = vmatmul.mubr.bf16.gmra.mrb[0].mxu0 %v2513
    %v2553 = vpop.f32.mrb[0].mxu0
    %v2554 = vadd.f32 0.0, %v2553
    %v2555 = vpop.f32.mrb[0].mxu0
    %v2556 = vadd.f32 0.0, %v2555
    %v2557 = vpop.f32.mrb[0].mxu0
    %v2558 = vpop.f32.mrb[0].mxu0
    %2559 = vdwg.mxu0
    %2560 = vmatprep.subr.bf16.mxu0 %v2226
    %2561 = vmatpush1.bf16.msra.mxu0 %v2225
    %2562 = vmatprep.subr.bf16.mxu0 %v2230
    %2563 = vmatpush1.bf16.msra.mxu0 %v2229
    %2564 = vmatprep.subr.bf16.mxu0 %v2234
    %2565 = vmatpush1.bf16.msra.mxu0 %v2233
    %2566 = vmatprep.subr.bf16.mxu0 %v2238
    %2567 = vmatpush1.bf16.msra.mxu0 %v2237
    %2568 = vmatprep.subr.bf16.mxu0 %v2242
    %2569 = vmatpush1.bf16.msra.mxu0 %v2241
    %2570 = vmatprep.subr.bf16.mxu0 %v2246
    %2571 = vmatpush1.bf16.msra.mxu0 %v2245
    %2572 = vmatprep.subr.bf16.mxu0 %v2250
    %2573 = vmatpush1.bf16.msra.mxu0 %v2249
    %2574 = vmatprep.subr.bf16.mxu0 %v2254
    %2575 = vmatpush1.bf16.msra.mxu0 %v2253
    %2576 = vmatprep.subr.bf16.mxu0 0
    %2577 = vmatpush1.bf16.msra.mxu0 0
    %2578 = vmatprep.subr.bf16.mxu0 0
    %2579 = vmatpush1.bf16.msra.mxu0 0
    %2580 = vmatprep.subr.bf16.mxu0 0
    %2581 = vmatpush1.bf16.msra.mxu0 0
    %2582 = vmatprep.subr.bf16.mxu0 0
    %2583 = vmatpush1.bf16.msra.mxu0 0
    %2584 = vmatprep.subr.bf16.mxu0 0
    %2585 = vmatpush1.bf16.msra.mxu0 0
    %2586 = vmatprep.subr.bf16.mxu0 0
    %2587 = vmatpush1.bf16.msra.mxu0 0
    %2588 = vmatprep.subr.bf16.mxu0 0
    %2589 = vmatpush1.bf16.msra.mxu0 0
    %2590 = vmatprep.subr.bf16.mxu0 0
    %2591 = vmatpush1.bf16.msra.mxu0 0
    %2592 = vmatprep.mubr.bf16.mxu0 0
    %2593 = vmatmul.mubr.bf16.gmra.mrb[0].mxu0 %v2513
    %v2594 = vpop.f32.mrb[0].mxu0
    %v2595 = vadd.f32 0.0, %v2594
    %v2596 = vpop.f32.mrb[0].mxu0
    %v2597 = vadd.f32 0.0, %v2596
    %v2598 = vpop.f32.mrb[0].mxu0
    %v2599 = vpop.f32.mrb[0].mxu0
    %2600 = vdwg.mxu0
    %v2601 = vadd.f32 %v2515, %v2554
    %v2602 = vadd.f32 %v2516, %v2556
    %v2603 = vadd.f32 %v2517, %v2595
    %v2604 = vadd.f32 %v2518, %v2597
    %v2605 = vxor.u32 %v2601, 2147483648
    %v2606 = vmul.f32 %v2605, 1.442695
    %v2607 = vpow.pop %v2606
    %v2608 = vadd.f32 %v2607, 1.0
    %v2609 = vrcp.pop %v2608
    %v2610 = vmul.f32 1.0, %v2609
    %v2611 = vxor.u32 %v2602, 2147483648
    %v2612 = vmul.f32 %v2611, 1.442695
    %v2613 = vpow.pop %v2612
    %v2614 = vadd.f32 %v2613, 1.0
    %v2615 = vrcp.pop %v2614
    %v2616 = vmul.f32 1.0, %v2615
    %v2617 = vtanh.pop %v2603
    %v2618 = vxor.u32 %v2604, 2147483648
    %v2619 = vmul.f32 %v2618, 1.442695
    %v2620 = vpow.pop %v2619
    %v2621 = vadd.f32 %v2620, 1.0
    %v2622 = vrcp.pop %v2621
    %v2623 = vmul.f32 1.0, %v2622
    %v2624 = vmul.f32 %v2616, %v2510
    %v2625 = vmul.f32 %v2610, %v2617
    %v2626 = vadd.f32 %v2624, %v2625
    %v2627 = vtanh.pop %v2626
    %v2628 = vmul.f32 %v2623, %v2627
    %v2629 = vpack.c.bf16 %v2628, %v2628
    %2630 = vst [vmem:[%s1065] sm:$0xf] %v2629
    %v2631 = vld [vmem:[%s1067] sm:$0xff]
    %v2632 = vld [vmem:[%s1067 + $0x8] sm:$0xff]
    %v2633 = vld [vmem:[%s1067 + $0x10] sm:$0xff]
    %v2634 = vld [vmem:[%s1067 + $0x18] sm:$0xff]
    %2635 = vmatprep.subr.bf16.mxu0 %v2224
    %2636 = vmatpush1.bf16.msra.mxu0 %v2223
    %2637 = vmatprep.subr.bf16.mxu0 %v2228
    %2638 = vmatpush1.bf16.msra.mxu0 %v2227
    %2639 = vmatprep.subr.bf16.mxu0 %v2232
    %2640 = vmatpush1.bf16.msra.mxu0 %v2231
    %2641 = vmatprep.subr.bf16.mxu0 %v2236
    %2642 = vmatpush1.bf16.msra.mxu0 %v2235
    %2643 = vmatprep.subr.bf16.mxu0 %v2240
    %2644 = vmatpush1.bf16.msra.mxu0 %v2239
    %2645 = vmatprep.subr.bf16.mxu0 %v2244
    %2646 = vmatpush1.bf16.msra.mxu0 %v2243
    %2647 = vmatprep.subr.bf16.mxu0 %v2248
    %2648 = vmatpush1.bf16.msra.mxu0 %v2247
    %2649 = vmatprep.subr.bf16.mxu0 %v2252
    %2650 = vmatpush1.bf16.msra.mxu0 %v2251
    %2651 = vmatprep.subr.bf16.mxu0 0
    %2652 = vmatpush1.bf16.msra.mxu0 0
    %2653 = vmatprep.subr.bf16.mxu0 0
    %2654 = vmatpush1.bf16.msra.mxu0 0
    %2655 = vmatprep.subr.bf16.mxu0 0
    %2656 = vmatpush1.bf16.msra.mxu0 0
    %2657 = vmatprep.subr.bf16.mxu0 0
    %2658 = vmatpush1.bf16.msra.mxu0 0
    %2659 = vmatprep.subr.bf16.mxu0 0
    %2660 = vmatpush1.bf16.msra.mxu0 0
    %2661 = vmatprep.subr.bf16.mxu0 0
    %2662 = vmatpush1.bf16.msra.mxu0 0
    %2663 = vmatprep.subr.bf16.mxu0 0
    %2664 = vmatpush1.bf16.msra.mxu0 0
    %2665 = vmatprep.subr.bf16.mxu0 0
    %2666 = vmatpush1.bf16.msra.mxu0 0
    %2667 = vmatprep.mubr.bf16.mxu0 0
    %2668 = vmatmul.mubr.bf16.gmra.mrb[0].mxu0 %v2629
    %v2669 = vpop.f32.mrb[0].mxu0
    %v2670 = vadd.f32 0.0, %v2669
    %v2671 = vpop.f32.mrb[0].mxu0
    %v2672 = vadd.f32 0.0, %v2671
    %v2673 = vpop.f32.mrb[0].mxu0
    %v2674 = vpop.f32.mrb[0].mxu0
    %2675 = vdwg.mxu0
    %2676 = vmatprep.subr.bf16.mxu0 %v2226
    %2677 = vmatpush1.bf16.msra.mxu0 %v2225
    %2678 = vmatprep.subr.bf16.mxu0 %v2230
    %2679 = vmatpush1.bf16.msra.mxu0 %v2229
    %2680 = vmatprep.subr.bf16.mxu0 %v2234
    %2681 = vmatpush1.bf16.msra.mxu0 %v2233
    %2682 = vmatprep.subr.bf16.mxu0 %v2238
    %2683 = vmatpush1.bf16.msra.mxu0 %v2237
    %2684 = vmatprep.subr.bf16.mxu0 %v2242
    %2685 = vmatpush1.bf16.msra.mxu0 %v2241
    %2686 = vmatprep.subr.bf16.mxu0 %v2246
    %2687 = vmatpush1.bf16.msra.mxu0 %v2245
    %2688 = vmatprep.subr.bf16.mxu0 %v2250
    %2689 = vmatpush1.bf16.msra.mxu0 %v2249
    %2690 = vmatprep.subr.bf16.mxu0 %v2254
    %2691 = vmatpush1.bf16.msra.mxu0 %v2253
    %2692 = vmatprep.subr.bf16.mxu0 0
    %2693 = vmatpush1.bf16.msra.mxu0 0
    %2694 = vmatprep.subr.bf16.mxu0 0
    %2695 = vmatpush1.bf16.msra.mxu0 0
    %2696 = vmatprep.subr.bf16.mxu0 0
    %2697 = vmatpush1.bf16.msra.mxu0 0
    %2698 = vmatprep.subr.bf16.mxu0 0
    %2699 = vmatpush1.bf16.msra.mxu0 0
    %2700 = vmatprep.subr.bf16.mxu0 0
    %2701 = vmatpush1.bf16.msra.mxu0 0
    %2702 = vmatprep.subr.bf16.mxu0 0
    %2703 = vmatpush1.bf16.msra.mxu0 0
    %2704 = vmatprep.subr.bf16.mxu0 0
    %2705 = vmatpush1.bf16.msra.mxu0 0
    %2706 = vmatprep.subr.bf16.mxu0 0
    %2707 = vmatpush1.bf16.msra.mxu0 0
    %2708 = vmatprep.mubr.bf16.mxu0 0
    %2709 = vmatmul.mubr.bf16.gmra.mrb[0].mxu0 %v2629
    %v2710 = vpop.f32.mrb[0].mxu0
    %v2711 = vadd.f32 0.0, %v2710
    %v2712 = vpop.f32.mrb[0].mxu0
    %v2713 = vadd.f32 0.0, %v2712
    %v2714 = vpop.f32.mrb[0].mxu0
    %v2715 = vpop.f32.mrb[0].mxu0
    %2716 = vdwg.mxu0
    %v2717 = vadd.f32 %v2631, %v2670
    %v2718 = vadd.f32 %v2632, %v2672
    %v2719 = vadd.f32 %v2633, %v2711
    %v2720 = vadd.f32 %v2634, %v2713
    %v2721 = vxor.u32 %v2717, 2147483648
    %v2722 = vmul.f32 %v2721, 1.442695
    %v2723 = vpow.pop %v2722
    %v2724 = vadd.f32 %v2723, 1.0
    %v2725 = vrcp.pop %v2724
    %v2726 = vmul.f32 1.0, %v2725
    %v2727 = vxor.u32 %v2718, 2147483648
    %v2728 = vmul.f32 %v2727, 1.442695
    %v2729 = vpow.pop %v2728
    %v2730 = vadd.f32 %v2729, 1.0
    %v2731 = vrcp.pop %v2730
    %v2732 = vmul.f32 1.0, %v2731
    %v2733 = vtanh.pop %v2719
    %v2734 = vxor.u32 %v2720, 2147483648
    %v2735 = vmul.f32 %v2734, 1.442695
    %v2736 = vpow.pop %v2735
    %v2737 = vadd.f32 %v2736, 1.0
    %v2738 = vrcp.pop %v2737
    %v2739 = vmul.f32 1.0, %v2738
    %v2740 = vmul.f32 %v2732, %v2626
    %v2741 = vmul.f32 %v2726, %v2733
    %v2742 = vadd.f32 %v2740, %v2741
    %v2743 = vtanh.pop %v2742
    %v2744 = vmul.f32 %v2739, %v2743
    %v2745 = vpack.c.bf16 %v2744, %v2744
    %2746 = vst [vmem:[%s1183] sm:$0xf] %v2745
    %v2747 = vld [vmem:[%s1185] sm:$0xff]
    %v2748 = vld [vmem:[%s1185 + $0x8] sm:$0xff]
    %v2749 = vld [vmem:[%s1185 + $0x10] sm:$0xff]
    %v2750 = vld [vmem:[%s1185 + $0x18] sm:$0xff]
    %2751 = vmatprep.subr.bf16.mxu0 %v2224
    %2752 = vmatpush1.bf16.msra.mxu0 %v2223
    %2753 = vmatprep.subr.bf16.mxu0 %v2228
    %2754 = vmatpush1.bf16.msra.mxu0 %v2227
    %2755 = vmatprep.subr.bf16.mxu0 %v2232
    %2756 = vmatpush1.bf16.msra.mxu0 %v2231
    %2757 = vmatprep.subr.bf16.mxu0 %v2236
    %2758 = vmatpush1.bf16.msra.mxu0 %v2235
    %2759 = vmatprep.subr.bf16.mxu0 %v2240
    %2760 = vmatpush1.bf16.msra.mxu0 %v2239
    %2761 = vmatprep.subr.bf16.mxu0 %v2244
    %2762 = vmatpush1.bf16.msra.mxu0 %v2243
    %2763 = vmatprep.subr.bf16.mxu0 %v2248
    %2764 = vmatpush1.bf16.msra.mxu0 %v2247
    %2765 = vmatprep.subr.bf16.mxu0 %v2252
    %2766 = vmatpush1.bf16.msra.mxu0 %v2251
    %2767 = vmatprep.subr.bf16.mxu0 0
    %2768 = vmatpush1.bf16.msra.mxu0 0
    %2769 = vmatprep.subr.bf16.mxu0 0
    %2770 = vmatpush1.bf16.msra.mxu0 0
    %2771 = vmatprep.subr.bf16.mxu0 0
    %2772 = vmatpush1.bf16.msra.mxu0 0
    %2773 = vmatprep.subr.bf16.mxu0 0
    %2774 = vmatpush1.bf16.msra.mxu0 0
    %2775 = vmatprep.subr.bf16.mxu0 0
    %2776 = vmatpush1.bf16.msra.mxu0 0
    %2777 = vmatprep.subr.bf16.mxu0 0
    %2778 = vmatpush1.bf16.msra.mxu0 0
    %2779 = vmatprep.subr.bf16.mxu0 0
    %2780 = vmatpush1.bf16.msra.mxu0 0
    %2781 = vmatprep.subr.bf16.mxu0 0
    %2782 = vmatpush1.bf16.msra.mxu0 0
    %2783 = vmatprep.mubr.bf16.mxu0 0
    %2784 = vmatmul.mubr.bf16.gmra.mrb[0].mxu0 %v2745
    %v2785 = vpop.f32.mrb[0].mxu0
    %v2786 = vadd.f32 0.0, %v2785
    %v2787 = vpop.f32.mrb[0].mxu0
    %v2788 = vadd.f32 0.0, %v2787
    %v2789 = vpop.f32.mrb[0].mxu0
    %v2790 = vpop.f32.mrb[0].mxu0
    %2791 = vdwg.mxu0
    %2792 = vmatprep.subr.bf16.mxu0 %v2226
    %2793 = vmatpush1.bf16.msra.mxu0 %v2225
    %2794 = vmatprep.subr.bf16.mxu0 %v2230
    %2795 = vmatpush1.bf16.msra.mxu0 %v2229
    %2796 = vmatprep.subr.bf16.mxu0 %v2234
    %2797 = vmatpush1.bf16.msra.mxu0 %v2233
    %2798 = vmatprep.subr.bf16.mxu0 %v2238
    %2799 = vmatpush1.bf16.msra.mxu0 %v2237
    %2800 = vmatprep.subr.bf16.mxu0 %v2242
    %2801 = vmatpush1.bf16.msra.mxu0 %v2241
    %2802 = vmatprep.subr.bf16.mxu0 %v2246
    %2803 = vmatpush1.bf16.msra.mxu0 %v2245
    %2804 = vmatprep.subr.bf16.mxu0 %v2250
    %2805 = vmatpush1.bf16.msra.mxu0 %v2249
    %2806 = vmatprep.subr.bf16.mxu0 %v2254
    %2807 = vmatpush1.bf16.msra.mxu0 %v2253
    %2808 = vmatprep.subr.bf16.mxu0 0
    %2809 = vmatpush1.bf16.msra.mxu0 0
    %2810 = vmatprep.subr.bf16.mxu0 0
    %2811 = vmatpush1.bf16.msra.mxu0 0
    %2812 = vmatprep.subr.bf16.mxu0 0
    %2813 = vmatpush1.bf16.msra.mxu0 0
    %2814 = vmatprep.subr.bf16.mxu0 0
    %2815 = vmatpush1.bf16.msra.mxu0 0
    %2816 = vmatprep.subr.bf16.mxu0 0
    %2817 = vmatpush1.bf16.msra.mxu0 0
    %2818 = vmatprep.subr.bf16.mxu0 0
    %2819 = vmatpush1.bf16.msra.mxu0 0
    %2820 = vmatprep.subr.bf16.mxu0 0
    %2821 = vmatpush1.bf16.msra.mxu0 0
    %2822 = vmatprep.subr.bf16.mxu0 0
    %2823 = vmatpush1.bf16.msra.mxu0 0
    %2824 = vmatprep.mubr.bf16.mxu0 0
    %2825 = vmatmul.mubr.bf16.gmra.mrb[0].mxu0 %v2745
    %v2826 = vpop.f32.mrb[0].mxu0
    %v2827 = vadd.f32 0.0, %v2826
    %v2828 = vpop.f32.mrb[0].mxu0
    %v2829 = vadd.f32 0.0, %v2828
    %v2830 = vpop.f32.mrb[0].mxu0
    %v2831 = vpop.f32.mrb[0].mxu0
    %2832 = vdwg.mxu0
    %v2833 = vadd.f32 %v2747, %v2786
    %v2834 = vadd.f32 %v2748, %v2788
    %v2835 = vadd.f32 %v2749, %v2827
    %v2836 = vadd.f32 %v2750, %v2829
    %v2837 = vxor.u32 %v2833, 2147483648
    %v2838 = vmul.f32 %v2837, 1.442695
    %v2839 = vpow.pop %v2838
    %v2840 = vadd.f32 %v2839, 1.0
    %v2841 = vrcp.pop %v2840
    %v2842 = vmul.f32 1.0, %v2841
    %v2843 = vxor.u32 %v2834, 2147483648
    %v2844 = vmul.f32 %v2843, 1.442695
    %v2845 = vpow.pop %v2844
    %v2846 = vadd.f32 %v2845, 1.0
    %v2847 = vrcp.pop %v2846
    %v2848 = vmul.f32 1.0, %v2847
    %v2849 = vtanh.pop %v2835
    %v2850 = vxor.u32 %v2836, 2147483648
    %v2851 = vmul.f32 %v2850, 1.442695
    %v2852 = vpow.pop %v2851
    %v2853 = vadd.f32 %v2852, 1.0
    %v2854 = vrcp.pop %v2853
    %v2855 = vmul.f32 1.0, %v2854
    %v2856 = vmul.f32 %v2848, %v2742
    %v2857 = vmul.f32 %v2842, %v2849
    %v2858 = vadd.f32 %v2856, %v2857
    %v2859 = vtanh.pop %v2858
    %v2860 = vmul.f32 %v2855, %v2859
    %v2861 = vpack.c.bf16 %v2860, %v2860
    %2862 = vst [vmem:[%s1301] sm:$0xf] %v2861
    %v2863 = vld [vmem:[%s1303] sm:$0xff]
    %v2864 = vld [vmem:[%s1303 + $0x8] sm:$0xff]
    %v2865 = vld [vmem:[%s1303 + $0x10] sm:$0xff]
    %v2866 = vld [vmem:[%s1303 + $0x18] sm:$0xff]
    %2867 = vmatprep.subr.bf16.mxu0 %v2224
    %2868 = vmatpush1.bf16.msra.mxu0 %v2223
    %2869 = vmatprep.subr.bf16.mxu0 %v2228
    %2870 = vmatpush1.bf16.msra.mxu0 %v2227
    %2871 = vmatprep.subr.bf16.mxu0 %v2232
    %2872 = vmatpush1.bf16.msra.mxu0 %v2231
    %2873 = vmatprep.subr.bf16.mxu0 %v2236
    %2874 = vmatpush1.bf16.msra.mxu0 %v2235
    %2875 = vmatprep.subr.bf16.mxu0 %v2240
    %2876 = vmatpush1.bf16.msra.mxu0 %v2239
    %2877 = vmatprep.subr.bf16.mxu0 %v2244
    %2878 = vmatpush1.bf16.msra.mxu0 %v2243
    %2879 = vmatprep.subr.bf16.mxu0 %v2248
    %2880 = vmatpush1.bf16.msra.mxu0 %v2247
    %2881 = vmatprep.subr.bf16.mxu0 %v2252
    %2882 = vmatpush1.bf16.msra.mxu0 %v2251
    %2883 = vmatprep.subr.bf16.mxu0 0
    %2884 = vmatpush1.bf16.msra.mxu0 0
    %2885 = vmatprep.subr.bf16.mxu0 0
    %2886 = vmatpush1.bf16.msra.mxu0 0
    %2887 = vmatprep.subr.bf16.mxu0 0
    %2888 = vmatpush1.bf16.msra.mxu0 0
    %2889 = vmatprep.subr.bf16.mxu0 0
    %2890 = vmatpush1.bf16.msra.mxu0 0
    %2891 = vmatprep.subr.bf16.mxu0 0
    %2892 = vmatpush1.bf16.msra.mxu0 0
    %2893 = vmatprep.subr.bf16.mxu0 0
    %2894 = vmatpush1.bf16.msra.mxu0 0
    %2895 = vmatprep.subr.bf16.mxu0 0
    %2896 = vmatpush1.bf16.msra.mxu0 0
    %2897 = vmatprep.subr.bf16.mxu0 0
    %2898 = vmatpush1.bf16.msra.mxu0 0
    %2899 = vmatprep.mubr.bf16.mxu0 0
    %2900 = vmatmul.mubr.bf16.gmra.mrb[0].mxu0 %v2861
    %v2901 = vpop.f32.mrb[0].mxu0
    %v2902 = vadd.f32 0.0, %v2901
    %v2903 = vpop.f32.mrb[0].mxu0
    %v2904 = vadd.f32 0.0, %v2903
    %v2905 = vpop.f32.mrb[0].mxu0
    %v2906 = vpop.f32.mrb[0].mxu0
    %2907 = vdwg.mxu0
    %2908 = vmatprep.subr.bf16.mxu0 %v2226
    %2909 = vmatpush1.bf16.msra.mxu0 %v2225
    %2910 = vmatprep.subr.bf16.mxu0 %v2230
    %2911 = vmatpush1.bf16.msra.mxu0 %v2229
    %2912 = vmatprep.subr.bf16.mxu0 %v2234
    %2913 = vmatpush1.bf16.msra.mxu0 %v2233
    %2914 = vmatprep.subr.bf16.mxu0 %v2238
    %2915 = vmatpush1.bf16.msra.mxu0 %v2237
    %2916 = vmatprep.subr.bf16.mxu0 %v2242
    %2917 = vmatpush1.bf16.msra.mxu0 %v2241
    %2918 = vmatprep.subr.bf16.mxu0 %v2246
    %2919 = vmatpush1.bf16.msra.mxu0 %v2245
    %2920 = vmatprep.subr.bf16.mxu0 %v2250
    %2921 = vmatpush1.bf16.msra.mxu0 %v2249
    %2922 = vmatprep.subr.bf16.mxu0 %v2254
    %2923 = vmatpush1.bf16.msra.mxu0 %v2253
    %2924 = vmatprep.subr.bf16.mxu0 0
    %2925 = vmatpush1.bf16.msra.mxu0 0
    %2926 = vmatprep.subr.bf16.mxu0 0
    %2927 = vmatpush1.bf16.msra.mxu0 0
    %2928 = vmatprep.subr.bf16.mxu0 0
    %2929 = vmatpush1.bf16.msra.mxu0 0
    %2930 = vmatprep.subr.bf16.mxu0 0
    %2931 = vmatpush1.bf16.msra.mxu0 0
    %2932 = vmatprep.subr.bf16.mxu0 0
    %2933 = vmatpush1.bf16.msra.mxu0 0
    %2934 = vmatprep.subr.bf16.mxu0 0
    %2935 = vmatpush1.bf16.msra.mxu0 0
    %2936 = vmatprep.subr.bf16.mxu0 0
    %2937 = vmatpush1.bf16.msra.mxu0 0
    %2938 = vmatprep.subr.bf16.mxu0 0
    %2939 = vmatpush1.bf16.msra.mxu0 0
    %2940 = vmatprep.mubr.bf16.mxu0 0
    %2941 = vmatmul.mubr.bf16.gmra.mrb[0].mxu0 %v2861
    %v2942 = vpop.f32.mrb[0].mxu0
    %v2943 = vadd.f32 0.0, %v2942
    %v2944 = vpop.f32.mrb[0].mxu0
    %v2945 = vadd.f32 0.0, %v2944
    %v2946 = vpop.f32.mrb[0].mxu0
    %v2947 = vpop.f32.mrb[0].mxu0
    %2948 = vdwg.mxu0
    %v2949 = vadd.f32 %v2863, %v2902
    %v2950 = vadd.f32 %v2864, %v2904
    %v2951 = vadd.f32 %v2865, %v2943
    %v2952 = vadd.f32 %v2866, %v2945
    %v2953 = vxor.u32 %v2949, 2147483648
    %v2954 = vmul.f32 %v2953, 1.442695
    %v2955 = vpow.pop %v2954
    %v2956 = vadd.f32 %v2955, 1.0
    %v2957 = vrcp.pop %v2956
    %v2958 = vmul.f32 1.0, %v2957
    %v2959 = vxor.u32 %v2950, 2147483648
    %v2960 = vmul.f32 %v2959, 1.442695
    %v2961 = vpow.pop %v2960
    %v2962 = vadd.f32 %v2961, 1.0
    %v2963 = vrcp.pop %v2962
    %v2964 = vmul.f32 1.0, %v2963
    %v2965 = vtanh.pop %v2951
    %v2966 = vxor.u32 %v2952, 2147483648
    %v2967 = vmul.f32 %v2966, 1.442695
    %v2968 = vpow.pop %v2967
    %v2969 = vadd.f32 %v2968, 1.0
    %v2970 = vrcp.pop %v2969
    %v2971 = vmul.f32 1.0, %v2970
    %v2972 = vmul.f32 %v2964, %v2858
    %v2973 = vmul.f32 %v2958, %v2965
    %v2974 = vadd.f32 %v2972, %v2973
    %v2975 = vtanh.pop %v2974
    %v2976 = vmul.f32 %v2971, %v2975
    %v2977 = vpack.c.bf16 %v2976, %v2976
    %2978 = vst [vmem:[%s1419] sm:$0xf] %v2977
    %v2979 = vld [vmem:[%s1421] sm:$0xff]
    %v2980 = vld [vmem:[%s1421 + $0x8] sm:$0xff]
    %v2981 = vld [vmem:[%s1421 + $0x10] sm:$0xff]
    %v2982 = vld [vmem:[%s1421 + $0x18] sm:$0xff]
    %2983 = vmatprep.subr.bf16.mxu0 %v2224
    %2984 = vmatpush1.bf16.msra.mxu0 %v2223
    %2985 = vmatprep.subr.bf16.mxu0 %v2228
    %2986 = vmatpush1.bf16.msra.mxu0 %v2227
    %2987 = vmatprep.subr.bf16.mxu0 %v2232
    %2988 = vmatpush1.bf16.msra.mxu0 %v2231
    %2989 = vmatprep.subr.bf16.mxu0 %v2236
    %2990 = vmatpush1.bf16.msra.mxu0 %v2235
    %2991 = vmatprep.subr.bf16.mxu0 %v2240
    %2992 = vmatpush1.bf16.msra.mxu0 %v2239
    %2993 = vmatprep.subr.bf16.mxu0 %v2244
    %2994 = vmatpush1.bf16.msra.mxu0 %v2243
    %2995 = vmatprep.subr.bf16.mxu0 %v2248
    %2996 = vmatpush1.bf16.msra.mxu0 %v2247
    %2997 = vmatprep.subr.bf16.mxu0 %v2252
    %2998 = vmatpush1.bf16.msra.mxu0 %v2251
    %2999 = vmatprep.subr.bf16.mxu0 0
    %3000 = vmatpush1.bf16.msra.mxu0 0
    %3001 = vmatprep.subr.bf16.mxu0 0
    %3002 = vmatpush1.bf16.msra.mxu0 0
    %3003 = vmatprep.subr.bf16.mxu0 0
    %3004 = vmatpush1.bf16.msra.mxu0 0
    %3005 = vmatprep.subr.bf16.mxu0 0
    %3006 = vmatpush1.bf16.msra.mxu0 0
    %3007 = vmatprep.subr.bf16.mxu0 0
    %3008 = vmatpush1.bf16.msra.mxu0 0
    %3009 = vmatprep.subr.bf16.mxu0 0
    %3010 = vmatpush1.bf16.msra.mxu0 0
    %3011 = vmatprep.subr.bf16.mxu0 0
    %3012 = vmatpush1.bf16.msra.mxu0 0
    %3013 = vmatprep.subr.bf16.mxu0 0
    %3014 = vmatpush1.bf16.msra.mxu0 0
    %3015 = vmatprep.mubr.bf16.mxu0 0
    %3016 = vmatmul.mubr.bf16.gmra.mrb[0].mxu0 %v2977
    %v3017 = vpop.f32.mrb[0].mxu0
    %v3018 = vadd.f32 0.0, %v3017
    %v3019 = vpop.f32.mrb[0].mxu0
    %v3020 = vadd.f32 0.0, %v3019
    %v3021 = vpop.f32.mrb[0].mxu0
    %v3022 = vpop.f32.mrb[0].mxu0
    %3023 = vdwg.mxu0
    %3024 = vmatprep.subr.bf16.mxu0 %v2226
    %3025 = vmatpush1.bf16.msra.mxu0 %v2225
    %3026 = vmatprep.subr.bf16.mxu0 %v2230
    %3027 = vmatpush1.bf16.msra.mxu0 %v2229
    %3028 = vmatprep.subr.bf16.mxu0 %v2234
    %3029 = vmatpush1.bf16.msra.mxu0 %v2233
    %3030 = vmatprep.subr.bf16.mxu0 %v2238
    %3031 = vmatpush1.bf16.msra.mxu0 %v2237
    %3032 = vmatprep.subr.bf16.mxu0 %v2242
    %3033 = vmatpush1.bf16.msra.mxu0 %v2241
    %3034 = vmatprep.subr.bf16.mxu0 %v2246
    %3035 = vmatpush1.bf16.msra.mxu0 %v2245
    %3036 = vmatprep.subr.bf16.mxu0 %v2250
    %3037 = vmatpush1.bf16.msra.mxu0 %v2249
    %3038 = vmatprep.subr.bf16.mxu0 %v2254
    %3039 = vmatpush1.bf16.msra.mxu0 %v2253
    %3040 = vmatprep.subr.bf16.mxu0 0
    %3041 = vmatpush1.bf16.msra.mxu0 0
    %3042 = vmatprep.subr.bf16.mxu0 0
    %3043 = vmatpush1.bf16.msra.mxu0 0
    %3044 = vmatprep.subr.bf16.mxu0 0
    %3045 = vmatpush1.bf16.msra.mxu0 0
    %3046 = vmatprep.subr.bf16.mxu0 0
    %3047 = vmatpush1.bf16.msra.mxu0 0
    %3048 = vmatprep.subr.bf16.mxu0 0
    %3049 = vmatpush1.bf16.msra.mxu0 0
    %3050 = vmatprep.subr.bf16.mxu0 0
    %3051 = vmatpush1.bf16.msra.mxu0 0
    %3052 = vmatprep.subr.bf16.mxu0 0
    %3053 = vmatpush1.bf16.msra.mxu0 0
    %3054 = vmatprep.subr.bf16.mxu0 0
    %3055 = vmatpush1.bf16.msra.mxu0 0
    %3056 = vmatprep.mubr.bf16.mxu0 0
    %3057 = vmatmul.mubr.bf16.gmra.mrb[0].mxu0 %v2977
    %v3058 = vpop.f32.mrb[0].mxu0
    %v3059 = vadd.f32 0.0, %v3058
    %v3060 = vpop.f32.mrb[0].mxu0
    %v3061 = vadd.f32 0.0, %v3060
    %v3062 = vpop.f32.mrb[0].mxu0
    %v3063 = vpop.f32.mrb[0].mxu0
    %3064 = vdwg.mxu0
    %v3065 = vadd.f32 %v2979, %v3018
    %v3066 = vadd.f32 %v2980, %v3020
    %v3067 = vadd.f32 %v2981, %v3059
    %v3068 = vadd.f32 %v2982, %v3061
    %v3069 = vxor.u32 %v3065, 2147483648
    %v3070 = vmul.f32 %v3069, 1.442695
    %v3071 = vpow.pop %v3070
    %v3072 = vadd.f32 %v3071, 1.0
    %v3073 = vrcp.pop %v3072
    %v3074 = vmul.f32 1.0, %v3073
    %v3075 = vxor.u32 %v3066, 2147483648
    %v3076 = vmul.f32 %v3075, 1.442695
    %v3077 = vpow.pop %v3076
    %v3078 = vadd.f32 %v3077, 1.0
    %v3079 = vrcp.pop %v3078
    %v3080 = vmul.f32 1.0, %v3079
    %v3081 = vtanh.pop %v3067
    %v3082 = vxor.u32 %v3068, 2147483648
    %v3083 = vmul.f32 %v3082, 1.442695
    %v3084 = vpow.pop %v3083
    %v3085 = vadd.f32 %v3084, 1.0
    %v3086 = vrcp.pop %v3085
    %v3087 = vmul.f32 1.0, %v3086
    %v3088 = vmul.f32 %v3080, %v2974
    %v3089 = vmul.f32 %v3074, %v3081
    %v3090 = vadd.f32 %v3088, %v3089
    %v3091 = vtanh.pop %v3090
    %v3092 = vmul.f32 %v3087, %v3091
    %v3093 = vpack.c.bf16 %v3092, %v3092
    %3094 = vst [vmem:[%s1537] sm:$0xf] %v3093
    %v3095 = vld [vmem:[%s1539] sm:$0xff]
    %v3096 = vld [vmem:[%s1539 + $0x8] sm:$0xff]
    %v3097 = vld [vmem:[%s1539 + $0x10] sm:$0xff]
    %v3098 = vld [vmem:[%s1539 + $0x18] sm:$0xff]
    %3099 = vmatprep.subr.bf16.mxu0 %v2224
    %3100 = vmatpush1.bf16.msra.mxu0 %v2223
    %3101 = vmatprep.subr.bf16.mxu0 %v2228
    %3102 = vmatpush1.bf16.msra.mxu0 %v2227
    %3103 = vmatprep.subr.bf16.mxu0 %v2232
    %3104 = vmatpush1.bf16.msra.mxu0 %v2231
    %3105 = vmatprep.subr.bf16.mxu0 %v2236
    %3106 = vmatpush1.bf16.msra.mxu0 %v2235
    %3107 = vmatprep.subr.bf16.mxu0 %v2240
    %3108 = vmatpush1.bf16.msra.mxu0 %v2239
    %3109 = vmatprep.subr.bf16.mxu0 %v2244
    %3110 = vmatpush1.bf16.msra.mxu0 %v2243
    %3111 = vmatprep.subr.bf16.mxu0 %v2248
    %3112 = vmatpush1.bf16.msra.mxu0 %v2247
    %3113 = vmatprep.subr.bf16.mxu0 %v2252
    %3114 = vmatpush1.bf16.msra.mxu0 %v2251
    %3115 = vmatprep.subr.bf16.mxu0 0
    %3116 = vmatpush1.bf16.msra.mxu0 0
    %3117 = vmatprep.subr.bf16.mxu0 0
    %3118 = vmatpush1.bf16.msra.mxu0 0
    %3119 = vmatprep.subr.bf16.mxu0 0
    %3120 = vmatpush1.bf16.msra.mxu0 0
    %3121 = vmatprep.subr.bf16.mxu0 0
    %3122 = vmatpush1.bf16.msra.mxu0 0
    %3123 = vmatprep.subr.bf16.mxu0 0
    %3124 = vmatpush1.bf16.msra.mxu0 0
    %3125 = vmatprep.subr.bf16.mxu0 0
    %3126 = vmatpush1.bf16.msra.mxu0 0
    %3127 = vmatprep.subr.bf16.mxu0 0
    %3128 = vmatpush1.bf16.msra.mxu0 0
    %3129 = vmatprep.subr.bf16.mxu0 0
    %3130 = vmatpush1.bf16.msra.mxu0 0
    %3131 = vmatprep.mubr.bf16.mxu0 0
    %3132 = vmatmul.mubr.bf16.gmra.mrb[0].mxu0 %v3093
    %v3133 = vpop.f32.mrb[0].mxu0
    %v3134 = vadd.f32 0.0, %v3133
    %v3135 = vpop.f32.mrb[0].mxu0
    %v3136 = vadd.f32 0.0, %v3135
    %v3137 = vpop.f32.mrb[0].mxu0
    %v3138 = vpop.f32.mrb[0].mxu0
    %3139 = vdwg.mxu0
    %3140 = vmatprep.subr.bf16.mxu0 %v2226
    %3141 = vmatpush1.bf16.msra.mxu0 %v2225
    %3142 = vmatprep.subr.bf16.mxu0 %v2230
    %3143 = vmatpush1.bf16.msra.mxu0 %v2229
    %3144 = vmatprep.subr.bf16.mxu0 %v2234
    %3145 = vmatpush1.bf16.msra.mxu0 %v2233
    %3146 = vmatprep.subr.bf16.mxu0 %v2238
    %3147 = vmatpush1.bf16.msra.mxu0 %v2237
    %3148 = vmatprep.subr.bf16.mxu0 %v2242
    %3149 = vmatpush1.bf16.msra.mxu0 %v2241
    %3150 = vmatprep.subr.bf16.mxu0 %v2246
    %3151 = vmatpush1.bf16.msra.mxu0 %v2245
    %3152 = vmatprep.subr.bf16.mxu0 %v2250
    %3153 = vmatpush1.bf16.msra.mxu0 %v2249
    %3154 = vmatprep.subr.bf16.mxu0 %v2254
    %3155 = vmatpush1.bf16.msra.mxu0 %v2253
    %3156 = vmatprep.subr.bf16.mxu0 0
    %3157 = vmatpush1.bf16.msra.mxu0 0
    %3158 = vmatprep.subr.bf16.mxu0 0
    %3159 = vmatpush1.bf16.msra.mxu0 0
    %3160 = vmatprep.subr.bf16.mxu0 0
    %3161 = vmatpush1.bf16.msra.mxu0 0
    %3162 = vmatprep.subr.bf16.mxu0 0
    %3163 = vmatpush1.bf16.msra.mxu0 0
    %3164 = vmatprep.subr.bf16.mxu0 0
    %3165 = vmatpush1.bf16.msra.mxu0 0
    %3166 = vmatprep.subr.bf16.mxu0 0
    %3167 = vmatpush1.bf16.msra.mxu0 0
    %3168 = vmatprep.subr.bf16.mxu0 0
    %3169 = vmatpush1.bf16.msra.mxu0 0
    %3170 = vmatprep.subr.bf16.mxu0 0
    %3171 = vmatpush1.bf16.msra.mxu0 0
    %3172 = vmatprep.mubr.bf16.mxu0 0
    %3173 = vmatmul.mubr.bf16.gmra.mrb[0].mxu0 %v3093
    %v3174 = vpop.f32.mrb[0].mxu0
    %v3175 = vadd.f32 0.0, %v3174
    %v3176 = vpop.f32.mrb[0].mxu0
    %v3177 = vadd.f32 0.0, %v3176
    %v3178 = vpop.f32.mrb[0].mxu0
    %v3179 = vpop.f32.mrb[0].mxu0
    %3180 = vdwg.mxu0
    %v3181 = vadd.f32 %v3095, %v3134
    %v3182 = vadd.f32 %v3096, %v3136
    %v3183 = vadd.f32 %v3097, %v3175
    %v3184 = vadd.f32 %v3098, %v3177
    %v3185 = vxor.u32 %v3181, 2147483648
    %v3186 = vmul.f32 %v3185, 1.442695
    %v3187 = vpow.pop %v3186
    %v3188 = vadd.f32 %v3187, 1.0
    %v3189 = vrcp.pop %v3188
    %v3190 = vmul.f32 1.0, %v3189
    %v3191 = vxor.u32 %v3182, 2147483648
    %v3192 = vmul.f32 %v3191, 1.442695
    %v3193 = vpow.pop %v3192
    %v3194 = vadd.f32 %v3193, 1.0
    %v3195 = vrcp.pop %v3194
    %v3196 = vmul.f32 1.0, %v3195
    %v3197 = vtanh.pop %v3183
    %v3198 = vxor.u32 %v3184, 2147483648
    %v3199 = vmul.f32 %v3198, 1.442695
    %v3200 = vpow.pop %v3199
    %v3201 = vadd.f32 %v3200, 1.0
    %v3202 = vrcp.pop %v3201
    %v3203 = vmul.f32 1.0, %v3202
    %v3204 = vmul.f32 %v3196, %v3090
    %v3205 = vmul.f32 %v3190, %v3197
    %v3206 = vadd.f32 %v3204, %v3205
    %v3207 = vtanh.pop %v3206
    %v3208 = vmul.f32 %v3203, %v3207
    %v3209 = vpack.c.bf16 %v3208, %v3208
    %3210 = vst [vmem:[%s1655] sm:$0xf] %v3209
    %3211 = vst [vmem:[%s2118] sm:$0xff] %v3208
    %3212 = vst [vmem:[%s2120] sm:$0xff] %v3206
    // Predicated region
    $region46: #{tpu_custom_call.1} parent=1 // pred_check
      _
    $region47: #{tpu_custom_call.1} parent=1 // pred_check_branch
      %3214 = sbr.rel (0) target = $region49
    $region48: #{tpu_custom_call.1} parent=1 // pred_region
      %s3216 = ssub.s32 512, 512
      %3217 = vsyncadd [#allocation5], %s3216
      %s3218 = sshll.u32 [#allocation11], 4
      %s3219 = int_to_ptr.vmem [resolvable:$true] %s3218
      %3224 = dma.vmem_to_hbm [thread:$0]  %s3219, 512, %s6, [#allocation5], 64, 64, 4
    $region49: #{tpu_custom_call.1} parent=1 // pred_fallthru
      _
    // Predicated region
    $region50: #{tpu_custom_call.1} parent=1 // pred_check
      _
    $region51: #{tpu_custom_call.1} parent=1 // pred_check_branch
      %3226 = sbr.rel (0) target = $region53
    $region52: #{tpu_custom_call.1} parent=1 // pred_region
      %s3228 = ssub.s32 256, 256
      %3229 = vsyncadd [#allocation13], %s3228
      %s3230 = sshll.u32 [#allocation12], 4
      %s3231 = int_to_ptr.vmem [resolvable:$true] %s3230
      %3236 = dma.vmem_to_hbm [thread:$0]  %s3231, 256, %s7, [#allocation13], 128, 128, 8
    $region53: #{tpu_custom_call.1} parent=1 // pred_fallthru
      _
    // Predicated region
    $region54: #{tpu_custom_call.1} parent=1 // pred_check
      _
    $region55: #{tpu_custom_call.1} parent=1 // pred_check_branch
      %3238 = sbr.rel (0) target = $region57
    $region56: #{tpu_custom_call.1} parent=1 // pred_region
      %s3240 = ssub.s32 256, 256
      %3241 = vsyncadd [#allocation13], %s3240
      %s3242 = sshll.u32 [#allocation14], 4
      %s3243 = int_to_ptr.vmem [resolvable:$true] %s3242
      %3248 = dma.vmem_to_hbm [thread:$0]  %s3243, 256, %s8, [#allocation13], 128, 128, 8
    $region57: #{tpu_custom_call.1} parent=1 // pred_fallthru
      _
    // Predicated region
    $region58: #{tpu_custom_call.1} parent=1 // pred_check
      _
    $region59: #{tpu_custom_call.1} parent=1 // pred_check_branch
      %3250 = sbr.rel (0) target = $region61
    $region60: #{tpu_custom_call.1} parent=1 // pred_region
      %3251 = dma.done [#allocation5], 512
    $region61: #{tpu_custom_call.1} parent=1 // pred_fallthru
      _
    // Predicated region
    $region62: #{tpu_custom_call.1} parent=1 // pred_check
      _
    $region63: #{tpu_custom_call.1} parent=1 // pred_check_branch
      %3253 = sbr.rel (0) target = $region65
    $region64: #{tpu_custom_call.1} parent=1 // pred_region
      %3254 = dma.done [#allocation13], 256
    $region65: #{tpu_custom_call.1} parent=1 // pred_fallthru
      _
    // Predicated region
    $region66: #{tpu_custom_call.1} parent=1 // pred_check
      _
    $region67: #{tpu_custom_call.1} parent=1 // pred_check_branch
      %3256 = sbr.rel (0) target = $region69
    $region68: #{tpu_custom_call.1} parent=1 // pred_region
      %3257 = dma.done [#allocation13], 256
    $region69: #{tpu_custom_call.1} parent=1 // pred_fallthru
      _
    %3258 = vsyncpa [#allocation4], 1
    %3259 = vsyncpa [#allocation7], 1
    %3260 = vsyncpa [#allocation10], 1
    %3261 = vsyncpa [#allocation5], 1
    %3262 = vsyncpa [#allocation13], 1

</llo_original>
